<compile_context>
chip_gen: v7x
topology: tpu7x:2x2x1
jax: 0.10.0
libtpu: 0.0.40
codegen_flags: <defaults>
</compile_context>

<pallas_src>
import functools
import math

import jax
import jax.numpy as jnp
from jax.experimental import pallas as pl
from jax.experimental.pallas import tpu as pltpu

# ----------------------------- model dims -----------------------------
VOCAB = 128
TYPE_VOCAB = 2
MAX_POS = 16
HIDDEN = 32
NUM_LAYERS = 2
NUM_HEADS = 4
HEAD_DIM = HIDDEN // NUM_HEADS
INTERMEDIATE = 64
NUM_CLASSES = 2
BATCH = 2
SEQ = 8

SLAB_WIDTH = 128  # lane-dense slab width

_VMEM_SPEC = pl.BlockSpec(memory_space=pltpu.MemorySpace.VMEM)


# ----------------------------- fused kernel -----------------------------
def _bert_kernel(
    ids_ref, mask_ref, w_ref, v_ref,          # inputs
    hidden_ref, pooled_ref, logits_ref,       # outputs
    *, batch, seq, w_off, v_off,
):
    f32 = jnp.float32
    bs = batch * seq
    H, I, NH, HD = HIDDEN, INTERMEDIATE, NUM_HEADS, HEAD_DIM

    def wmat(name, rows, cols):
        r = w_off[name]
        return w_ref[r:r + rows, :cols]

    def vvec(name, cols=HIDDEN):
        r = v_off[name]
        return v_ref[r:r + 1, :cols]

    def layernorm(t, g, b, eps):
        mu = jnp.mean(t, axis=-1, keepdims=True)
        tc = t - mu
        var = jnp.mean(tc * tc, axis=-1, keepdims=True)
        return tc * jax.lax.rsqrt(var + eps) * g + b

    def gelu(t):
        # TODO(synk): tanh-approx GELU; HF BERT's default "gelu" is the exact erf form.
        c = math.sqrt(2.0 / math.pi)
        return 0.5 * t * (1.0 + jnp.tanh(c * (t + 0.044715 * t * t * t)))

    # ---- embeddings (in-kernel) ----
    wid = ids_ref[0:bs, :]          # (bs, 1) word ids
    tid = ids_ref[bs:2 * bs, :]     # (bs, 1) token-type ids

    word_oh = (wid == jax.lax.broadcasted_iota(jnp.int32, (bs, VOCAB), 1)).astype(f32)
    emb = jnp.dot(word_oh, wmat("word_emb", VOCAB, H), preferred_element_type=f32)

    pos_tab = wmat("pos_emb", MAX_POS, H)[0:seq, :]          # (seq, H)
    emb = emb + jnp.tile(pos_tab, (batch, 1))                # rows are batch-major

    type_tab = wmat("type_emb", TYPE_VOCAB, H)               # (2, H)
    emb = emb + jnp.where(tid == 0, type_tab[0:1, :], type_tab[1:2, :])

    x = layernorm(emb, vvec("emb_ln_g"), vvec("emb_ln_b"), 1e-12)

    # ---- additive attention mask, broadcast once ----
    add_mask = (1.0 - mask_ref[...]) * -10000.0              # (B, S)
    mask3 = add_mask.reshape(batch, 1, seq)                  # (B, 1, S)
    scale = 1.0 / math.sqrt(HD)

    # ---- encoder layers ----
    for l in range(NUM_LAYERS):
        p = f"l{l}_"
        q = jnp.dot(x, wmat(p + "wq", H, H), preferred_element_type=f32) + vvec(p + "bq")
        k = jnp.dot(x, wmat(p + "wk", H, H), preferred_element_type=f32) + vvec(p + "bk")
        v = jnp.dot(x, wmat(p + "wv", H, H), preferred_element_type=f32) + vvec(p + "bv")
        wo_full = wmat(p + "wo", H, H)

        attn = None
        for h in range(NH):                                  # batched over batch dim
            c0 = h * HD
            qh = q[:, c0:c0 + HD].reshape(batch, seq, HD)
            kh = k[:, c0:c0 + HD].reshape(batch, seq, HD)
            vh = v[:, c0:c0 + HD].reshape(batch, seq, HD)

            s = jnp.einsum("bqd,bkd->bqk", qh, kh, preferred_element_type=f32)
            s = s * scale + mask3
            s = s - jnp.max(s, axis=-1, keepdims=True)
            pr = jnp.exp(s)
            pr = pr * pl.reciprocal(jnp.sum(pr, axis=-1, keepdims=True), approx=True)

            ctx = jnp.einsum("bqk,bkd->bqd", pr, vh,
                             preferred_element_type=f32).reshape(bs, HD)
            # fold head directly into the output projection (row-slice of W_o)
            part = jnp.dot(ctx, wo_full[c0:c0 + HD, :], preferred_element_type=f32)
            attn = part if attn is None else attn + part

        attn = attn + vvec(p + "bo")
        x = layernorm(attn + x, vvec(p + "ln1_g"), vvec(p + "ln1_b"), 1e-12)

        ff = gelu(jnp.dot(x, wmat(p + "wfc1", H, I), preferred_element_type=f32)
                  + vvec(p + "bfc1", I))
        ff = jnp.dot(ff, wmat(p + "wfc2", I, H), preferred_element_type=f32) + vvec(p + "bfc2")
        x = layernorm(ff + x, vvec(p + "ln2_g"), vvec(p + "ln2_b"), 1e-12)

    # ---- last_hidden_state ----
    hidden_ref[...] = x

    # ---- pooler: [CLS] rows via one strided sublane read ----
    cls = hidden_ref[pl.ds(0, batch, stride=seq), :]          # (B, H)
    pooled = jnp.tanh(jnp.dot(cls, wmat("pool_w", H, H), preferred_element_type=f32)
                      + vvec("pool_b"))

    # ---- head: LayerNorm (eps=1e-5) -> dropout (identity) -> Linear/ReLU/Linear ----
    pooled = layernorm(pooled, vvec("head_ln_g"), vvec("head_ln_b"), 1e-5)
    pooled_ref[...] = pooled
    # TODO(synk): dropout layers are identity here (eval-mode semantics, no RNG).

    h1 = jnp.maximum(
        jnp.dot(pooled, wmat("cls1_w", H, H // 2), preferred_element_type=f32)
        + vvec("cls1_b", H // 2), 0.0)
    logits_ref[...] = (jnp.dot(h1, wmat("cls2_w", H // 2, NUM_CLASSES),
                               preferred_element_type=f32)
                       + vvec("cls2_b", NUM_CLASSES))


# ----------------------------- parameter init -----------------------------
def init_params(key):
    keys = iter(jax.random.split(key, 16))

    def nrm(shape, std=0.02):
        return (std * jax.random.normal(next(keys), shape)).astype(jnp.float32)

    def xavier(shape):  # xavier_normal_ for the classifier head
        fan_in, fan_out = shape
        std = math.sqrt(2.0 / (fan_in + fan_out))
        return (std * jax.random.normal(next(keys), shape)).astype(jnp.float32)

    zeros = lambda s: jnp.zeros(s, jnp.float32)
    ones = lambda s: jnp.ones(s, jnp.float32)

    L, H, I = NUM_LAYERS, HIDDEN, INTERMEDIATE
    return {
        "word_emb": nrm((VOCAB, H)),
        "pos_emb": nrm((MAX_POS, H)),
        "type_emb": nrm((TYPE_VOCAB, H)),
        "emb_ln_g": ones((H,)), "emb_ln_b": zeros((H,)),
        "wq": nrm((L, H, H)), "bq": zeros((L, H)),
        "wk": nrm((L, H, H)), "bk": zeros((L, H)),
        "wv": nrm((L, H, H)), "bv": zeros((L, H)),
        "wo": nrm((L, H, H)), "bo": zeros((L, H)),
        "ln1_g": ones((L, H)), "ln1_b": zeros((L, H)),
        "wfc1": nrm((L, H, I)), "bfc1": zeros((L, I)),
        "wfc2": nrm((L, I, H)), "bfc2": zeros((L, H)),
        "ln2_g": ones((L, H)), "ln2_b": zeros((L, H)),
        "pool_w": nrm((H, H)), "pool_b": zeros((H,)),
        "head_ln_g": ones((H,)), "head_ln_b": zeros((H,)),
        "cls1_w": xavier((H, H // 2)), "cls1_b": zeros((H // 2,)),
        "cls2_w": xavier((H // 2, NUM_CLASSES)), "cls2_b": zeros((NUM_CLASSES,)),
    }


# ----------------------------- slab packing -----------------------------
def pack_params(raw):
    """Packs all weights into one (R,128) f32 slab and all bias/LN vectors into
    another, returning (w_slab, v_slab, w_offsets, v_offsets)."""
    w_parts, w_off = [], {}
    v_parts, v_off = [], {}

    def addw(name, mat):
        mat = jnp.asarray(mat, jnp.float32)
        r, c = mat.shape
        rp = ((r + 7) // 8) * 8  # sublane-align every block
        block = jnp.zeros((rp, SLAB_WIDTH), jnp.float32).at[:r, :c].set(mat)
        w_off[name] = sum(int(p.shape[0]) for p in w_parts)
        w_parts.append(block)

    def addv(name, vec):
        vec = jnp.asarray(vec, jnp.float32).reshape(1, -1)
        block = jnp.zeros((1, SLAB_WIDTH), jnp.float32).at[:, :vec.shape[1]].set(vec)
        v_off[name] = len(v_parts)
        v_parts.append(block)

    addw("word_emb", raw["word_emb"])
    addw("pos_emb", raw["pos_emb"])
    addw("type_emb", raw["type_emb"])
    addv("emb_ln_g", raw["emb_ln_g"]); addv("emb_ln_b", raw["emb_ln_b"])

    for l in range(NUM_LAYERS):
        p = f"l{l}_"
        addw(p + "wq", raw["wq"][l]);   addv(p + "bq", raw["bq"][l])
        addw(p + "wk", raw["wk"][l]);   addv(p + "bk", raw["bk"][l])
        addw(p + "wv", raw["wv"][l]);   addv(p + "bv", raw["bv"][l])
        addw(p + "wo", raw["wo"][l]);   addv(p + "bo", raw["bo"][l])
        addv(p + "ln1_g", raw["ln1_g"][l]); addv(p + "ln1_b", raw["ln1_b"][l])
        addw(p + "wfc1", raw["wfc1"][l]); addv(p + "bfc1", raw["bfc1"][l])
        addw(p + "wfc2", raw["wfc2"][l]); addv(p + "bfc2", raw["bfc2"][l])
        addv(p + "ln2_g", raw["ln2_g"][l]); addv(p + "ln2_b", raw["ln2_b"][l])

    addw("pool_w", raw["pool_w"]); addv("pool_b", raw["pool_b"])
    addv("head_ln_g", raw["head_ln_g"]); addv("head_ln_b", raw["head_ln_b"])
    addw("cls1_w", raw["cls1_w"]); addv("cls1_b", raw["cls1_b"])
    addw("cls2_w", raw["cls2_w"]); addv("cls2_b", raw["cls2_b"])

    w_slab = jnp.concatenate(w_parts, axis=0)
    v_slab = jnp.concatenate(v_parts, axis=0)
    return w_slab, v_slab, w_off, v_off


# ----------------------------- forward pass -----------------------------
def model_forward(w_slab, v_slab, input_ids, attention_mask=None, token_type_ids=None,
                  *, w_off, v_off):
    if attention_mask is None:
        attention_mask = jnp.ones_like(input_ids)
    if token_type_ids is None:
        token_type_ids = jnp.zeros_like(input_ids)

    B, S = input_ids.shape
    bs = B * S

    # word ids on rows [0, bs), token-type ids on rows [bs, 2*bs)
    ids = jnp.concatenate(
        [input_ids.reshape(bs, 1), token_type_ids.reshape(bs, 1)], axis=0
    ).astype(jnp.int32)
    mask = attention_mask.astype(jnp.float32)

    kernel = functools.partial(_bert_kernel, batch=B, seq=S, w_off=w_off, v_off=v_off)
    hidden, pooled, logits = pl.pallas_call(
        kernel,
        out_shape=(
            jax.ShapeDtypeStruct((bs, HIDDEN), jnp.float32),
            jax.ShapeDtypeStruct((B, HIDDEN), jnp.float32),
            jax.ShapeDtypeStruct((B, NUM_CLASSES), jnp.float32),
        ),
        in_specs=[_VMEM_SPEC] * 4,
        out_specs=(_VMEM_SPEC, _VMEM_SPEC, _VMEM_SPEC),
    )(ids, mask, w_slab, v_slab)

    return {
        "logits": logits,
        "hidden_states": hidden.reshape(B, S, HIDDEN),
        "pooled_output": pooled,
    }


# ----------------------------- main -----------------------------
if __name__ == "__main__":
    key = jax.random.PRNGKey(0)
    k_param, k_ids = jax.random.split(key, 2)

    raw = init_params(k_param)
    w_slab, v_slab, w_off, v_off = pack_params(raw)

    input_ids = jax.random.randint(k_ids, (BATCH, SEQ), 0, VOCAB, dtype=jnp.int32)
    attention_mask = jnp.ones((BATCH, SEQ), dtype=jnp.int32)
    token_type_ids = jnp.zeros((BATCH, SEQ), dtype=jnp.int32)

    fwd = jax.jit(functools.partial(model_forward, w_off=w_off, v_off=v_off))
    out = fwd(w_slab, v_slab, input_ids, attention_mask, token_type_ids)
    jax.block_until_ready(out)

    assert out["logits"].shape == (BATCH, NUM_CLASSES)
    assert out["hidden_states"].shape == (BATCH, SEQ, HIDDEN)
    assert out["pooled_output"].shape == (BATCH, HIDDEN)
    assert bool(jnp.all(jnp.isfinite(out["logits"])))
    assert bool(jnp.all(jnp.isfinite(out["hidden_states"])))
    assert bool(jnp.all(jnp.isfinite(out["pooled_output"])))

    print("KERNEL_OK")
</pallas_src>

<mosaic_0001>
module attributes {stable_mosaic.version = 11 : i64} {
  func.func @_bert_kernel(%arg0: memref<32x1xi32, #tpu.memory_space<vmem>>, %arg1: memref<2x8xf32, #tpu.memory_space<vmem>>, %arg2: memref<680x128xf32, #tpu.memory_space<vmem>>, %arg3: memref<27x128xf32, #tpu.memory_space<vmem>>, %arg4: memref<16x32xf32, #tpu.memory_space<vmem>>, %arg5: memref<2x32xf32, #tpu.memory_space<vmem>>, %arg6: memref<2x2xf32, #tpu.memory_space<vmem>>) attributes {dimension_semantics = [], scalar_prefetch = 0 : i64, scratch_operands = 0 : i64, tpu.core_type = #tpu.core_type<tc>} {
    %c0 = arith.constant 0 : index
    %c0_0 = arith.constant 0 : index
    %0 = vector.load %arg0[%c0, %c0_0] : memref<32x1xi32, #tpu.memory_space<vmem>>, vector<16x1xi32>
    %c16 = arith.constant 16 : index
    %c0_1 = arith.constant 0 : index
    %1 = vector.load %arg0[%c16, %c0_1] : memref<32x1xi32, #tpu.memory_space<vmem>>, vector<16x1xi32>
    %2 = tpu.iota {dimensions = array<i32: 1>} : vector<16x128xi32>
    %3 = vector.broadcast %0 : vector<16x1xi32> to vector<16x128xi32>
    %4 = arith.cmpi eq, %3, %2 : vector<16x128xi32>
    %5 = arith.extui %4 : vector<16x128xi1> to vector<16x128xi32>
    %6 = arith.sitofp %5 : vector<16x128xi32> to vector<16x128xf32>
    %c0_2 = arith.constant 0 : index
    %c0_3 = arith.constant 0 : index
    %7 = vector.load %arg2[%c0_2, %c0_3] : memref<680x128xf32, #tpu.memory_space<vmem>>, vector<128x32xf32>
    %cst = arith.constant dense<0.000000e+00> : vector<16x32xf32>
    %8 = tpu.matmul %6, %7, %cst {dimension_numbers = #tpu.dot_dimension_numbers<[1], [0], [0], [1], [0, 0, 1, 1], [], []>} : vector<16x128xf32>, vector<128x32xf32>, vector<16x32xf32> -> vector<16x32xf32>
    %c128 = arith.constant 128 : index
    %c0_4 = arith.constant 0 : index
    %9 = vector.load %arg2[%c128, %c0_4] : memref<680x128xf32, #tpu.memory_space<vmem>>, vector<16x32xf32>
    %10 = vector.extract_strided_slice %9 {offsets = [0, 0], sizes = [8, 32], strides = [1, 1]} : vector<16x32xf32> to vector<8x32xf32>
    %11 = tpu.concatenate %10, %10 in 0 : vector<8x32xf32>, vector<8x32xf32> -> vector<16x32xf32>
    %12 = arith.addf %8, %11 : vector<16x32xf32>
    %c144 = arith.constant 144 : index
    %c0_5 = arith.constant 0 : index
    %13 = vector.load %arg2[%c144, %c0_5] : memref<680x128xf32, #tpu.memory_space<vmem>>, vector<2x32xf32>
    %c0_i32 = arith.constant 0 : i32
    %14 = vector.broadcast %c0_i32 : i32 to vector<16x1xi32>
    %15 = arith.cmpi eq, %1, %14 : vector<16x1xi32>
    %16 = vector.extract_strided_slice %13 {offsets = [0, 0], sizes = [1, 32], strides = [1, 1]} : vector<2x32xf32> to vector<1x32xf32>
    %17 = vector.extract_strided_slice %13 {offsets = [1, 0], sizes = [1, 32], strides = [1, 1]} : vector<2x32xf32> to vector<1x32xf32>
    %18 = vector.shape_cast %15 : vector<16x1xi1> to vector<16x1xi1>
    %19 = vector.broadcast %18 : vector<16x1xi1> to vector<16x32xi1>
    %20 = vector.shape_cast %16 : vector<1x32xf32> to vector<1x32xf32>
    %21 = vector.broadcast %20 : vector<1x32xf32> to vector<16x32xf32>
    %22 = vector.shape_cast %17 : vector<1x32xf32> to vector<1x32xf32>
    %23 = vector.broadcast %22 : vector<1x32xf32> to vector<16x32xf32>
    %24 = arith.select %19, %21, %23 : vector<16x32xi1>, vector<16x32xf32>
    %25 = arith.addf %12, %24 : vector<16x32xf32>
    %c0_6 = arith.constant 0 : index
    %c0_7 = arith.constant 0 : index
    %26 = vector.load %arg3[%c0_6, %c0_7] : memref<27x128xf32, #tpu.memory_space<vmem>>, vector<1x32xf32>
    %c1 = arith.constant 1 : index
    %c0_8 = arith.constant 0 : index
    %27 = vector.load %arg3[%c1, %c0_8] : memref<27x128xf32, #tpu.memory_space<vmem>>, vector<1x32xf32>
    %cst_9 = arith.constant dense<0.000000e+00> : vector<16xf32>
    %28 = vector.multi_reduction <add>, %25, %cst_9 [1] : vector<16x32xf32> to vector<16xf32>
    %29 = vector.shape_cast %28 : vector<16xf32> to vector<16x1xf32>
    %cst_10 = arith.constant 3.200000e+01 : f32
    %30 = vector.broadcast %cst_10 : f32 to vector<16x1xf32>
    %31 = arith.divf %29, %30 : vector<16x1xf32>
    %32 = vector.broadcast %31 : vector<16x1xf32> to vector<16x32xf32>
    %33 = arith.subf %25, %32 : vector<16x32xf32>
    %34 = arith.mulf %33, %33 : vector<16x32xf32>
    %cst_11 = arith.constant dense<0.000000e+00> : vector<16xf32>
    %35 = vector.multi_reduction <add>, %34, %cst_11 [1] : vector<16x32xf32> to vector<16xf32>
    %36 = vector.shape_cast %35 : vector<16xf32> to vector<16x1xf32>
    %cst_12 = arith.constant 3.200000e+01 : f32
    %37 = vector.broadcast %cst_12 : f32 to vector<16x1xf32>
    %38 = arith.divf %36, %37 : vector<16x1xf32>
    %cst_13 = arith.constant 9.99999996E-13 : f32
    %39 = vector.broadcast %cst_13 : f32 to vector<16x1xf32>
    %40 = arith.addf %38, %39 : vector<16x1xf32>
    %41 = math.rsqrt %40 : vector<16x1xf32>
    %42 = vector.broadcast %41 : vector<16x1xf32> to vector<16x32xf32>
    %43 = arith.mulf %33, %42 : vector<16x32xf32>
    %44 = vector.broadcast %26 : vector<1x32xf32> to vector<16x32xf32>
    %45 = arith.mulf %43, %44 : vector<16x32xf32>
    %46 = vector.broadcast %27 : vector<1x32xf32> to vector<16x32xf32>
    %47 = arith.addf %45, %46 : vector<16x32xf32>
    %c0_14 = arith.constant 0 : index
    %c0_15 = arith.constant 0 : index
    %48 = vector.load %arg1[%c0_14, %c0_15] : memref<2x8xf32, #tpu.memory_space<vmem>>, vector<2x8xf32>
    %cst_16 = arith.constant 1.000000e+00 : f32
    %49 = vector.broadcast %cst_16 : f32 to vector<2x8xf32>
    %50 = arith.subf %49, %48 : vector<2x8xf32>
    %cst_17 = arith.constant -1.000000e+04 : f32
    %51 = vector.broadcast %cst_17 : f32 to vector<2x8xf32>
    %52 = arith.mulf %50, %51 : vector<2x8xf32>
    %53 = vector.shape_cast %52 : vector<2x8xf32> to vector<2x1x8xf32>
    %c152 = arith.constant 152 : index
    %c0_18 = arith.constant 0 : index
    %54 = vector.load %arg2[%c152, %c0_18] : memref<680x128xf32, #tpu.memory_space<vmem>>, vector<32x32xf32>
    %cst_19 = arith.constant dense<0.000000e+00> : vector<16x32xf32>
    %55 = tpu.matmul %47, %54, %cst_19 {dimension_numbers = #tpu.dot_dimension_numbers<[1], [0], [0], [1], [0, 0, 1, 1], [], []>} : vector<16x32xf32>, vector<32x32xf32>, vector<16x32xf32> -> vector<16x32xf32>
    %c2 = arith.constant 2 : index
    %c0_20 = arith.constant 0 : index
    %56 = vector.load %arg3[%c2, %c0_20] : memref<27x128xf32, #tpu.memory_space<vmem>>, vector<1x32xf32>
    %57 = vector.broadcast %56 : vector<1x32xf32> to vector<16x32xf32>
    %58 = arith.addf %55, %57 : vector<16x32xf32>
    %c184 = arith.constant 184 : index
    %c0_21 = arith.constant 0 : index
    %59 = vector.load %arg2[%c184, %c0_21] : memref<680x128xf32, #tpu.memory_space<vmem>>, vector<32x32xf32>
    %cst_22 = arith.constant dense<0.000000e+00> : vector<16x32xf32>
    %60 = tpu.matmul %47, %59, %cst_22 {dimension_numbers = #tpu.dot_dimension_numbers<[1], [0], [0], [1], [0, 0, 1, 1], [], []>} : vector<16x32xf32>, vector<32x32xf32>, vector<16x32xf32> -> vector<16x32xf32>
    %c3 = arith.constant 3 : index
    %c0_23 = arith.constant 0 : index
    %61 = vector.load %arg3[%c3, %c0_23] : memref<27x128xf32, #tpu.memory_space<vmem>>, vector<1x32xf32>
    %62 = vector.broadcast %61 : vector<1x32xf32> to vector<16x32xf32>
    %63 = arith.addf %60, %62 : vector<16x32xf32>
    %c216 = arith.constant 216 : index
    %c0_24 = arith.constant 0 : index
    %64 = vector.load %arg2[%c216, %c0_24] : memref<680x128xf32, #tpu.memory_space<vmem>>, vector<32x32xf32>
    %cst_25 = arith.constant dense<0.000000e+00> : vector<16x32xf32>
    %65 = tpu.matmul %47, %64, %cst_25 {dimension_numbers = #tpu.dot_dimension_numbers<[1], [0], [0], [1], [0, 0, 1, 1], [], []>} : vector<16x32xf32>, vector<32x32xf32>, vector<16x32xf32> -> vector<16x32xf32>
    %c4 = arith.constant 4 : index
    %c0_26 = arith.constant 0 : index
    %66 = vector.load %arg3[%c4, %c0_26] : memref<27x128xf32, #tpu.memory_space<vmem>>, vector<1x32xf32>
    %67 = vector.broadcast %66 : vector<1x32xf32> to vector<16x32xf32>
    %68 = arith.addf %65, %67 : vector<16x32xf32>
    %c248 = arith.constant 248 : index
    %c0_27 = arith.constant 0 : index
    %69 = vector.load %arg2[%c248, %c0_27] : memref<680x128xf32, #tpu.memory_space<vmem>>, vector<32x32xf32>
    %70 = vector.extract_strided_slice %58 {offsets = [0, 0], sizes = [16, 8], strides = [1, 1]} : vector<16x32xf32> to vector<16x8xf32>
    %71 = vector.shape_cast %70 : vector<16x8xf32> to vector<2x8x8xf32>
    %72 = vector.extract_strided_slice %63 {offsets = [0, 0], sizes = [16, 8], strides = [1, 1]} : vector<16x32xf32> to vector<16x8xf32>
    %73 = vector.shape_cast %72 : vector<16x8xf32> to vector<2x8x8xf32>
    %74 = vector.extract_strided_slice %68 {offsets = [0, 0], sizes = [16, 8], strides = [1, 1]} : vector<16x32xf32> to vector<16x8xf32>
    %75 = vector.shape_cast %74 : vector<16x8xf32> to vector<2x8x8xf32>
    "tpu.trace_start"() <{level = 10 : i32, message = "bqd,bkd->bqk"}> : () -> ()
    %cst_28 = arith.constant dense<0.000000e+00> : vector<2x8x8xf32>
    %76 = tpu.matmul %71, %73, %cst_28 {dimension_numbers = #tpu.dot_dimension_numbers<[2], [2], [1], [1], [0, 0, 0, 1, 1, 1], [0], [0]>} : vector<2x8x8xf32>, vector<2x8x8xf32>, vector<2x8x8xf32> -> vector<2x8x8xf32>
    "tpu.trace_stop"() : () -> ()
    %cst_29 = arith.constant 0.353553385 : f32
    %77 = vector.broadcast %cst_29 : f32 to vector<2x8x8xf32>
    %78 = arith.mulf %76, %77 : vector<2x8x8xf32>
    %79 = vector.broadcast %53 : vector<2x1x8xf32> to vector<2x8x8xf32>
    %80 = arith.addf %78, %79 : vector<2x8x8xf32>
    %cst_30 = arith.constant dense<0xFF800000> : vector<2x8xf32>
    %81 = vector.multi_reduction <maximumf>, %80, %cst_30 [2] : vector<2x8x8xf32> to vector<2x8xf32>
    %82 = vector.shape_cast %81 : vector<2x8xf32> to vector<2x8x1xf32>
    %83 = vector.broadcast %82 : vector<2x8x1xf32> to vector<2x8x8xf32>
    %84 = arith.subf %80, %83 : vector<2x8x8xf32>
    %85 = math.exp %84 : vector<2x8x8xf32>
    %cst_31 = arith.constant dense<0.000000e+00> : vector<2x8xf32>
    %86 = vector.multi_reduction <add>, %85, %cst_31 [2] : vector<2x8x8xf32> to vector<2x8xf32>
    %87 = vector.shape_cast %86 : vector<2x8xf32> to vector<2x8x1xf32>
    %88 = tpu.reciprocal %87 {approx = true} : vector<2x8x1xf32> -> vector<2x8x1xf32>
    %89 = vector.broadcast %88 : vector<2x8x1xf32> to vector<2x8x8xf32>
    %90 = arith.mulf %85, %89 : vector<2x8x8xf32>
    "tpu.trace_start"() <{level = 10 : i32, message = "bqk,bkd->bqd"}> : () -> ()
    %cst_32 = arith.constant dense<0.000000e+00> : vector<2x8x8xf32>
    %91 = tpu.matmul %90, %75, %cst_32 {dimension_numbers = #tpu.dot_dimension_numbers<[2], [1], [1], [2], [0, 0, 0, 1, 1, 2], [0], [0]>} : vector<2x8x8xf32>, vector<2x8x8xf32>, vector<2x8x8xf32> -> vector<2x8x8xf32>
    "tpu.trace_stop"() : () -> ()
    %92 = vector.shape_cast %91 : vector<2x8x8xf32> to vector<16x8xf32>
    %93 = vector.extract_strided_slice %69 {offsets = [0, 0], sizes = [8, 32], strides = [1, 1]} : vector<32x32xf32> to vector<8x32xf32>
    %cst_33 = arith.constant dense<0.000000e+00> : vector<16x32xf32>
    %94 = tpu.matmul %92, %93, %cst_33 {dimension_numbers = #tpu.dot_dimension_numbers<[1], [0], [0], [1], [0, 0, 1, 1], [], []>} : vector<16x8xf32>, vector<8x32xf32>, vector<16x32xf32> -> vector<16x32xf32>
    %95 = vector.extract_strided_slice %58 {offsets = [0, 8], sizes = [16, 8], strides = [1, 1]} : vector<16x32xf32> to vector<16x8xf32>
    %96 = vector.shape_cast %95 : vector<16x8xf32> to vector<2x8x8xf32>
    %97 = vector.extract_strided_slice %63 {offsets = [0, 8], sizes = [16, 8], strides = [1, 1]} : vector<16x32xf32> to vector<16x8xf32>
    %98 = vector.shape_cast %97 : vector<16x8xf32> to vector<2x8x8xf32>
    %99 = vector.extract_strided_slice %68 {offsets = [0, 8], sizes = [16, 8], strides = [1, 1]} : vector<16x32xf32> to vector<16x8xf32>
    %100 = vector.shape_cast %99 : vector<16x8xf32> to vector<2x8x8xf32>
    "tpu.trace_start"() <{level = 10 : i32, message = "bqd,bkd->bqk"}> : () -> ()
    %cst_34 = arith.constant dense<0.000000e+00> : vector<2x8x8xf32>
    %101 = tpu.matmul %96, %98, %cst_34 {dimension_numbers = #tpu.dot_dimension_numbers<[2], [2], [1], [1], [0, 0, 0, 1, 1, 1], [0], [0]>} : vector<2x8x8xf32>, vector<2x8x8xf32>, vector<2x8x8xf32> -> vector<2x8x8xf32>
    "tpu.trace_stop"() : () -> ()
    %cst_35 = arith.constant 0.353553385 : f32
    %102 = vector.broadcast %cst_35 : f32 to vector<2x8x8xf32>
    %103 = arith.mulf %101, %102 : vector<2x8x8xf32>
    %104 = vector.broadcast %53 : vector<2x1x8xf32> to vector<2x8x8xf32>
    %105 = arith.addf %103, %104 : vector<2x8x8xf32>
    %cst_36 = arith.constant dense<0xFF800000> : vector<2x8xf32>
    %106 = vector.multi_reduction <maximumf>, %105, %cst_36 [2] : vector<2x8x8xf32> to vector<2x8xf32>
    %107 = vector.shape_cast %106 : vector<2x8xf32> to vector<2x8x1xf32>
    %108 = vector.broadcast %107 : vector<2x8x1xf32> to vector<2x8x8xf32>
    %109 = arith.subf %105, %108 : vector<2x8x8xf32>
    %110 = math.exp %109 : vector<2x8x8xf32>
    %cst_37 = arith.constant dense<0.000000e+00> : vector<2x8xf32>
    %111 = vector.multi_reduction <add>, %110, %cst_37 [2] : vector<2x8x8xf32> to vector<2x8xf32>
    %112 = vector.shape_cast %111 : vector<2x8xf32> to vector<2x8x1xf32>
    %113 = tpu.reciprocal %112 {approx = true} : vector<2x8x1xf32> -> vector<2x8x1xf32>
    %114 = vector.broadcast %113 : vector<2x8x1xf32> to vector<2x8x8xf32>
    %115 = arith.mulf %110, %114 : vector<2x8x8xf32>
    "tpu.trace_start"() <{level = 10 : i32, message = "bqk,bkd->bqd"}> : () -> ()
    %cst_38 = arith.constant dense<0.000000e+00> : vector<2x8x8xf32>
    %116 = tpu.matmul %115, %100, %cst_38 {dimension_numbers = #tpu.dot_dimension_numbers<[2], [1], [1], [2], [0, 0, 0, 1, 1, 2], [0], [0]>} : vector<2x8x8xf32>, vector<2x8x8xf32>, vector<2x8x8xf32> -> vector<2x8x8xf32>
    "tpu.trace_stop"() : () -> ()
    %117 = vector.shape_cast %116 : vector<2x8x8xf32> to vector<16x8xf32>
    %118 = vector.extract_strided_slice %69 {offsets = [8, 0], sizes = [8, 32], strides = [1, 1]} : vector<32x32xf32> to vector<8x32xf32>
    %cst_39 = arith.constant dense<0.000000e+00> : vector<16x32xf32>
    %119 = tpu.matmul %117, %118, %cst_39 {dimension_numbers = #tpu.dot_dimension_numbers<[1], [0], [0], [1], [0, 0, 1, 1], [], []>} : vector<16x8xf32>, vector<8x32xf32>, vector<16x32xf32> -> vector<16x32xf32>
    %120 = arith.addf %94, %119 : vector<16x32xf32>
    %121 = vector.extract_strided_slice %58 {offsets = [0, 16], sizes = [16, 8], strides = [1, 1]} : vector<16x32xf32> to vector<16x8xf32>
    %122 = vector.shape_cast %121 : vector<16x8xf32> to vector<2x8x8xf32>
    %123 = vector.extract_strided_slice %63 {offsets = [0, 16], sizes = [16, 8], strides = [1, 1]} : vector<16x32xf32> to vector<16x8xf32>
    %124 = vector.shape_cast %123 : vector<16x8xf32> to vector<2x8x8xf32>
    %125 = vector.extract_strided_slice %68 {offsets = [0, 16], sizes = [16, 8], strides = [1, 1]} : vector<16x32xf32> to vector<16x8xf32>
    %126 = vector.shape_cast %125 : vector<16x8xf32> to vector<2x8x8xf32>
    "tpu.trace_start"() <{level = 10 : i32, message = "bqd,bkd->bqk"}> : () -> ()
    %cst_40 = arith.constant dense<0.000000e+00> : vector<2x8x8xf32>
    %127 = tpu.matmul %122, %124, %cst_40 {dimension_numbers = #tpu.dot_dimension_numbers<[2], [2], [1], [1], [0, 0, 0, 1, 1, 1], [0], [0]>} : vector<2x8x8xf32>, vector<2x8x8xf32>, vector<2x8x8xf32> -> vector<2x8x8xf32>
    "tpu.trace_stop"() : () -> ()
    %cst_41 = arith.constant 0.353553385 : f32
    %128 = vector.broadcast %cst_41 : f32 to vector<2x8x8xf32>
    %129 = arith.mulf %127, %128 : vector<2x8x8xf32>
    %130 = vector.broadcast %53 : vector<2x1x8xf32> to vector<2x8x8xf32>
    %131 = arith.addf %129, %130 : vector<2x8x8xf32>
    %cst_42 = arith.constant dense<0xFF800000> : vector<2x8xf32>
    %132 = vector.multi_reduction <maximumf>, %131, %cst_42 [2] : vector<2x8x8xf32> to vector<2x8xf32>
    %133 = vector.shape_cast %132 : vector<2x8xf32> to vector<2x8x1xf32>
    %134 = vector.broadcast %133 : vector<2x8x1xf32> to vector<2x8x8xf32>
    %135 = arith.subf %131, %134 : vector<2x8x8xf32>
    %136 = math.exp %135 : vector<2x8x8xf32>
    %cst_43 = arith.constant dense<0.000000e+00> : vector<2x8xf32>
    %137 = vector.multi_reduction <add>, %136, %cst_43 [2] : vector<2x8x8xf32> to vector<2x8xf32>
    %138 = vector.shape_cast %137 : vector<2x8xf32> to vector<2x8x1xf32>
    %139 = tpu.reciprocal %138 {approx = true} : vector<2x8x1xf32> -> vector<2x8x1xf32>
    %140 = vector.broadcast %139 : vector<2x8x1xf32> to vector<2x8x8xf32>
    %141 = arith.mulf %136, %140 : vector<2x8x8xf32>
    "tpu.trace_start"() <{level = 10 : i32, message = "bqk,bkd->bqd"}> : () -> ()
    %cst_44 = arith.constant dense<0.000000e+00> : vector<2x8x8xf32>
    %142 = tpu.matmul %141, %126, %cst_44 {dimension_numbers = #tpu.dot_dimension_numbers<[2], [1], [1], [2], [0, 0, 0, 1, 1, 2], [0], [0]>} : vector<2x8x8xf32>, vector<2x8x8xf32>, vector<2x8x8xf32> -> vector<2x8x8xf32>
    "tpu.trace_stop"() : () -> ()
    %143 = vector.shape_cast %142 : vector<2x8x8xf32> to vector<16x8xf32>
    %144 = vector.extract_strided_slice %69 {offsets = [16, 0], sizes = [8, 32], strides = [1, 1]} : vector<32x32xf32> to vector<8x32xf32>
    %cst_45 = arith.constant dense<0.000000e+00> : vector<16x32xf32>
    %145 = tpu.matmul %143, %144, %cst_45 {dimension_numbers = #tpu.dot_dimension_numbers<[1], [0], [0], [1], [0, 0, 1, 1], [], []>} : vector<16x8xf32>, vector<8x32xf32>, vector<16x32xf32> -> vector<16x32xf32>
    %146 = arith.addf %120, %145 : vector<16x32xf32>
    %147 = vector.extract_strided_slice %58 {offsets = [0, 24], sizes = [16, 8], strides = [1, 1]} : vector<16x32xf32> to vector<16x8xf32>
    %148 = vector.shape_cast %147 : vector<16x8xf32> to vector<2x8x8xf32>
    %149 = vector.extract_strided_slice %63 {offsets = [0, 24], sizes = [16, 8], strides = [1, 1]} : vector<16x32xf32> to vector<16x8xf32>
    %150 = vector.shape_cast %149 : vector<16x8xf32> to vector<2x8x8xf32>
    %151 = vector.extract_strided_slice %68 {offsets = [0, 24], sizes = [16, 8], strides = [1, 1]} : vector<16x32xf32> to vector<16x8xf32>
    %152 = vector.shape_cast %151 : vector<16x8xf32> to vector<2x8x8xf32>
    "tpu.trace_start"() <{level = 10 : i32, message = "bqd,bkd->bqk"}> : () -> ()
    %cst_46 = arith.constant dense<0.000000e+00> : vector<2x8x8xf32>
    %153 = tpu.matmul %148, %150, %cst_46 {dimension_numbers = #tpu.dot_dimension_numbers<[2], [2], [1], [1], [0, 0, 0, 1, 1, 1], [0], [0]>} : vector<2x8x8xf32>, vector<2x8x8xf32>, vector<2x8x8xf32> -> vector<2x8x8xf32>
    "tpu.trace_stop"() : () -> ()
    %cst_47 = arith.constant 0.353553385 : f32
    %154 = vector.broadcast %cst_47 : f32 to vector<2x8x8xf32>
    %155 = arith.mulf %153, %154 : vector<2x8x8xf32>
    %156 = vector.broadcast %53 : vector<2x1x8xf32> to vector<2x8x8xf32>
    %157 = arith.addf %155, %156 : vector<2x8x8xf32>
    %cst_48 = arith.constant dense<0xFF800000> : vector<2x8xf32>
    %158 = vector.multi_reduction <maximumf>, %157, %cst_48 [2] : vector<2x8x8xf32> to vector<2x8xf32>
    %159 = vector.shape_cast %158 : vector<2x8xf32> to vector<2x8x1xf32>
    %160 = vector.broadcast %159 : vector<2x8x1xf32> to vector<2x8x8xf32>
    %161 = arith.subf %157, %160 : vector<2x8x8xf32>
    %162 = math.exp %161 : vector<2x8x8xf32>
    %cst_49 = arith.constant dense<0.000000e+00> : vector<2x8xf32>
    %163 = vector.multi_reduction <add>, %162, %cst_49 [2] : vector<2x8x8xf32> to vector<2x8xf32>
    %164 = vector.shape_cast %163 : vector<2x8xf32> to vector<2x8x1xf32>
    %165 = tpu.reciprocal %164 {approx = true} : vector<2x8x1xf32> -> vector<2x8x1xf32>
    %166 = vector.broadcast %165 : vector<2x8x1xf32> to vector<2x8x8xf32>
    %167 = arith.mulf %162, %166 : vector<2x8x8xf32>
    "tpu.trace_start"() <{level = 10 : i32, message = "bqk,bkd->bqd"}> : () -> ()
    %cst_50 = arith.constant dense<0.000000e+00> : vector<2x8x8xf32>
    %168 = tpu.matmul %167, %152, %cst_50 {dimension_numbers = #tpu.dot_dimension_numbers<[2], [1], [1], [2], [0, 0, 0, 1, 1, 2], [0], [0]>} : vector<2x8x8xf32>, vector<2x8x8xf32>, vector<2x8x8xf32> -> vector<2x8x8xf32>
    "tpu.trace_stop"() : () -> ()
    %169 = vector.shape_cast %168 : vector<2x8x8xf32> to vector<16x8xf32>
    %170 = vector.extract_strided_slice %69 {offsets = [24, 0], sizes = [8, 32], strides = [1, 1]} : vector<32x32xf32> to vector<8x32xf32>
    %cst_51 = arith.constant dense<0.000000e+00> : vector<16x32xf32>
    %171 = tpu.matmul %169, %170, %cst_51 {dimension_numbers = #tpu.dot_dimension_numbers<[1], [0], [0], [1], [0, 0, 1, 1], [], []>} : vector<16x8xf32>, vector<8x32xf32>, vector<16x32xf32> -> vector<16x32xf32>
    %172 = arith.addf %146, %171 : vector<16x32xf32>
    %c5 = arith.constant 5 : index
    %c0_52 = arith.constant 0 : index
    %173 = vector.load %arg3[%c5, %c0_52] : memref<27x128xf32, #tpu.memory_space<vmem>>, vector<1x32xf32>
    %174 = vector.broadcast %173 : vector<1x32xf32> to vector<16x32xf32>
    %175 = arith.addf %172, %174 : vector<16x32xf32>
    %176 = arith.addf %175, %47 : vector<16x32xf32>
    %c6 = arith.constant 6 : index
    %c0_53 = arith.constant 0 : index
    %177 = vector.load %arg3[%c6, %c0_53] : memref<27x128xf32, #tpu.memory_space<vmem>>, vector<1x32xf32>
    %c7 = arith.constant 7 : index
    %c0_54 = arith.constant 0 : index
    %178 = vector.load %arg3[%c7, %c0_54] : memref<27x128xf32, #tpu.memory_space<vmem>>, vector<1x32xf32>
    %cst_55 = arith.constant dense<0.000000e+00> : vector<16xf32>
    %179 = vector.multi_reduction <add>, %176, %cst_55 [1] : vector<16x32xf32> to vector<16xf32>
    %180 = vector.shape_cast %179 : vector<16xf32> to vector<16x1xf32>
    %cst_56 = arith.constant 3.200000e+01 : f32
    %181 = vector.broadcast %cst_56 : f32 to vector<16x1xf32>
    %182 = arith.divf %180, %181 : vector<16x1xf32>
    %183 = vector.broadcast %182 : vector<16x1xf32> to vector<16x32xf32>
    %184 = arith.subf %176, %183 : vector<16x32xf32>
    %185 = arith.mulf %184, %184 : vector<16x32xf32>
    %cst_57 = arith.constant dense<0.000000e+00> : vector<16xf32>
    %186 = vector.multi_reduction <add>, %185, %cst_57 [1] : vector<16x32xf32> to vector<16xf32>
    %187 = vector.shape_cast %186 : vector<16xf32> to vector<16x1xf32>
    %cst_58 = arith.constant 3.200000e+01 : f32
    %188 = vector.broadcast %cst_58 : f32 to vector<16x1xf32>
    %189 = arith.divf %187, %188 : vector<16x1xf32>
    %cst_59 = arith.constant 9.99999996E-13 : f32
    %190 = vector.broadcast %cst_59 : f32 to vector<16x1xf32>
    %191 = arith.addf %189, %190 : vector<16x1xf32>
    %192 = math.rsqrt %191 : vector<16x1xf32>
    %193 = vector.broadcast %192 : vector<16x1xf32> to vector<16x32xf32>
    %194 = arith.mulf %184, %193 : vector<16x32xf32>
    %195 = vector.broadcast %177 : vector<1x32xf32> to vector<16x32xf32>
    %196 = arith.mulf %194, %195 : vector<16x32xf32>
    %197 = vector.broadcast %178 : vector<1x32xf32> to vector<16x32xf32>
    %198 = arith.addf %196, %197 : vector<16x32xf32>
    %c280 = arith.constant 280 : index
    %c0_60 = arith.constant 0 : index
    %199 = vector.load %arg2[%c280, %c0_60] : memref<680x128xf32, #tpu.memory_space<vmem>>, vector<32x64xf32>
    %cst_61 = arith.constant dense<0.000000e+00> : vector<16x64xf32>
    %200 = tpu.matmul %198, %199, %cst_61 {dimension_numbers = #tpu.dot_dimension_numbers<[1], [0], [0], [1], [0, 0, 1, 1], [], []>} : vector<16x32xf32>, vector<32x64xf32>, vector<16x64xf32> -> vector<16x64xf32>
    %c8 = arith.constant 8 : index
    %c0_62 = arith.constant 0 : index
    %201 = vector.load %arg3[%c8, %c0_62] : memref<27x128xf32, #tpu.memory_space<vmem>>, vector<1x64xf32>
    %202 = vector.broadcast %201 : vector<1x64xf32> to vector<16x64xf32>
    %203 = arith.addf %200, %202 : vector<16x64xf32>
    %cst_63 = arith.constant 5.000000e-01 : f32
    %204 = vector.broadcast %cst_63 : f32 to vector<16x64xf32>
    %205 = arith.mulf %204, %203 : vector<16x64xf32>
    %cst_64 = arith.constant 4.471500e-02 : f32
    %206 = vector.broadcast %cst_64 : f32 to vector<16x64xf32>
    %207 = arith.mulf %206, %203 : vector<16x64xf32>
    %208 = arith.mulf %207, %203 : vector<16x64xf32>
    %209 = arith.mulf %208, %203 : vector<16x64xf32>
    %210 = arith.addf %203, %209 : vector<16x64xf32>
    %cst_65 = arith.constant 0.797884583 : f32
    %211 = vector.broadcast %cst_65 : f32 to vector<16x64xf32>
    %212 = arith.mulf %211, %210 : vector<16x64xf32>
    %213 = math.tanh %212 : vector<16x64xf32>
    %cst_66 = arith.constant 1.000000e+00 : f32
    %214 = vector.broadcast %cst_66 : f32 to vector<16x64xf32>
    %215 = arith.addf %214, %213 : vector<16x64xf32>
    %216 = arith.mulf %205, %215 : vector<16x64xf32>
    %c312 = arith.constant 312 : index
    %c0_67 = arith.constant 0 : index
    %217 = vector.load %arg2[%c312, %c0_67] : memref<680x128xf32, #tpu.memory_space<vmem>>, vector<64x32xf32>
    %cst_68 = arith.constant dense<0.000000e+00> : vector<16x32xf32>
    %218 = tpu.matmul %216, %217, %cst_68 {dimension_numbers = #tpu.dot_dimension_numbers<[1], [0], [0], [1], [0, 0, 1, 1], [], []>} : vector<16x64xf32>, vector<64x32xf32>, vector<16x32xf32> -> vector<16x32xf32>
    %c9 = arith.constant 9 : index
    %c0_69 = arith.constant 0 : index
    %219 = vector.load %arg3[%c9, %c0_69] : memref<27x128xf32, #tpu.memory_space<vmem>>, vector<1x32xf32>
    %220 = vector.broadcast %219 : vector<1x32xf32> to vector<16x32xf32>
    %221 = arith.addf %218, %220 : vector<16x32xf32>
    %222 = arith.addf %221, %198 : vector<16x32xf32>
    %c10 = arith.constant 10 : index
    %c0_70 = arith.constant 0 : index
    %223 = vector.load %arg3[%c10, %c0_70] : memref<27x128xf32, #tpu.memory_space<vmem>>, vector<1x32xf32>
    %c11 = arith.constant 11 : index
    %c0_71 = arith.constant 0 : index
    %224 = vector.load %arg3[%c11, %c0_71] : memref<27x128xf32, #tpu.memory_space<vmem>>, vector<1x32xf32>
    %cst_72 = arith.constant dense<0.000000e+00> : vector<16xf32>
    %225 = vector.multi_reduction <add>, %222, %cst_72 [1] : vector<16x32xf32> to vector<16xf32>
    %226 = vector.shape_cast %225 : vector<16xf32> to vector<16x1xf32>
    %cst_73 = arith.constant 3.200000e+01 : f32
    %227 = vector.broadcast %cst_73 : f32 to vector<16x1xf32>
    %228 = arith.divf %226, %227 : vector<16x1xf32>
    %229 = vector.broadcast %228 : vector<16x1xf32> to vector<16x32xf32>
    %230 = arith.subf %222, %229 : vector<16x32xf32>
    %231 = arith.mulf %230, %230 : vector<16x32xf32>
    %cst_74 = arith.constant dense<0.000000e+00> : vector<16xf32>
    %232 = vector.multi_reduction <add>, %231, %cst_74 [1] : vector<16x32xf32> to vector<16xf32>
    %233 = vector.shape_cast %232 : vector<16xf32> to vector<16x1xf32>
    %cst_75 = arith.constant 3.200000e+01 : f32
    %234 = vector.broadcast %cst_75 : f32 to vector<16x1xf32>
    %235 = arith.divf %233, %234 : vector<16x1xf32>
    %cst_76 = arith.constant 9.99999996E-13 : f32
    %236 = vector.broadcast %cst_76 : f32 to vector<16x1xf32>
    %237 = arith.addf %235, %236 : vector<16x1xf32>
    %238 = math.rsqrt %237 : vector<16x1xf32>
    %239 = vector.broadcast %238 : vector<16x1xf32> to vector<16x32xf32>
    %240 = arith.mulf %230, %239 : vector<16x32xf32>
    %241 = vector.broadcast %223 : vector<1x32xf32> to vector<16x32xf32>
    %242 = arith.mulf %240, %241 : vector<16x32xf32>
    %243 = vector.broadcast %224 : vector<1x32xf32> to vector<16x32xf32>
    %244 = arith.addf %242, %243 : vector<16x32xf32>
    %c376 = arith.constant 376 : index
    %c0_77 = arith.constant 0 : index
    %245 = vector.load %arg2[%c376, %c0_77] : memref<680x128xf32, #tpu.memory_space<vmem>>, vector<32x32xf32>
    %cst_78 = arith.constant dense<0.000000e+00> : vector<16x32xf32>
    %246 = tpu.matmul %244, %245, %cst_78 {dimension_numbers = #tpu.dot_dimension_numbers<[1], [0], [0], [1], [0, 0, 1, 1], [], []>} : vector<16x32xf32>, vector<32x32xf32>, vector<16x32xf32> -> vector<16x32xf32>
    %c12 = arith.constant 12 : index
    %c0_79 = arith.constant 0 : index
    %247 = vector.load %arg3[%c12, %c0_79] : memref<27x128xf32, #tpu.memory_space<vmem>>, vector<1x32xf32>
    %248 = vector.broadcast %247 : vector<1x32xf32> to vector<16x32xf32>
    %249 = arith.addf %246, %248 : vector<16x32xf32>
    %c408 = arith.constant 408 : index
    %c0_80 = arith.constant 0 : index
    %250 = vector.load %arg2[%c408, %c0_80] : memref<680x128xf32, #tpu.memory_space<vmem>>, vector<32x32xf32>
    %cst_81 = arith.constant dense<0.000000e+00> : vector<16x32xf32>
    %251 = tpu.matmul %244, %250, %cst_81 {dimension_numbers = #tpu.dot_dimension_numbers<[1], [0], [0], [1], [0, 0, 1, 1], [], []>} : vector<16x32xf32>, vector<32x32xf32>, vector<16x32xf32> -> vector<16x32xf32>
    %c13 = arith.constant 13 : index
    %c0_82 = arith.constant 0 : index
    %252 = vector.load %arg3[%c13, %c0_82] : memref<27x128xf32, #tpu.memory_space<vmem>>, vector<1x32xf32>
    %253 = vector.broadcast %252 : vector<1x32xf32> to vector<16x32xf32>
    %254 = arith.addf %251, %253 : vector<16x32xf32>
    %c440 = arith.constant 440 : index
    %c0_83 = arith.constant 0 : index
    %255 = vector.load %arg2[%c440, %c0_83] : memref<680x128xf32, #tpu.memory_space<vmem>>, vector<32x32xf32>
    %cst_84 = arith.constant dense<0.000000e+00> : vector<16x32xf32>
    %256 = tpu.matmul %244, %255, %cst_84 {dimension_numbers = #tpu.dot_dimension_numbers<[1], [0], [0], [1], [0, 0, 1, 1], [], []>} : vector<16x32xf32>, vector<32x32xf32>, vector<16x32xf32> -> vector<16x32xf32>
    %c14 = arith.constant 14 : index
    %c0_85 = arith.constant 0 : index
    %257 = vector.load %arg3[%c14, %c0_85] : memref<27x128xf32, #tpu.memory_space<vmem>>, vector<1x32xf32>
    %258 = vector.broadcast %257 : vector<1x32xf32> to vector<16x32xf32>
    %259 = arith.addf %256, %258 : vector<16x32xf32>
    %c472 = arith.constant 472 : index
    %c0_86 = arith.constant 0 : index
    %260 = vector.load %arg2[%c472, %c0_86] : memref<680x128xf32, #tpu.memory_space<vmem>>, vector<32x32xf32>
    %261 = vector.extract_strided_slice %249 {offsets = [0, 0], sizes = [16, 8], strides = [1, 1]} : vector<16x32xf32> to vector<16x8xf32>
    %262 = vector.shape_cast %261 : vector<16x8xf32> to vector<2x8x8xf32>
    %263 = vector.extract_strided_slice %254 {offsets = [0, 0], sizes = [16, 8], strides = [1, 1]} : vector<16x32xf32> to vector<16x8xf32>
    %264 = vector.shape_cast %263 : vector<16x8xf32> to vector<2x8x8xf32>
    %265 = vector.extract_strided_slice %259 {offsets = [0, 0], sizes = [16, 8], strides = [1, 1]} : vector<16x32xf32> to vector<16x8xf32>
    %266 = vector.shape_cast %265 : vector<16x8xf32> to vector<2x8x8xf32>
    "tpu.trace_start"() <{level = 10 : i32, message = "bqd,bkd->bqk"}> : () -> ()
    %cst_87 = arith.constant dense<0.000000e+00> : vector<2x8x8xf32>
    %267 = tpu.matmul %262, %264, %cst_87 {dimension_numbers = #tpu.dot_dimension_numbers<[2], [2], [1], [1], [0, 0, 0, 1, 1, 1], [0], [0]>} : vector<2x8x8xf32>, vector<2x8x8xf32>, vector<2x8x8xf32> -> vector<2x8x8xf32>
    "tpu.trace_stop"() : () -> ()
    %cst_88 = arith.constant 0.353553385 : f32
    %268 = vector.broadcast %cst_88 : f32 to vector<2x8x8xf32>
    %269 = arith.mulf %267, %268 : vector<2x8x8xf32>
    %270 = vector.broadcast %53 : vector<2x1x8xf32> to vector<2x8x8xf32>
    %271 = arith.addf %269, %270 : vector<2x8x8xf32>
    %cst_89 = arith.constant dense<0xFF800000> : vector<2x8xf32>
    %272 = vector.multi_reduction <maximumf>, %271, %cst_89 [2] : vector<2x8x8xf32> to vector<2x8xf32>
    %273 = vector.shape_cast %272 : vector<2x8xf32> to vector<2x8x1xf32>
    %274 = vector.broadcast %273 : vector<2x8x1xf32> to vector<2x8x8xf32>
    %275 = arith.subf %271, %274 : vector<2x8x8xf32>
    %276 = math.exp %275 : vector<2x8x8xf32>
    %cst_90 = arith.constant dense<0.000000e+00> : vector<2x8xf32>
    %277 = vector.multi_reduction <add>, %276, %cst_90 [2] : vector<2x8x8xf32> to vector<2x8xf32>
    %278 = vector.shape_cast %277 : vector<2x8xf32> to vector<2x8x1xf32>
    %279 = tpu.reciprocal %278 {approx = true} : vector<2x8x1xf32> -> vector<2x8x1xf32>
    %280 = vector.broadcast %279 : vector<2x8x1xf32> to vector<2x8x8xf32>
    %281 = arith.mulf %276, %280 : vector<2x8x8xf32>
    "tpu.trace_start"() <{level = 10 : i32, message = "bqk,bkd->bqd"}> : () -> ()
    %cst_91 = arith.constant dense<0.000000e+00> : vector<2x8x8xf32>
    %282 = tpu.matmul %281, %266, %cst_91 {dimension_numbers = #tpu.dot_dimension_numbers<[2], [1], [1], [2], [0, 0, 0, 1, 1, 2], [0], [0]>} : vector<2x8x8xf32>, vector<2x8x8xf32>, vector<2x8x8xf32> -> vector<2x8x8xf32>
    "tpu.trace_stop"() : () -> ()
    %283 = vector.shape_cast %282 : vector<2x8x8xf32> to vector<16x8xf32>
    %284 = vector.extract_strided_slice %260 {offsets = [0, 0], sizes = [8, 32], strides = [1, 1]} : vector<32x32xf32> to vector<8x32xf32>
    %cst_92 = arith.constant dense<0.000000e+00> : vector<16x32xf32>
    %285 = tpu.matmul %283, %284, %cst_92 {dimension_numbers = #tpu.dot_dimension_numbers<[1], [0], [0], [1], [0, 0, 1, 1], [], []>} : vector<16x8xf32>, vector<8x32xf32>, vector<16x32xf32> -> vector<16x32xf32>
    %286 = vector.extract_strided_slice %249 {offsets = [0, 8], sizes = [16, 8], strides = [1, 1]} : vector<16x32xf32> to vector<16x8xf32>
    %287 = vector.shape_cast %286 : vector<16x8xf32> to vector<2x8x8xf32>
    %288 = vector.extract_strided_slice %254 {offsets = [0, 8], sizes = [16, 8], strides = [1, 1]} : vector<16x32xf32> to vector<16x8xf32>
    %289 = vector.shape_cast %288 : vector<16x8xf32> to vector<2x8x8xf32>
    %290 = vector.extract_strided_slice %259 {offsets = [0, 8], sizes = [16, 8], strides = [1, 1]} : vector<16x32xf32> to vector<16x8xf32>
    %291 = vector.shape_cast %290 : vector<16x8xf32> to vector<2x8x8xf32>
    "tpu.trace_start"() <{level = 10 : i32, message = "bqd,bkd->bqk"}> : () -> ()
    %cst_93 = arith.constant dense<0.000000e+00> : vector<2x8x8xf32>
    %292 = tpu.matmul %287, %289, %cst_93 {dimension_numbers = #tpu.dot_dimension_numbers<[2], [2], [1], [1], [0, 0, 0, 1, 1, 1], [0], [0]>} : vector<2x8x8xf32>, vector<2x8x8xf32>, vector<2x8x8xf32> -> vector<2x8x8xf32>
    "tpu.trace_stop"() : () -> ()
    %cst_94 = arith.constant 0.353553385 : f32
    %293 = vector.broadcast %cst_94 : f32 to vector<2x8x8xf32>
    %294 = arith.mulf %292, %293 : vector<2x8x8xf32>
    %295 = vector.broadcast %53 : vector<2x1x8xf32> to vector<2x8x8xf32>
    %296 = arith.addf %294, %295 : vector<2x8x8xf32>
    %cst_95 = arith.constant dense<0xFF800000> : vector<2x8xf32>
    %297 = vector.multi_reduction <maximumf>, %296, %cst_95 [2] : vector<2x8x8xf32> to vector<2x8xf32>
    %298 = vector.shape_cast %297 : vector<2x8xf32> to vector<2x8x1xf32>
    %299 = vector.broadcast %298 : vector<2x8x1xf32> to vector<2x8x8xf32>
    %300 = arith.subf %296, %299 : vector<2x8x8xf32>
    %301 = math.exp %300 : vector<2x8x8xf32>
    %cst_96 = arith.constant dense<0.000000e+00> : vector<2x8xf32>
    %302 = vector.multi_reduction <add>, %301, %cst_96 [2] : vector<2x8x8xf32> to vector<2x8xf32>
    %303 = vector.shape_cast %302 : vector<2x8xf32> to vector<2x8x1xf32>
    %304 = tpu.reciprocal %303 {approx = true} : vector<2x8x1xf32> -> vector<2x8x1xf32>
    %305 = vector.broadcast %304 : vector<2x8x1xf32> to vector<2x8x8xf32>
    %306 = arith.mulf %301, %305 : vector<2x8x8xf32>
    "tpu.trace_start"() <{level = 10 : i32, message = "bqk,bkd->bqd"}> : () -> ()
    %cst_97 = arith.constant dense<0.000000e+00> : vector<2x8x8xf32>
    %307 = tpu.matmul %306, %291, %cst_97 {dimension_numbers = #tpu.dot_dimension_numbers<[2], [1], [1], [2], [0, 0, 0, 1, 1, 2], [0], [0]>} : vector<2x8x8xf32>, vector<2x8x8xf32>, vector<2x8x8xf32> -> vector<2x8x8xf32>
    "tpu.trace_stop"() : () -> ()
    %308 = vector.shape_cast %307 : vector<2x8x8xf32> to vector<16x8xf32>
    %309 = vector.extract_strided_slice %260 {offsets = [8, 0], sizes = [8, 32], strides = [1, 1]} : vector<32x32xf32> to vector<8x32xf32>
    %cst_98 = arith.constant dense<0.000000e+00> : vector<16x32xf32>
    %310 = tpu.matmul %308, %309, %cst_98 {dimension_numbers = #tpu.dot_dimension_numbers<[1], [0], [0], [1], [0, 0, 1, 1], [], []>} : vector<16x8xf32>, vector<8x32xf32>, vector<16x32xf32> -> vector<16x32xf32>
    %311 = arith.addf %285, %310 : vector<16x32xf32>
    %312 = vector.extract_strided_slice %249 {offsets = [0, 16], sizes = [16, 8], strides = [1, 1]} : vector<16x32xf32> to vector<16x8xf32>
    %313 = vector.shape_cast %312 : vector<16x8xf32> to vector<2x8x8xf32>
    %314 = vector.extract_strided_slice %254 {offsets = [0, 16], sizes = [16, 8], strides = [1, 1]} : vector<16x32xf32> to vector<16x8xf32>
    %315 = vector.shape_cast %314 : vector<16x8xf32> to vector<2x8x8xf32>
    %316 = vector.extract_strided_slice %259 {offsets = [0, 16], sizes = [16, 8], strides = [1, 1]} : vector<16x32xf32> to vector<16x8xf32>
    %317 = vector.shape_cast %316 : vector<16x8xf32> to vector<2x8x8xf32>
    "tpu.trace_start"() <{level = 10 : i32, message = "bqd,bkd->bqk"}> : () -> ()
    %cst_99 = arith.constant dense<0.000000e+00> : vector<2x8x8xf32>
    %318 = tpu.matmul %313, %315, %cst_99 {dimension_numbers = #tpu.dot_dimension_numbers<[2], [2], [1], [1], [0, 0, 0, 1, 1, 1], [0], [0]>} : vector<2x8x8xf32>, vector<2x8x8xf32>, vector<2x8x8xf32> -> vector<2x8x8xf32>
    "tpu.trace_stop"() : () -> ()
    %cst_100 = arith.constant 0.353553385 : f32
    %319 = vector.broadcast %cst_100 : f32 to vector<2x8x8xf32>
    %320 = arith.mulf %318, %319 : vector<2x8x8xf32>
    %321 = vector.broadcast %53 : vector<2x1x8xf32> to vector<2x8x8xf32>
    %322 = arith.addf %320, %321 : vector<2x8x8xf32>
    %cst_101 = arith.constant dense<0xFF800000> : vector<2x8xf32>
    %323 = vector.multi_reduction <maximumf>, %322, %cst_101 [2] : vector<2x8x8xf32> to vector<2x8xf32>
    %324 = vector.shape_cast %323 : vector<2x8xf32> to vector<2x8x1xf32>
    %325 = vector.broadcast %324 : vector<2x8x1xf32> to vector<2x8x8xf32>
    %326 = arith.subf %322, %325 : vector<2x8x8xf32>
    %327 = math.exp %326 : vector<2x8x8xf32>
    %cst_102 = arith.constant dense<0.000000e+00> : vector<2x8xf32>
    %328 = vector.multi_reduction <add>, %327, %cst_102 [2] : vector<2x8x8xf32> to vector<2x8xf32>
    %329 = vector.shape_cast %328 : vector<2x8xf32> to vector<2x8x1xf32>
    %330 = tpu.reciprocal %329 {approx = true} : vector<2x8x1xf32> -> vector<2x8x1xf32>
    %331 = vector.broadcast %330 : vector<2x8x1xf32> to vector<2x8x8xf32>
    %332 = arith.mulf %327, %331 : vector<2x8x8xf32>
    "tpu.trace_start"() <{level = 10 : i32, message = "bqk,bkd->bqd"}> : () -> ()
    %cst_103 = arith.constant dense<0.000000e+00> : vector<2x8x8xf32>
    %333 = tpu.matmul %332, %317, %cst_103 {dimension_numbers = #tpu.dot_dimension_numbers<[2], [1], [1], [2], [0, 0, 0, 1, 1, 2], [0], [0]>} : vector<2x8x8xf32>, vector<2x8x8xf32>, vector<2x8x8xf32> -> vector<2x8x8xf32>
    "tpu.trace_stop"() : () -> ()
    %334 = vector.shape_cast %333 : vector<2x8x8xf32> to vector<16x8xf32>
    %335 = vector.extract_strided_slice %260 {offsets = [16, 0], sizes = [8, 32], strides = [1, 1]} : vector<32x32xf32> to vector<8x32xf32>
    %cst_104 = arith.constant dense<0.000000e+00> : vector<16x32xf32>
    %336 = tpu.matmul %334, %335, %cst_104 {dimension_numbers = #tpu.dot_dimension_numbers<[1], [0], [0], [1], [0, 0, 1, 1], [], []>} : vector<16x8xf32>, vector<8x32xf32>, vector<16x32xf32> -> vector<16x32xf32>
    %337 = arith.addf %311, %336 : vector<16x32xf32>
    %338 = vector.extract_strided_slice %249 {offsets = [0, 24], sizes = [16, 8], strides = [1, 1]} : vector<16x32xf32> to vector<16x8xf32>
    %339 = vector.shape_cast %338 : vector<16x8xf32> to vector<2x8x8xf32>
    %340 = vector.extract_strided_slice %254 {offsets = [0, 24], sizes = [16, 8], strides = [1, 1]} : vector<16x32xf32> to vector<16x8xf32>
    %341 = vector.shape_cast %340 : vector<16x8xf32> to vector<2x8x8xf32>
    %342 = vector.extract_strided_slice %259 {offsets = [0, 24], sizes = [16, 8], strides = [1, 1]} : vector<16x32xf32> to vector<16x8xf32>
    %343 = vector.shape_cast %342 : vector<16x8xf32> to vector<2x8x8xf32>
    "tpu.trace_start"() <{level = 10 : i32, message = "bqd,bkd->bqk"}> : () -> ()
    %cst_105 = arith.constant dense<0.000000e+00> : vector<2x8x8xf32>
    %344 = tpu.matmul %339, %341, %cst_105 {dimension_numbers = #tpu.dot_dimension_numbers<[2], [2], [1], [1], [0, 0, 0, 1, 1, 1], [0], [0]>} : vector<2x8x8xf32>, vector<2x8x8xf32>, vector<2x8x8xf32> -> vector<2x8x8xf32>
    "tpu.trace_stop"() : () -> ()
    %cst_106 = arith.constant 0.353553385 : f32
    %345 = vector.broadcast %cst_106 : f32 to vector<2x8x8xf32>
    %346 = arith.mulf %344, %345 : vector<2x8x8xf32>
    %347 = vector.broadcast %53 : vector<2x1x8xf32> to vector<2x8x8xf32>
    %348 = arith.addf %346, %347 : vector<2x8x8xf32>
    %cst_107 = arith.constant dense<0xFF800000> : vector<2x8xf32>
    %349 = vector.multi_reduction <maximumf>, %348, %cst_107 [2] : vector<2x8x8xf32> to vector<2x8xf32>
    %350 = vector.shape_cast %349 : vector<2x8xf32> to vector<2x8x1xf32>
    %351 = vector.broadcast %350 : vector<2x8x1xf32> to vector<2x8x8xf32>
    %352 = arith.subf %348, %351 : vector<2x8x8xf32>
    %353 = math.exp %352 : vector<2x8x8xf32>
    %cst_108 = arith.constant dense<0.000000e+00> : vector<2x8xf32>
    %354 = vector.multi_reduction <add>, %353, %cst_108 [2] : vector<2x8x8xf32> to vector<2x8xf32>
    %355 = vector.shape_cast %354 : vector<2x8xf32> to vector<2x8x1xf32>
    %356 = tpu.reciprocal %355 {approx = true} : vector<2x8x1xf32> -> vector<2x8x1xf32>
    %357 = vector.broadcast %356 : vector<2x8x1xf32> to vector<2x8x8xf32>
    %358 = arith.mulf %353, %357 : vector<2x8x8xf32>
    "tpu.trace_start"() <{level = 10 : i32, message = "bqk,bkd->bqd"}> : () -> ()
    %cst_109 = arith.constant dense<0.000000e+00> : vector<2x8x8xf32>
    %359 = tpu.matmul %358, %343, %cst_109 {dimension_numbers = #tpu.dot_dimension_numbers<[2], [1], [1], [2], [0, 0, 0, 1, 1, 2], [0], [0]>} : vector<2x8x8xf32>, vector<2x8x8xf32>, vector<2x8x8xf32> -> vector<2x8x8xf32>
    "tpu.trace_stop"() : () -> ()
    %360 = vector.shape_cast %359 : vector<2x8x8xf32> to vector<16x8xf32>
    %361 = vector.extract_strided_slice %260 {offsets = [24, 0], sizes = [8, 32], strides = [1, 1]} : vector<32x32xf32> to vector<8x32xf32>
    %cst_110 = arith.constant dense<0.000000e+00> : vector<16x32xf32>
    %362 = tpu.matmul %360, %361, %cst_110 {dimension_numbers = #tpu.dot_dimension_numbers<[1], [0], [0], [1], [0, 0, 1, 1], [], []>} : vector<16x8xf32>, vector<8x32xf32>, vector<16x32xf32> -> vector<16x32xf32>
    %363 = arith.addf %337, %362 : vector<16x32xf32>
    %c15 = arith.constant 15 : index
    %c0_111 = arith.constant 0 : index
    %364 = vector.load %arg3[%c15, %c0_111] : memref<27x128xf32, #tpu.memory_space<vmem>>, vector<1x32xf32>
    %365 = vector.broadcast %364 : vector<1x32xf32> to vector<16x32xf32>
    %366 = arith.addf %363, %365 : vector<16x32xf32>
    %367 = arith.addf %366, %244 : vector<16x32xf32>
    %c16_112 = arith.constant 16 : index
    %c0_113 = arith.constant 0 : index
    %368 = vector.load %arg3[%c16_112, %c0_113] : memref<27x128xf32, #tpu.memory_space<vmem>>, vector<1x32xf32>
    %c17 = arith.constant 17 : index
    %c0_114 = arith.constant 0 : index
    %369 = vector.load %arg3[%c17, %c0_114] : memref<27x128xf32, #tpu.memory_space<vmem>>, vector<1x32xf32>
    %cst_115 = arith.constant dense<0.000000e+00> : vector<16xf32>
    %370 = vector.multi_reduction <add>, %367, %cst_115 [1] : vector<16x32xf32> to vector<16xf32>
    %371 = vector.shape_cast %370 : vector<16xf32> to vector<16x1xf32>
    %cst_116 = arith.constant 3.200000e+01 : f32
    %372 = vector.broadcast %cst_116 : f32 to vector<16x1xf32>
    %373 = arith.divf %371, %372 : vector<16x1xf32>
    %374 = vector.broadcast %373 : vector<16x1xf32> to vector<16x32xf32>
    %375 = arith.subf %367, %374 : vector<16x32xf32>
    %376 = arith.mulf %375, %375 : vector<16x32xf32>
    %cst_117 = arith.constant dense<0.000000e+00> : vector<16xf32>
    %377 = vector.multi_reduction <add>, %376, %cst_117 [1] : vector<16x32xf32> to vector<16xf32>
    %378 = vector.shape_cast %377 : vector<16xf32> to vector<16x1xf32>
    %cst_118 = arith.constant 3.200000e+01 : f32
    %379 = vector.broadcast %cst_118 : f32 to vector<16x1xf32>
    %380 = arith.divf %378, %379 : vector<16x1xf32>
    %cst_119 = arith.constant 9.99999996E-13 : f32
    %381 = vector.broadcast %cst_119 : f32 to vector<16x1xf32>
    %382 = arith.addf %380, %381 : vector<16x1xf32>
    %383 = math.rsqrt %382 : vector<16x1xf32>
    %384 = vector.broadcast %383 : vector<16x1xf32> to vector<16x32xf32>
    %385 = arith.mulf %375, %384 : vector<16x32xf32>
    %386 = vector.broadcast %368 : vector<1x32xf32> to vector<16x32xf32>
    %387 = arith.mulf %385, %386 : vector<16x32xf32>
    %388 = vector.broadcast %369 : vector<1x32xf32> to vector<16x32xf32>
    %389 = arith.addf %387, %388 : vector<16x32xf32>
    %c504 = arith.constant 504 : index
    %c0_120 = arith.constant 0 : index
    %390 = vector.load %arg2[%c504, %c0_120] : memref<680x128xf32, #tpu.memory_space<vmem>>, vector<32x64xf32>
    %cst_121 = arith.constant dense<0.000000e+00> : vector<16x64xf32>
    %391 = tpu.matmul %389, %390, %cst_121 {dimension_numbers = #tpu.dot_dimension_numbers<[1], [0], [0], [1], [0, 0, 1, 1], [], []>} : vector<16x32xf32>, vector<32x64xf32>, vector<16x64xf32> -> vector<16x64xf32>
    %c18 = arith.constant 18 : index
    %c0_122 = arith.constant 0 : index
    %392 = vector.load %arg3[%c18, %c0_122] : memref<27x128xf32, #tpu.memory_space<vmem>>, vector<1x64xf32>
    %393 = vector.broadcast %392 : vector<1x64xf32> to vector<16x64xf32>
    %394 = arith.addf %391, %393 : vector<16x64xf32>
    %cst_123 = arith.constant 5.000000e-01 : f32
    %395 = vector.broadcast %cst_123 : f32 to vector<16x64xf32>
    %396 = arith.mulf %395, %394 : vector<16x64xf32>
    %cst_124 = arith.constant 4.471500e-02 : f32
    %397 = vector.broadcast %cst_124 : f32 to vector<16x64xf32>
    %398 = arith.mulf %397, %394 : vector<16x64xf32>
    %399 = arith.mulf %398, %394 : vector<16x64xf32>
    %400 = arith.mulf %399, %394 : vector<16x64xf32>
    %401 = arith.addf %394, %400 : vector<16x64xf32>
    %cst_125 = arith.constant 0.797884583 : f32
    %402 = vector.broadcast %cst_125 : f32 to vector<16x64xf32>
    %403 = arith.mulf %402, %401 : vector<16x64xf32>
    %404 = math.tanh %403 : vector<16x64xf32>
    %cst_126 = arith.constant 1.000000e+00 : f32
    %405 = vector.broadcast %cst_126 : f32 to vector<16x64xf32>
    %406 = arith.addf %405, %404 : vector<16x64xf32>
    %407 = arith.mulf %396, %406 : vector<16x64xf32>
    %c536 = arith.constant 536 : index
    %c0_127 = arith.constant 0 : index
    %408 = vector.load %arg2[%c536, %c0_127] : memref<680x128xf32, #tpu.memory_space<vmem>>, vector<64x32xf32>
    %cst_128 = arith.constant dense<0.000000e+00> : vector<16x32xf32>
    %409 = tpu.matmul %407, %408, %cst_128 {dimension_numbers = #tpu.dot_dimension_numbers<[1], [0], [0], [1], [0, 0, 1, 1], [], []>} : vector<16x64xf32>, vector<64x32xf32>, vector<16x32xf32> -> vector<16x32xf32>
    %c19 = arith.constant 19 : index
    %c0_129 = arith.constant 0 : index
    %410 = vector.load %arg3[%c19, %c0_129] : memref<27x128xf32, #tpu.memory_space<vmem>>, vector<1x32xf32>
    %411 = vector.broadcast %410 : vector<1x32xf32> to vector<16x32xf32>
    %412 = arith.addf %409, %411 : vector<16x32xf32>
    %413 = arith.addf %412, %389 : vector<16x32xf32>
    %c20 = arith.constant 20 : index
    %c0_130 = arith.constant 0 : index
    %414 = vector.load %arg3[%c20, %c0_130] : memref<27x128xf32, #tpu.memory_space<vmem>>, vector<1x32xf32>
    %c21 = arith.constant 21 : index
    %c0_131 = arith.constant 0 : index
    %415 = vector.load %arg3[%c21, %c0_131] : memref<27x128xf32, #tpu.memory_space<vmem>>, vector<1x32xf32>
    %cst_132 = arith.constant dense<0.000000e+00> : vector<16xf32>
    %416 = vector.multi_reduction <add>, %413, %cst_132 [1] : vector<16x32xf32> to vector<16xf32>
    %417 = vector.shape_cast %416 : vector<16xf32> to vector<16x1xf32>
    %cst_133 = arith.constant 3.200000e+01 : f32
    %418 = vector.broadcast %cst_133 : f32 to vector<16x1xf32>
    %419 = arith.divf %417, %418 : vector<16x1xf32>
    %420 = vector.broadcast %419 : vector<16x1xf32> to vector<16x32xf32>
    %421 = arith.subf %413, %420 : vector<16x32xf32>
    %422 = arith.mulf %421, %421 : vector<16x32xf32>
    %cst_134 = arith.constant dense<0.000000e+00> : vector<16xf32>
    %423 = vector.multi_reduction <add>, %422, %cst_134 [1] : vector<16x32xf32> to vector<16xf32>
    %424 = vector.shape_cast %423 : vector<16xf32> to vector<16x1xf32>
    %cst_135 = arith.constant 3.200000e+01 : f32
    %425 = vector.broadcast %cst_135 : f32 to vector<16x1xf32>
    %426 = arith.divf %424, %425 : vector<16x1xf32>
    %cst_136 = arith.constant 9.99999996E-13 : f32
    %427 = vector.broadcast %cst_136 : f32 to vector<16x1xf32>
    %428 = arith.addf %426, %427 : vector<16x1xf32>
    %429 = math.rsqrt %428 : vector<16x1xf32>
    %430 = vector.broadcast %429 : vector<16x1xf32> to vector<16x32xf32>
    %431 = arith.mulf %421, %430 : vector<16x32xf32>
    %432 = vector.broadcast %414 : vector<1x32xf32> to vector<16x32xf32>
    %433 = arith.mulf %431, %432 : vector<16x32xf32>
    %434 = vector.broadcast %415 : vector<1x32xf32> to vector<16x32xf32>
    %435 = arith.addf %433, %434 : vector<16x32xf32>
    %c0_137 = arith.constant 0 : index
    %c0_138 = arith.constant 0 : index
    %436 = vector.load %arg4[%c0_137, %c0_138] : memref<16x32xf32, #tpu.memory_space<vmem>>, vector<16x32xf32>
    tpu.vector_store %arg4[%c0_137, %c0_138], %435 {strides = array<i32>} : memref<16x32xf32, #tpu.memory_space<vmem>>, vector<16x32xf32>,
    %c0_139 = arith.constant 0 : index
    %c0_140 = arith.constant 0 : index
    %437 = tpu.strided_load %arg4[%c0_139, %c0_140] {strides = array<i32: 8, 1>} : memref<16x32xf32, #tpu.memory_space<vmem>>, vector<2x32xf32>
    %c600 = arith.constant 600 : index
    %c0_141 = arith.constant 0 : index
    %438 = vector.load %arg2[%c600, %c0_141] : memref<680x128xf32, #tpu.memory_space<vmem>>, vector<32x32xf32>
    %cst_142 = arith.constant dense<0.000000e+00> : vector<2x32xf32>
    %439 = tpu.matmul %437, %438, %cst_142 {dimension_numbers = #tpu.dot_dimension_numbers<[1], [0], [0], [1], [0, 0, 1, 1], [], []>} : vector<2x32xf32>, vector<32x32xf32>, vector<2x32xf32> -> vector<2x32xf32>
    %c22 = arith.constant 22 : index
    %c0_143 = arith.constant 0 : index
    %440 = vector.load %arg3[%c22, %c0_143] : memref<27x128xf32, #tpu.memory_space<vmem>>, vector<1x32xf32>
    %441 = vector.broadcast %440 : vector<1x32xf32> to vector<2x32xf32>
    %442 = arith.addf %439, %441 : vector<2x32xf32>
    %443 = math.tanh %442 : vector<2x32xf32>
    %c23 = arith.constant 23 : index
    %c0_144 = arith.constant 0 : index
    %444 = vector.load %arg3[%c23, %c0_144] : memref<27x128xf32, #tpu.memory_space<vmem>>, vector<1x32xf32>
    %c24 = arith.constant 24 : index
    %c0_145 = arith.constant 0 : index
    %445 = vector.load %arg3[%c24, %c0_145] : memref<27x128xf32, #tpu.memory_space<vmem>>, vector<1x32xf32>
    %cst_146 = arith.constant dense<0.000000e+00> : vector<2xf32>
    %446 = vector.multi_reduction <add>, %443, %cst_146 [1] : vector<2x32xf32> to vector<2xf32>
    %447 = vector.shape_cast %446 : vector<2xf32> to vector<2x1xf32>
    %cst_147 = arith.constant 3.200000e+01 : f32
    %448 = vector.broadcast %cst_147 : f32 to vector<2x1xf32>
    %449 = arith.divf %447, %448 : vector<2x1xf32>
    %450 = vector.broadcast %449 : vector<2x1xf32> to vector<2x32xf32>
    %451 = arith.subf %443, %450 : vector<2x32xf32>
    %452 = arith.mulf %451, %451 : vector<2x32xf32>
    %cst_148 = arith.constant dense<0.000000e+00> : vector<2xf32>
    %453 = vector.multi_reduction <add>, %452, %cst_148 [1] : vector<2x32xf32> to vector<2xf32>
    %454 = vector.shape_cast %453 : vector<2xf32> to vector<2x1xf32>
    %cst_149 = arith.constant 3.200000e+01 : f32
    %455 = vector.broadcast %cst_149 : f32 to vector<2x1xf32>
    %456 = arith.divf %454, %455 : vector<2x1xf32>
    %cst_150 = arith.constant 9.99999974E-6 : f32
    %457 = vector.broadcast %cst_150 : f32 to vector<2x1xf32>
    %458 = arith.addf %456, %457 : vector<2x1xf32>
    %459 = math.rsqrt %458 : vector<2x1xf32>
    %460 = vector.broadcast %459 : vector<2x1xf32> to vector<2x32xf32>
    %461 = arith.mulf %451, %460 : vector<2x32xf32>
    %462 = vector.broadcast %444 : vector<1x32xf32> to vector<2x32xf32>
    %463 = arith.mulf %461, %462 : vector<2x32xf32>
    %464 = vector.broadcast %445 : vector<1x32xf32> to vector<2x32xf32>
    %465 = arith.addf %463, %464 : vector<2x32xf32>
    %c0_151 = arith.constant 0 : index
    %c0_152 = arith.constant 0 : index
    %466 = vector.load %arg5[%c0_151, %c0_152] : memref<2x32xf32, #tpu.memory_space<vmem>>, vector<2x32xf32>
    tpu.vector_store %arg5[%c0_151, %c0_152], %465 {strides = array<i32>} : memref<2x32xf32, #tpu.memory_space<vmem>>, vector<2x32xf32>,
    %c632 = arith.constant 632 : index
    %c0_153 = arith.constant 0 : index
    %467 = vector.load %arg2[%c632, %c0_153] : memref<680x128xf32, #tpu.memory_space<vmem>>, vector<32x16xf32>
    %cst_154 = arith.constant dense<0.000000e+00> : vector<2x16xf32>
    %468 = tpu.matmul %465, %467, %cst_154 {dimension_numbers = #tpu.dot_dimension_numbers<[1], [0], [0], [1], [0, 0, 1, 1], [], []>} : vector<2x32xf32>, vector<32x16xf32>, vector<2x16xf32> -> vector<2x16xf32>
    %c25 = arith.constant 25 : index
    %c0_155 = arith.constant 0 : index
    %469 = vector.load %arg3[%c25, %c0_155] : memref<27x128xf32, #tpu.memory_space<vmem>>, vector<1x16xf32>
    %470 = vector.broadcast %469 : vector<1x16xf32> to vector<2x16xf32>
    %471 = arith.addf %468, %470 : vector<2x16xf32>
    %cst_156 = arith.constant 0.000000e+00 : f32
    %472 = vector.broadcast %cst_156 : f32 to vector<2x16xf32>
    %473 = arith.maximumf %471, %472 : vector<2x16xf32>
    %c664 = arith.constant 664 : index
    %c0_157 = arith.constant 0 : index
    %474 = vector.load %arg2[%c664, %c0_157] : memref<680x128xf32, #tpu.memory_space<vmem>>, vector<16x2xf32>
    %cst_158 = arith.constant dense<0.000000e+00> : vector<2x2xf32>
    %475 = tpu.matmul %473, %474, %cst_158 {dimension_numbers = #tpu.dot_dimension_numbers<[1], [0], [0], [1], [0, 0, 1, 1], [], []>} : vector<2x16xf32>, vector<16x2xf32>, vector<2x2xf32> -> vector<2x2xf32>
    %c26 = arith.constant 26 : index
    %c0_159 = arith.constant 0 : index
    %476 = vector.load %arg3[%c26, %c0_159] : memref<27x128xf32, #tpu.memory_space<vmem>>, vector<1x2xf32>
    %477 = vector.broadcast %476 : vector<1x2xf32> to vector<2x2xf32>
    %478 = arith.addf %475, %477 : vector<2x2xf32>
    %c0_160 = arith.constant 0 : index
    %c0_161 = arith.constant 0 : index
    %479 = vector.load %arg6[%c0_160, %c0_161] : memref<2x2xf32, #tpu.memory_space<vmem>>, vector<2x2xf32>
    tpu.vector_store %arg6[%c0_160, %c0_161], %478 {strides = array<i32>} : memref<2x2xf32, #tpu.memory_space<vmem>>, vector<2x2xf32>,
    return
  }
}

</mosaic_0001>

<llo_original>
// kernel: model_forward.1
$region0: #{model_forward.1}
  #allocation0 [shape = 'u32[]', space=smem, size = 0x4, offset = 0x4, fixed_abs, tag = 'smem constant byte address 0x4 - core index']
  #allocation1 [shape = 'u32[144,128]{1,0:T(1,128)}', space=vmem, size = 0x12000, scoped, tag = 'internal scratch']
  %s0 = inlined_call_operand.vmem [shape: s32[32,1], index: 0, kind: input, shape index: {}]
  %s1 = inlined_call_operand.vmem [shape: f32[2,8], index: 1, kind: input, shape index: {}]
  %s2 = inlined_call_operand.hbm [shape: f32[680,128], index: 2, kind: input, shape index: {}]
  %s3 = inlined_call_operand.vmem [shape: f32[27,128], index: 3, kind: input, shape index: {}]
  %s4 = inlined_call_operand.hbm [shape: f32[16,32], index: 4, kind: output, shape index: {0}]
  %s5 = inlined_call_operand.hbm [shape: f32[2,32], index: 5, kind: output, shape index: {1}]
  %s6 = inlined_call_operand.hbm [shape: f32[2,2], index: 6, kind: output, shape index: {2}]
  %7 = xla_tuple %s4, %s5, %s6
  %s8 = sld [smem:[#allocation0]]
  $region46: #{model_forward.1} parent=0
    _
  %s10 = ssub.s32 1, %s8
  %s11 = scalar_select 0, %s10, %s8
  $region1: #{model_forward.1} parent=0
    #allocation2 [shape = 'u8[348160]{0}', space=vmem, size = 0x55000, scoped, tag = 'input window, operand 2, single buffered']
    #allocation3 [shape = 's32[1]{0}', space=sflag, size = 0x4, scoped, tag = 'scoped memory for model_forward.1']
    #allocation4 [shape = 's32[1]{0}', space=sflag, size = 0x4, scoped, tag = 'scoped memory for model_forward.1']
    #allocation5 [shape = 'u8[8192]{0}', space=vmem, size = 0x2000, scoped, tag = 'output window, operand 0, single buffered']
    #allocation6 [shape = 'u8[1024]{0}', space=vmem, size = 0x400, scoped, tag = 'output window, operand 1, single buffered']
    #allocation7 [shape = 's32[1]{0}', space=sflag, size = 0x4, scoped, tag = 'scoped memory for model_forward.1']
    #allocation8 [shape = 'u8[1024]{0}', space=vmem, size = 0x400, scoped, tag = 'output window, operand 2, single buffered']
    %12 = vsyncpa [#allocation3], 0
    %13 = vsyncpa [#allocation4], 0
    %14 = vsyncpa [#allocation7], 0
    // Predicated region
    $region2: #{model_forward.1} parent=1 // pred_check
      _
    $region3: #{model_forward.1} parent=1 // pred_check_branch
      %16 = sbr.rel (0) target = $region5
    $region4: #{model_forward.1} parent=1 // pred_region
      _
    $region5: #{model_forward.1} parent=1 // pred_fallthru
      _
    // Predicated region
    $region6: #{model_forward.1} parent=1 // pred_check
      _
    $region7: #{model_forward.1} parent=1 // pred_check_branch
      %18 = sbr.rel (0) target = $region9
    $region8: #{model_forward.1} parent=1 // pred_region
      _
    $region9: #{model_forward.1} parent=1 // pred_fallthru
      _
    // Predicated region
    $region10: #{model_forward.1} parent=1 // pred_check
      _
    $region11: #{model_forward.1} parent=1 // pred_check_branch
      %20 = sbr.rel (0) target = $region13
    $region12: #{model_forward.1} parent=1 // pred_region
      %s22 = ssub.s32 10880, 10880
      %23 = vsyncadd [#allocation3], %s22
      %s24 = sshll.u32 [#allocation2], 4
      %s25 = int_to_ptr.vmem [resolvable:$true] %s24
      %30 = dma.hbm_to_vmem [thread:$0]  %s2, 10880, %s25, [#allocation3], 128, 128, 8
    $region13: #{model_forward.1} parent=1 // pred_fallthru
      _
    // Predicated region
    $region14: #{model_forward.1} parent=1 // pred_check
      _
    $region15: #{model_forward.1} parent=1 // pred_check_branch
      %32 = sbr.rel (0) target = $region17
    $region16: #{model_forward.1} parent=1 // pred_region
      _
    $region17: #{model_forward.1} parent=1 // pred_fallthru
      _
    // Predicated region
    $region18: #{model_forward.1} parent=1 // pred_check
      _
    $region19: #{model_forward.1} parent=1 // pred_check_branch
      %34 = sbr.rel (0) target = $region21
    $region20: #{model_forward.1} parent=1 // pred_region
      %35 = dma.done [#allocation3], 10880
    $region21: #{model_forward.1} parent=1 // pred_fallthru
      _
    %v36 = vld [vmem:[%s0] sm:$0xff]
    %v37 = vld [vmem:[%s0 + $0x8] sm:$0xff]
    %v38 = vld [vmem:[%s0 + $0x10] sm:$0xff]
    %v39 = vld [vmem:[%s0 + $0x18] sm:$0xff]
    %v40 = vlaneseq
    %v41 = vand.u32 %v40, 127
    %42 = vset.pattern.permute.xlu0 0
    %43 = vperm.xlu0 %42, %v36
    %v44 = vpop.permute.xlu0 %43
    %45 = vset.pattern.permute.xlu0 0
    %46 = vperm.xlu0 %45, %v37
    %v47 = vpop.permute.xlu0 %46
    %vm48 = vcmp.eq.s32.totalorder %v44, %v41
    %vm49 = vcmp.eq.s32.totalorder %v47, %v41
    %v50 = vsel %vm48, 1, 0
    %v51 = vsel %vm49, 1, 0
    %v52 = vcvt.s32.f32 %v50
    %v53 = vcvt.s32.f32 %v51
    %v54 = vld [vmem:[#allocation2] sm:$0xff]
    %v55 = vld [vmem:[#allocation2 + $0x8] sm:$0xff]
    %v56 = vld [vmem:[#allocation2 + $0x10] sm:$0xff]
    %v57 = vld [vmem:[#allocation2 + $0x18] sm:$0xff]
    %v58 = vld [vmem:[#allocation2 + $0x20] sm:$0xff]
    %v59 = vld [vmem:[#allocation2 + $0x28] sm:$0xff]
    %v60 = vld [vmem:[#allocation2 + $0x30] sm:$0xff]
    %v61 = vld [vmem:[#allocation2 + $0x38] sm:$0xff]
    %v62 = vld [vmem:[#allocation2 + $0x40] sm:$0xff]
    %v63 = vld [vmem:[#allocation2 + $0x48] sm:$0xff]
    %v64 = vld [vmem:[#allocation2 + $0x50] sm:$0xff]
    %v65 = vld [vmem:[#allocation2 + $0x58] sm:$0xff]
    %v66 = vld [vmem:[#allocation2 + $0x60] sm:$0xff]
    %v67 = vld [vmem:[#allocation2 + $0x68] sm:$0xff]
    %v68 = vld [vmem:[#allocation2 + $0x70] sm:$0xff]
    %v69 = vld [vmem:[#allocation2 + $0x78] sm:$0xff]
    %v70 = vld [vmem:[#allocation2 + $0x80] sm:$0xff]
    %71 = vmatprep.subr.mxu0 0.0
    %72 = vmatpush1.msra.mxu0 %v54
    %73 = vmatprep.subr.mxu0 0.0
    %74 = vmatpush1.msra.mxu0 %v55
    %75 = vmatprep.subr.mxu0 0.0
    %76 = vmatpush1.msra.mxu0 %v56
    %77 = vmatprep.subr.mxu0 0.0
    %78 = vmatpush1.msra.mxu0 %v57
    %79 = vmatprep.subr.mxu0 0.0
    %80 = vmatpush1.msra.mxu0 %v58
    %81 = vmatprep.subr.mxu0 0.0
    %82 = vmatpush1.msra.mxu0 %v59
    %83 = vmatprep.subr.mxu0 0.0
    %84 = vmatpush1.msra.mxu0 %v60
    %85 = vmatprep.subr.mxu0 0.0
    %86 = vmatpush1.msra.mxu0 %v61
    %87 = vmatprep.subr.mxu0 0.0
    %88 = vmatpush1.msra.mxu0 %v62
    %89 = vmatprep.subr.mxu0 0.0
    %90 = vmatpush1.msra.mxu0 %v63
    %91 = vmatprep.subr.mxu0 0.0
    %92 = vmatpush1.msra.mxu0 %v64
    %93 = vmatprep.subr.mxu0 0.0
    %94 = vmatpush1.msra.mxu0 %v65
    %95 = vmatprep.subr.mxu0 0.0
    %96 = vmatpush1.msra.mxu0 %v66
    %97 = vmatprep.subr.mxu0 0.0
    %98 = vmatpush1.msra.mxu0 %v67
    %99 = vmatprep.subr.mxu0 0.0
    %100 = vmatpush1.msra.mxu0 %v68
    %101 = vmatprep.subr.mxu0 0.0
    %102 = vmatpush1.msra.mxu0 %v69
    %103 = vmatprep.subr.mxu0 0.0
    %104 = vmatpush1.msra.mxu0 0.0
    %105 = vmatprep.subr.mxu0 0.0
    %106 = vmatpush1.msra.mxu0 0.0
    %107 = vmatprep.subr.mxu0 0.0
    %108 = vmatpush1.msra.mxu0 0.0
    %109 = vmatprep.subr.mxu0 0.0
    %110 = vmatpush1.msra.mxu0 0.0
    %111 = vmatprep.subr.mxu0 0.0
    %112 = vmatpush1.msra.mxu0 0.0
    %113 = vmatprep.subr.mxu0 0.0
    %114 = vmatpush1.msra.mxu0 0.0
    %115 = vmatprep.subr.mxu0 0.0
    %116 = vmatpush1.msra.mxu0 0.0
    %117 = vmatprep.subr.mxu0 0.0
    %118 = vmatpush1.msra.mxu0 0.0
    %119 = vmatprep.subr.mxu0 0.0
    %120 = vmatpush1.msra.mxu0 0.0
    %121 = vmatprep.subr.mxu0 0.0
    %122 = vmatpush1.msra.mxu0 0.0
    %123 = vmatprep.subr.mxu0 0.0
    %124 = vmatpush1.msra.mxu0 0.0
    %125 = vmatprep.subr.mxu0 0.0
    %126 = vmatpush1.msra.mxu0 0.0
    %127 = vmatprep.subr.mxu0 0.0
    %128 = vmatpush1.msra.mxu0 0.0
    %129 = vmatprep.subr.mxu0 0.0
    %130 = vmatpush1.msra.mxu0 0.0
    %131 = vmatprep.subr.mxu0 0.0
    %132 = vmatpush1.msra.mxu0 0.0
    %133 = vmatprep.subr.mxu0 0.0
    %134 = vmatpush1.msra.mxu0 0.0
    %135 = vmatprep.mubr.f32.mxu0 0.0
    %136 = vmatmul.mubr.f32.gmra.mrb[0].mxu0 %v52
    %v137 = vpop.f32.mrb[0].mxu0
    %v138 = vadd.f32 %v70, %v137
    %v139 = vpop.f32.mrb[0].mxu0
    %140 = vmatprep.mubr.f32.mxu0 0.0
    %141 = vmatmul.mubr.f32.gmra.mrb[0].mxu0 %v53
    %v142 = vpop.f32.mrb[0].mxu0
    %v143 = vadd.f32 %v70, %v142
    %v144 = vpop.f32.mrb[0].mxu0
    %145 = vdwg.mxu0
    %v146 = vld [vmem:[#allocation2 + $0x90] sm:$0x3]
    %vm147 = vcmp.eq.s32.totalorder %v38, 0
    %vm148 = vcmp.eq.s32.totalorder %v39, 0
    %v149 = vsel %vm147, 1, 0
    %v150 = vsel %vm148, 1, 0
    %151 = vset.pattern.permute.xlu0 0
    %152 = vperm.xlu0 %151, %v149
    %v153 = vpop.permute.xlu0 %152
    %154 = vset.pattern.permute.xlu0 0
    %155 = vperm.xlu0 %154, %v150
    %v156 = vpop.permute.xlu0 %155
    %vm157 = vcmp.eq.s32.totalorder %v153, 1
    %vm158 = vcmp.eq.s32.totalorder %v156, 1
    %v159 = vlaneseq
    %v160 = vshrl.u32 %v159, 7
    %v161 = vsub.s32 0, %v160
    %v162 = vrot.slane %v146, %v161
    %v163 = vlaneseq
    %v164 = vshrl.u32 %v163, 7
    %v165 = vsub.s32 1, %v164
    %v166 = vrot.slane %v146, %v165
    %v167 = vsel %vm157, %v162, %v166
    %v168 = vsel %vm158, %v162, %v166
    %v169 = vadd.f32 %v138, %v167
    %v170 = vadd.f32 %v143, %v168
    %v171 = vld [vmem:[%s3] sm:$0x1]
    %v172 = vld [vmem:[%s3 + $0x1] sm:$0x1]
    %vm173 = vcmask 261120
    %v174 = vsel %vm173, %v169, 0.0
    %175 = vadd.xlane.f32.xlu0 %v174
    %v176 = vpop.xlane.xlu0 %175
    %v177 = vsel %vm173, %v170, 0.0
    %178 = vadd.xlane.f32.xlu0 %v177
    %v179 = vpop.xlane.xlu0 %178
    %v180 = vrcp.pop 32.0
    %v181 = vmul.f32 %v176, %v180
    %v182 = vmul.f32 %v179, %v180
    %v183 = vsub.f32 %v169, %v181
    %v184 = vsub.f32 %v170, %v182
    %v185 = vmul.f32 %v183, %v183
    %v186 = vmul.f32 %v184, %v184
    %v187 = vsel %vm173, %v185, 0.0
    %188 = vadd.xlane.f32.xlu0 %v187
    %v189 = vpop.xlane.xlu0 %188
    %v190 = vsel %vm173, %v186, 0.0
    %191 = vadd.xlane.f32.xlu0 %v190
    %v192 = vpop.xlane.xlu0 %191
    %v193 = vmul.f32 %v189, %v180
    %v194 = vmul.f32 %v192, %v180
    %v195 = vadd.f32 %v193, 1e-12
    %v196 = vadd.f32 %v194, 1e-12
    %v197 = vrsqrt.pop %v195
    %v198 = vrsqrt.pop %v196
    %v199 = vmul.f32 %v183, %v197
    %v200 = vmul.f32 %v184, %v198
    %v201 = vlaneseq
    %v202 = vshrl.u32 %v201, 7
    %v203 = vsub.s32 0, %v202
    %v204 = vrot.slane %v171, %v203
    %v205 = vmul.f32 %v199, %v204
    %v206 = vmul.f32 %v200, %v204
    %v207 = vlaneseq
    %v208 = vshrl.u32 %v207, 7
    %v209 = vsub.s32 0, %v208
    %v210 = vrot.slane %v172, %v209
    %v211 = vadd.f32 %v205, %v210
    %v212 = vadd.f32 %v206, %v210
    %v213 = vld [vmem:[%s1] sm:$0x3]
    %v214 = vsub.f32 1.0, %v213
    %v215 = vmul.f32 %v214, -10000.0
    %v218 = vunpack.c.l.s4 1966171168
    %v219 = vunpack.c.0.s8 %v218
    %v220 = vlaneseq
    %v221 = vshrl.u32 %v220, 7
    %v222 = vsub.s32 %v219, %v221
    %v223 = vrot.slane %v215, %v222
    %v224 = vcombine.high %v223, %v223
    %v226 = vunpack.c.l.s4 1966171168
    %v227 = vunpack.c.0.s8 %v226
    %v228 = vlaneseq
    %v229 = vshrl.u32 %v228, 7
    %v230 = vsub.s32 %v227, %v229
    %v231 = vrot.slane %v223, %v230
    %v233 = vunpack.c.l.s4 1966171168
    %v234 = vunpack.c.0.s8 %v233
    %v235 = vlaneseq
    %v236 = vshrl.u32 %v235, 7
    %v237 = vsub.s32 %v234, %v236
    %v238 = vrot.slane %v224, %v237
    %v239 = vld [vmem:[#allocation2 + $0x98] sm:$0xff]
    %v240 = vld [vmem:[#allocation2 + $0xa0] sm:$0xff]
    %v241 = vld [vmem:[#allocation2 + $0xa8] sm:$0xff]
    %v242 = vld [vmem:[#allocation2 + $0xb0] sm:$0xff]
    %v243 = vld [vmem:[%s3 + $0x2] sm:$0x1]
    %v244 = vlaneseq
    %v245 = vshrl.u32 %v244, 7
    %v246 = vsub.s32 0, %v245
    %v247 = vrot.slane %v243, %v246
    %v249 = vsel %vm173, %v211, 0
    %v252 = vsel %vm173, %v212, 0
    %254 = vmatprep.subr.mxu0 0.0
    %255 = vmatpush1.msra.mxu0 %v239
    %256 = vmatprep.subr.mxu0 0.0
    %257 = vmatpush1.msra.mxu0 %v240
    %258 = vmatprep.subr.mxu0 0.0
    %259 = vmatpush1.msra.mxu0 %v241
    %260 = vmatprep.subr.mxu0 0.0
    %261 = vmatpush1.msra.mxu0 %v242
    %262 = vmatprep.subr.mxu0 0.0
    %263 = vmatpush1.msra.mxu0 0.0
    %264 = vmatprep.subr.mxu0 0.0
    %265 = vmatpush1.msra.mxu0 0.0
    %266 = vmatprep.subr.mxu0 0.0
    %267 = vmatpush1.msra.mxu0 0.0
    %268 = vmatprep.subr.mxu0 0.0
    %269 = vmatpush1.msra.mxu0 0.0
    %270 = vmatprep.subr.mxu0 0.0
    %271 = vmatpush1.msra.mxu0 0.0
    %272 = vmatprep.subr.mxu0 0.0
    %273 = vmatpush1.msra.mxu0 0.0
    %274 = vmatprep.subr.mxu0 0.0
    %275 = vmatpush1.msra.mxu0 0.0
    %276 = vmatprep.subr.mxu0 0.0
    %277 = vmatpush1.msra.mxu0 0.0
    %278 = vmatprep.subr.mxu0 0.0
    %279 = vmatpush1.msra.mxu0 0.0
    %280 = vmatprep.subr.mxu0 0.0
    %281 = vmatpush1.msra.mxu0 0.0
    %282 = vmatprep.subr.mxu0 0.0
    %283 = vmatpush1.msra.mxu0 0.0
    %284 = vmatprep.subr.mxu0 0.0
    %285 = vmatpush1.msra.mxu0 0.0
    %286 = vmatprep.subr.mxu0 0.0
    %287 = vmatpush1.msra.mxu0 0.0
    %288 = vmatprep.subr.mxu0 0.0
    %289 = vmatpush1.msra.mxu0 0.0
    %290 = vmatprep.subr.mxu0 0.0
    %291 = vmatpush1.msra.mxu0 0.0
    %292 = vmatprep.subr.mxu0 0.0
    %293 = vmatpush1.msra.mxu0 0.0
    %294 = vmatprep.subr.mxu0 0.0
    %295 = vmatpush1.msra.mxu0 0.0
    %296 = vmatprep.subr.mxu0 0.0
    %297 = vmatpush1.msra.mxu0 0.0
    %298 = vmatprep.subr.mxu0 0.0
    %299 = vmatpush1.msra.mxu0 0.0
    %300 = vmatprep.subr.mxu0 0.0
    %301 = vmatpush1.msra.mxu0 0.0
    %302 = vmatprep.subr.mxu0 0.0
    %303 = vmatpush1.msra.mxu0 0.0
    %304 = vmatprep.subr.mxu0 0.0
    %305 = vmatpush1.msra.mxu0 0.0
    %306 = vmatprep.subr.mxu0 0.0
    %307 = vmatpush1.msra.mxu0 0.0
    %308 = vmatprep.subr.mxu0 0.0
    %309 = vmatpush1.msra.mxu0 0.0
    %310 = vmatprep.subr.mxu0 0.0
    %311 = vmatpush1.msra.mxu0 0.0
    %312 = vmatprep.subr.mxu0 0.0
    %313 = vmatpush1.msra.mxu0 0.0
    %314 = vmatprep.subr.mxu0 0.0
    %315 = vmatpush1.msra.mxu0 0.0
    %316 = vmatprep.subr.mxu0 0.0
    %317 = vmatpush1.msra.mxu0 0.0
    %318 = vmatprep.mubr.f32.mxu0 0.0
    %319 = vmatmul.mubr.f32.gmra.mrb[0].mxu0 %v249
    %v320 = vpop.f32.mrb[0].mxu0
    %v321 = vadd.f32 %v247, %v320
    %v322 = vpop.f32.mrb[0].mxu0
    %323 = vmatprep.mubr.f32.mxu0 0.0
    %324 = vmatmul.mubr.f32.gmra.mrb[0].mxu0 %v252
    %v325 = vpop.f32.mrb[0].mxu0
    %v326 = vadd.f32 %v247, %v325
    %v327 = vpop.f32.mrb[0].mxu0
    %328 = vdwg.mxu0
    %v329 = vld [vmem:[#allocation2 + $0xb8] sm:$0xff]
    %v330 = vld [vmem:[#allocation2 + $0xc0] sm:$0xff]
    %v331 = vld [vmem:[#allocation2 + $0xc8] sm:$0xff]
    %v332 = vld [vmem:[#allocation2 + $0xd0] sm:$0xff]
    %v333 = vld [vmem:[%s3 + $0x3] sm:$0x1]
    %v334 = vlaneseq
    %v335 = vshrl.u32 %v334, 7
    %v336 = vsub.s32 0, %v335
    %v337 = vrot.slane %v333, %v336
    %338 = vmatprep.subr.mxu0 0.0
    %339 = vmatpush1.msra.mxu0 %v329
    %340 = vmatprep.subr.mxu0 0.0
    %341 = vmatpush1.msra.mxu0 %v330
    %342 = vmatprep.subr.mxu0 0.0
    %343 = vmatpush1.msra.mxu0 %v331
    %344 = vmatprep.subr.mxu0 0.0
    %345 = vmatpush1.msra.mxu0 %v332
    %346 = vmatprep.subr.mxu0 0.0
    %347 = vmatpush1.msra.mxu0 0.0
    %348 = vmatprep.subr.mxu0 0.0
    %349 = vmatpush1.msra.mxu0 0.0
    %350 = vmatprep.subr.mxu0 0.0
    %351 = vmatpush1.msra.mxu0 0.0
    %352 = vmatprep.subr.mxu0 0.0
    %353 = vmatpush1.msra.mxu0 0.0
    %354 = vmatprep.subr.mxu0 0.0
    %355 = vmatpush1.msra.mxu0 0.0
    %356 = vmatprep.subr.mxu0 0.0
    %357 = vmatpush1.msra.mxu0 0.0
    %358 = vmatprep.subr.mxu0 0.0
    %359 = vmatpush1.msra.mxu0 0.0
    %360 = vmatprep.subr.mxu0 0.0
    %361 = vmatpush1.msra.mxu0 0.0
    %362 = vmatprep.subr.mxu0 0.0
    %363 = vmatpush1.msra.mxu0 0.0
    %364 = vmatprep.subr.mxu0 0.0
    %365 = vmatpush1.msra.mxu0 0.0
    %366 = vmatprep.subr.mxu0 0.0
    %367 = vmatpush1.msra.mxu0 0.0
    %368 = vmatprep.subr.mxu0 0.0
    %369 = vmatpush1.msra.mxu0 0.0
    %370 = vmatprep.subr.mxu0 0.0
    %371 = vmatpush1.msra.mxu0 0.0
    %372 = vmatprep.subr.mxu0 0.0
    %373 = vmatpush1.msra.mxu0 0.0
    %374 = vmatprep.subr.mxu0 0.0
    %375 = vmatpush1.msra.mxu0 0.0
    %376 = vmatprep.subr.mxu0 0.0
    %377 = vmatpush1.msra.mxu0 0.0
    %378 = vmatprep.subr.mxu0 0.0
    %379 = vmatpush1.msra.mxu0 0.0
    %380 = vmatprep.subr.mxu0 0.0
    %381 = vmatpush1.msra.mxu0 0.0
    %382 = vmatprep.subr.mxu0 0.0
    %383 = vmatpush1.msra.mxu0 0.0
    %384 = vmatprep.subr.mxu0 0.0
    %385 = vmatpush1.msra.mxu0 0.0
    %386 = vmatprep.subr.mxu0 0.0
    %387 = vmatpush1.msra.mxu0 0.0
    %388 = vmatprep.subr.mxu0 0.0
    %389 = vmatpush1.msra.mxu0 0.0
    %390 = vmatprep.subr.mxu0 0.0
    %391 = vmatpush1.msra.mxu0 0.0
    %392 = vmatprep.subr.mxu0 0.0
    %393 = vmatpush1.msra.mxu0 0.0
    %394 = vmatprep.subr.mxu0 0.0
    %395 = vmatpush1.msra.mxu0 0.0
    %396 = vmatprep.subr.mxu0 0.0
    %397 = vmatpush1.msra.mxu0 0.0
    %398 = vmatprep.subr.mxu0 0.0
    %399 = vmatpush1.msra.mxu0 0.0
    %400 = vmatprep.subr.mxu0 0.0
    %401 = vmatpush1.msra.mxu0 0.0
    %402 = vmatprep.mubr.f32.mxu0 0.0
    %403 = vmatmul.mubr.f32.gmra.mrb[0].mxu0 %v249
    %v404 = vpop.f32.mrb[0].mxu0
    %v405 = vadd.f32 %v337, %v404
    %v406 = vpop.f32.mrb[0].mxu0
    %407 = vmatprep.mubr.f32.mxu0 0.0
    %408 = vmatmul.mubr.f32.gmra.mrb[0].mxu0 %v252
    %v409 = vpop.f32.mrb[0].mxu0
    %v410 = vadd.f32 %v337, %v409
    %v411 = vpop.f32.mrb[0].mxu0
    %412 = vdwg.mxu0
    %v413 = vld [vmem:[#allocation2 + $0xd8] sm:$0xff]
    %v414 = vld [vmem:[#allocation2 + $0xe0] sm:$0xff]
    %v415 = vld [vmem:[#allocation2 + $0xe8] sm:$0xff]
    %v416 = vld [vmem:[#allocation2 + $0xf0] sm:$0xff]
    %v417 = vld [vmem:[%s3 + $0x4] sm:$0x1]
    %v418 = vlaneseq
    %v419 = vshrl.u32 %v418, 7
    %v420 = vsub.s32 0, %v419
    %v421 = vrot.slane %v417, %v420
    %422 = vmatprep.subr.mxu0 0.0
    %423 = vmatpush1.msra.mxu0 %v413
    %424 = vmatprep.subr.mxu0 0.0
    %425 = vmatpush1.msra.mxu0 %v414
    %426 = vmatprep.subr.mxu0 0.0
    %427 = vmatpush1.msra.mxu0 %v415
    %428 = vmatprep.subr.mxu0 0.0
    %429 = vmatpush1.msra.mxu0 %v416
    %430 = vmatprep.subr.mxu0 0.0
    %431 = vmatpush1.msra.mxu0 0.0
    %432 = vmatprep.subr.mxu0 0.0
    %433 = vmatpush1.msra.mxu0 0.0
    %434 = vmatprep.subr.mxu0 0.0
    %435 = vmatpush1.msra.mxu0 0.0
    %436 = vmatprep.subr.mxu0 0.0
    %437 = vmatpush1.msra.mxu0 0.0
    %438 = vmatprep.subr.mxu0 0.0
    %439 = vmatpush1.msra.mxu0 0.0
    %440 = vmatprep.subr.mxu0 0.0
    %441 = vmatpush1.msra.mxu0 0.0
    %442 = vmatprep.subr.mxu0 0.0
    %443 = vmatpush1.msra.mxu0 0.0
    %444 = vmatprep.subr.mxu0 0.0
    %445 = vmatpush1.msra.mxu0 0.0
    %446 = vmatprep.subr.mxu0 0.0
    %447 = vmatpush1.msra.mxu0 0.0
    %448 = vmatprep.subr.mxu0 0.0
    %449 = vmatpush1.msra.mxu0 0.0
    %450 = vmatprep.subr.mxu0 0.0
    %451 = vmatpush1.msra.mxu0 0.0
    %452 = vmatprep.subr.mxu0 0.0
    %453 = vmatpush1.msra.mxu0 0.0
    %454 = vmatprep.subr.mxu0 0.0
    %455 = vmatpush1.msra.mxu0 0.0
    %456 = vmatprep.subr.mxu0 0.0
    %457 = vmatpush1.msra.mxu0 0.0
    %458 = vmatprep.subr.mxu0 0.0
    %459 = vmatpush1.msra.mxu0 0.0
    %460 = vmatprep.subr.mxu0 0.0
    %461 = vmatpush1.msra.mxu0 0.0
    %462 = vmatprep.subr.mxu0 0.0
    %463 = vmatpush1.msra.mxu0 0.0
    %464 = vmatprep.subr.mxu0 0.0
    %465 = vmatpush1.msra.mxu0 0.0
    %466 = vmatprep.subr.mxu0 0.0
    %467 = vmatpush1.msra.mxu0 0.0
    %468 = vmatprep.subr.mxu0 0.0
    %469 = vmatpush1.msra.mxu0 0.0
    %470 = vmatprep.subr.mxu0 0.0
    %471 = vmatpush1.msra.mxu0 0.0
    %472 = vmatprep.subr.mxu0 0.0
    %473 = vmatpush1.msra.mxu0 0.0
    %474 = vmatprep.subr.mxu0 0.0
    %475 = vmatpush1.msra.mxu0 0.0
    %476 = vmatprep.subr.mxu0 0.0
    %477 = vmatpush1.msra.mxu0 0.0
    %478 = vmatprep.subr.mxu0 0.0
    %479 = vmatpush1.msra.mxu0 0.0
    %480 = vmatprep.subr.mxu0 0.0
    %481 = vmatpush1.msra.mxu0 0.0
    %482 = vmatprep.subr.mxu0 0.0
    %483 = vmatpush1.msra.mxu0 0.0
    %484 = vmatprep.subr.mxu0 0.0
    %485 = vmatpush1.msra.mxu0 0.0
    %486 = vmatprep.mubr.f32.mxu0 0.0
    %487 = vmatmul.mubr.f32.gmra.mrb[0].mxu0 %v249
    %v488 = vpop.f32.mrb[0].mxu0
    %v489 = vadd.f32 %v421, %v488
    %v490 = vpop.f32.mrb[0].mxu0
    %491 = vmatprep.mubr.f32.mxu0 0.0
    %492 = vmatmul.mubr.f32.gmra.mrb[0].mxu0 %v252
    %v493 = vpop.f32.mrb[0].mxu0
    %v494 = vadd.f32 %v421, %v493
    %v495 = vpop.f32.mrb[0].mxu0
    %496 = vdwg.mxu0
    %v497 = vld [vmem:[#allocation2 + $0xf8] sm:$0xff]
    %v498 = vld [vmem:[#allocation2 + $0x100] sm:$0xff]
    %v499 = vld [vmem:[#allocation2 + $0x108] sm:$0xff]
    %v500 = vld [vmem:[#allocation2 + $0x110] sm:$0xff]
    %vm501 = vcmask 64512
    %v503 = vsel %vm501, %v321, 0
    %v506 = vsel %vm501, %v405, 0
    %508 = vmatprep.subr.mxu0 0.0
    %509 = vmatpush1.xpose.msra.mxu0 %v506
    %510 = vmatprep.subr.mxu0 0.0
    %511 = vmatpush1.xpose.msra.mxu0 0.0
    %512 = vmatprep.subr.mxu0 0.0
    %513 = vmatpush1.xpose.msra.mxu0 0.0
    %514 = vmatprep.subr.mxu0 0.0
    %515 = vmatpush1.xpose.msra.mxu0 0.0
    %516 = vmatprep.subr.mxu0 0.0
    %517 = vmatpush1.xpose.msra.mxu0 0.0
    %518 = vmatprep.subr.mxu0 0.0
    %519 = vmatpush1.xpose.msra.mxu0 0.0
    %520 = vmatprep.subr.mxu0 0.0
    %521 = vmatpush1.xpose.msra.mxu0 0.0
    %522 = vmatprep.subr.mxu0 0.0
    %523 = vmatpush1.xpose.msra.mxu0 0.0
    %524 = vmatprep.subr.mxu0 0.0
    %525 = vmatpush1.xpose.msra.mxu0 0.0
    %526 = vmatprep.subr.mxu0 0.0
    %527 = vmatpush1.xpose.msra.mxu0 0.0
    %528 = vmatprep.subr.mxu0 0.0
    %529 = vmatpush1.xpose.msra.mxu0 0.0
    %530 = vmatprep.subr.mxu0 0.0
    %531 = vmatpush1.xpose.msra.mxu0 0.0
    %532 = vmatprep.subr.mxu0 0.0
    %533 = vmatpush1.xpose.msra.mxu0 0.0
    %534 = vmatprep.subr.mxu0 0.0
    %535 = vmatpush1.xpose.msra.mxu0 0.0
    %536 = vmatprep.subr.mxu0 0.0
    %537 = vmatpush1.xpose.msra.mxu0 0.0
    %538 = vmatprep.subr.mxu0 0.0
    %539 = vmatpush1.xpose.msra.mxu0 0.0
    %540 = vmatprep.subr.mxu0 0.0
    %541 = vmatpush1.xpose.msra.mxu0 0.0
    %542 = vmatprep.subr.mxu0 0.0
    %543 = vmatpush1.xpose.msra.mxu0 0.0
    %544 = vmatprep.subr.mxu0 0.0
    %545 = vmatpush1.xpose.msra.mxu0 0.0
    %546 = vmatprep.subr.mxu0 0.0
    %547 = vmatpush1.xpose.msra.mxu0 0.0
    %548 = vmatprep.subr.mxu0 0.0
    %549 = vmatpush1.xpose.msra.mxu0 0.0
    %550 = vmatprep.subr.mxu0 0.0
    %551 = vmatpush1.xpose.msra.mxu0 0.0
    %552 = vmatprep.subr.mxu0 0.0
    %553 = vmatpush1.xpose.msra.mxu0 0.0
    %554 = vmatprep.subr.mxu0 0.0
    %555 = vmatpush1.xpose.msra.mxu0 0.0
    %556 = vmatprep.subr.mxu0 0.0
    %557 = vmatpush1.xpose.msra.mxu0 0.0
    %558 = vmatprep.subr.mxu0 0.0
    %559 = vmatpush1.xpose.msra.mxu0 0.0
    %560 = vmatprep.subr.mxu0 0.0
    %561 = vmatpush1.xpose.msra.mxu0 0.0
    %562 = vmatprep.subr.mxu0 0.0
    %563 = vmatpush1.xpose.msra.mxu0 0.0
    %564 = vmatprep.subr.mxu0 0.0
    %565 = vmatpush1.xpose.msra.mxu0 0.0
    %566 = vmatprep.subr.mxu0 0.0
    %567 = vmatpush1.xpose.msra.mxu0 0.0
    %568 = vmatprep.subr.mxu0 0.0
    %569 = vmatpush1.xpose.msra.mxu0 0.0
    %570 = vmatprep.subr.mxu0 0.0
    %571 = vmatpush1.xpose.msra.mxu0 0.0
    %572 = vmatprep.mubr.f32.mxu0 0.0
    %573 = vmatmul.mubr.f32.gmra.mrb[0].mxu0 %v503
    %v574 = vpop.f32.mrb[0].mxu0
    %v575 = vadd.f32 0.0, %v574
    %v576 = vpop.f32.mrb[0].mxu0
    %577 = vdwg.mxu0
    %v579 = vsel %vm501, %v326, 0
    %v582 = vsel %vm501, %v410, 0
    %584 = vmatprep.subr.mxu0 0.0
    %585 = vmatpush1.xpose.msra.mxu0 %v582
    %586 = vmatprep.subr.mxu0 0.0
    %587 = vmatpush1.xpose.msra.mxu0 0.0
    %588 = vmatprep.subr.mxu0 0.0
    %589 = vmatpush1.xpose.msra.mxu0 0.0
    %590 = vmatprep.subr.mxu0 0.0
    %591 = vmatpush1.xpose.msra.mxu0 0.0
    %592 = vmatprep.subr.mxu0 0.0
    %593 = vmatpush1.xpose.msra.mxu0 0.0
    %594 = vmatprep.subr.mxu0 0.0
    %595 = vmatpush1.xpose.msra.mxu0 0.0
    %596 = vmatprep.subr.mxu0 0.0
    %597 = vmatpush1.xpose.msra.mxu0 0.0
    %598 = vmatprep.subr.mxu0 0.0
    %599 = vmatpush1.xpose.msra.mxu0 0.0
    %600 = vmatprep.subr.mxu0 0.0
    %601 = vmatpush1.xpose.msra.mxu0 0.0
    %602 = vmatprep.subr.mxu0 0.0
    %603 = vmatpush1.xpose.msra.mxu0 0.0
    %604 = vmatprep.subr.mxu0 0.0
    %605 = vmatpush1.xpose.msra.mxu0 0.0
    %606 = vmatprep.subr.mxu0 0.0
    %607 = vmatpush1.xpose.msra.mxu0 0.0
    %608 = vmatprep.subr.mxu0 0.0
    %609 = vmatpush1.xpose.msra.mxu0 0.0
    %610 = vmatprep.subr.mxu0 0.0
    %611 = vmatpush1.xpose.msra.mxu0 0.0
    %612 = vmatprep.subr.mxu0 0.0
    %613 = vmatpush1.xpose.msra.mxu0 0.0
    %614 = vmatprep.subr.mxu0 0.0
    %615 = vmatpush1.xpose.msra.mxu0 0.0
    %616 = vmatprep.subr.mxu0 0.0
    %617 = vmatpush1.xpose.msra.mxu0 0.0
    %618 = vmatprep.subr.mxu0 0.0
    %619 = vmatpush1.xpose.msra.mxu0 0.0
    %620 = vmatprep.subr.mxu0 0.0
    %621 = vmatpush1.xpose.msra.mxu0 0.0
    %622 = vmatprep.subr.mxu0 0.0
    %623 = vmatpush1.xpose.msra.mxu0 0.0
    %624 = vmatprep.subr.mxu0 0.0
    %625 = vmatpush1.xpose.msra.mxu0 0.0
    %626 = vmatprep.subr.mxu0 0.0
    %627 = vmatpush1.xpose.msra.mxu0 0.0
    %628 = vmatprep.subr.mxu0 0.0
    %629 = vmatpush1.xpose.msra.mxu0 0.0
    %630 = vmatprep.subr.mxu0 0.0
    %631 = vmatpush1.xpose.msra.mxu0 0.0
    %632 = vmatprep.subr.mxu0 0.0
    %633 = vmatpush1.xpose.msra.mxu0 0.0
    %634 = vmatprep.subr.mxu0 0.0
    %635 = vmatpush1.xpose.msra.mxu0 0.0
    %636 = vmatprep.subr.mxu0 0.0
    %637 = vmatpush1.xpose.msra.mxu0 0.0
    %638 = vmatprep.subr.mxu0 0.0
    %639 = vmatpush1.xpose.msra.mxu0 0.0
    %640 = vmatprep.subr.mxu0 0.0
    %641 = vmatpush1.xpose.msra.mxu0 0.0
    %642 = vmatprep.subr.mxu0 0.0
    %643 = vmatpush1.xpose.msra.mxu0 0.0
    %644 = vmatprep.subr.mxu0 0.0
    %645 = vmatpush1.xpose.msra.mxu0 0.0
    %646 = vmatprep.subr.mxu0 0.0
    %647 = vmatpush1.xpose.msra.mxu0 0.0
    %648 = vmatprep.mubr.f32.mxu0 0.0
    %649 = vmatmul.mubr.f32.gmra.mrb[0].mxu0 %v579
    %v650 = vpop.f32.mrb[0].mxu0
    %v651 = vadd.f32 0.0, %v650
    %v652 = vpop.f32.mrb[0].mxu0
    %653 = vdwg.mxu0
    %v654 = vmul.f32 %v575, 0.35355338
    %v655 = vmul.f32 %v651, 0.35355338
    %v656 = vlaneseq
    %v657 = vshrl.u32 %v656, 7
    %v658 = vsub.s32 0, %v657
    %v659 = vrot.slane %v231, %v658
    %v660 = vlaneseq
    %v661 = vshrl.u32 %v660, 7
    %v662 = vsub.s32 0, %v661
    %v663 = vrot.slane %v238, %v662
    %v666 = vadd.f32 %v654, %v659
    %v667 = vadd.f32 %v655, %v663
    %v668 = vsel %vm501, %v666, -inf
    %669 = vmax.xlane.f32.xlu0 %v668
    %v670 = vpop.xlane.xlu0 %669
    %v671 = vsel %vm501, %v667, -inf
    %672 = vmax.xlane.f32.xlu0 %v671
    %v673 = vpop.xlane.xlu0 %672
    %v674 = vsub.f32 %v666, %v670
    %v675 = vsub.f32 %v667, %v673
    %v676 = vmul.f32 %v674, 1.442695
    %v677 = vpow.pop %v676
    %v678 = vmul.f32 %v675, 1.442695
    %v679 = vpow.pop %v678
    %v680 = vsel %vm501, %v677, 0.0
    %681 = vadd.xlane.f32.xlu0 %v680
    %v682 = vpop.xlane.xlu0 %681
    %v683 = vsel %vm501, %v679, 0.0
    %684 = vadd.xlane.f32.xlu0 %v683
    %v685 = vpop.xlane.xlu0 %684
    %v686 = vrcp.pop %v682
    %v687 = vrcp.pop %v685
    %v688 = vmul.f32 %v677, %v686
    %v689 = vmul.f32 %v679, %v687
    %v691 = vsel %vm501, %v688, 0
    %693 = vmatprep.subr.mxu0 0.0
    %694 = vmatpush1.msra.mxu0 %v489
    %695 = vmatprep.subr.mxu0 0.0
    %696 = vmatpush1.msra.mxu0 0.0
    %697 = vmatprep.subr.mxu0 0.0
    %698 = vmatpush1.msra.mxu0 0.0
    %699 = vmatprep.subr.mxu0 0.0
    %700 = vmatpush1.msra.mxu0 0.0
    %701 = vmatprep.subr.mxu0 0.0
    %702 = vmatpush1.msra.mxu0 0.0
    %703 = vmatprep.subr.mxu0 0.0
    %704 = vmatpush1.msra.mxu0 0.0
    %705 = vmatprep.subr.mxu0 0.0
    %706 = vmatpush1.msra.mxu0 0.0
    %707 = vmatprep.subr.mxu0 0.0
    %708 = vmatpush1.msra.mxu0 0.0
    %709 = vmatprep.subr.mxu0 0.0
    %710 = vmatpush1.msra.mxu0 0.0
    %711 = vmatprep.subr.mxu0 0.0
    %712 = vmatpush1.msra.mxu0 0.0
    %713 = vmatprep.subr.mxu0 0.0
    %714 = vmatpush1.msra.mxu0 0.0
    %715 = vmatprep.subr.mxu0 0.0
    %716 = vmatpush1.msra.mxu0 0.0
    %717 = vmatprep.subr.mxu0 0.0
    %718 = vmatpush1.msra.mxu0 0.0
    %719 = vmatprep.subr.mxu0 0.0
    %720 = vmatpush1.msra.mxu0 0.0
    %721 = vmatprep.subr.mxu0 0.0
    %722 = vmatpush1.msra.mxu0 0.0
    %723 = vmatprep.subr.mxu0 0.0
    %724 = vmatpush1.msra.mxu0 0.0
    %725 = vmatprep.subr.mxu0 0.0
    %726 = vmatpush1.msra.mxu0 0.0
    %727 = vmatprep.subr.mxu0 0.0
    %728 = vmatpush1.msra.mxu0 0.0
    %729 = vmatprep.subr.mxu0 0.0
    %730 = vmatpush1.msra.mxu0 0.0
    %731 = vmatprep.subr.mxu0 0.0
    %732 = vmatpush1.msra.mxu0 0.0
    %733 = vmatprep.subr.mxu0 0.0
    %734 = vmatpush1.msra.mxu0 0.0
    %735 = vmatprep.subr.mxu0 0.0
    %736 = vmatpush1.msra.mxu0 0.0
    %737 = vmatprep.subr.mxu0 0.0
    %738 = vmatpush1.msra.mxu0 0.0
    %739 = vmatprep.subr.mxu0 0.0
    %740 = vmatpush1.msra.mxu0 0.0
    %741 = vmatprep.subr.mxu0 0.0
    %742 = vmatpush1.msra.mxu0 0.0
    %743 = vmatprep.subr.mxu0 0.0
    %744 = vmatpush1.msra.mxu0 0.0
    %745 = vmatprep.subr.mxu0 0.0
    %746 = vmatpush1.msra.mxu0 0.0
    %747 = vmatprep.subr.mxu0 0.0
    %748 = vmatpush1.msra.mxu0 0.0
    %749 = vmatprep.subr.mxu0 0.0
    %750 = vmatpush1.msra.mxu0 0.0
    %751 = vmatprep.subr.mxu0 0.0
    %752 = vmatpush1.msra.mxu0 0.0
    %753 = vmatprep.subr.mxu0 0.0
    %754 = vmatpush1.msra.mxu0 0.0
    %755 = vmatprep.subr.mxu0 0.0
    %756 = vmatpush1.msra.mxu0 0.0
    %757 = vmatprep.mubr.f32.mxu0 0.0
    %758 = vmatmul.mubr.f32.gmra.mrb[0].mxu0 %v691
    %v759 = vpop.f32.mrb[0].mxu0
    %v760 = vadd.f32 0.0, %v759
    %v761 = vpop.f32.mrb[0].mxu0
    %762 = vdwg.mxu0
    %v764 = vsel %vm501, %v689, 0
    %766 = vmatprep.subr.mxu0 0.0
    %767 = vmatpush1.msra.mxu0 %v494
    %768 = vmatprep.subr.mxu0 0.0
    %769 = vmatpush1.msra.mxu0 0.0
    %770 = vmatprep.subr.mxu0 0.0
    %771 = vmatpush1.msra.mxu0 0.0
    %772 = vmatprep.subr.mxu0 0.0
    %773 = vmatpush1.msra.mxu0 0.0
    %774 = vmatprep.subr.mxu0 0.0
    %775 = vmatpush1.msra.mxu0 0.0
    %776 = vmatprep.subr.mxu0 0.0
    %777 = vmatpush1.msra.mxu0 0.0
    %778 = vmatprep.subr.mxu0 0.0
    %779 = vmatpush1.msra.mxu0 0.0
    %780 = vmatprep.subr.mxu0 0.0
    %781 = vmatpush1.msra.mxu0 0.0
    %782 = vmatprep.subr.mxu0 0.0
    %783 = vmatpush1.msra.mxu0 0.0
    %784 = vmatprep.subr.mxu0 0.0
    %785 = vmatpush1.msra.mxu0 0.0
    %786 = vmatprep.subr.mxu0 0.0
    %787 = vmatpush1.msra.mxu0 0.0
    %788 = vmatprep.subr.mxu0 0.0
    %789 = vmatpush1.msra.mxu0 0.0
    %790 = vmatprep.subr.mxu0 0.0
    %791 = vmatpush1.msra.mxu0 0.0
    %792 = vmatprep.subr.mxu0 0.0
    %793 = vmatpush1.msra.mxu0 0.0
    %794 = vmatprep.subr.mxu0 0.0
    %795 = vmatpush1.msra.mxu0 0.0
    %796 = vmatprep.subr.mxu0 0.0
    %797 = vmatpush1.msra.mxu0 0.0
    %798 = vmatprep.subr.mxu0 0.0
    %799 = vmatpush1.msra.mxu0 0.0
    %800 = vmatprep.subr.mxu0 0.0
    %801 = vmatpush1.msra.mxu0 0.0
    %802 = vmatprep.subr.mxu0 0.0
    %803 = vmatpush1.msra.mxu0 0.0
    %804 = vmatprep.subr.mxu0 0.0
    %805 = vmatpush1.msra.mxu0 0.0
    %806 = vmatprep.subr.mxu0 0.0
    %807 = vmatpush1.msra.mxu0 0.0
    %808 = vmatprep.subr.mxu0 0.0
    %809 = vmatpush1.msra.mxu0 0.0
    %810 = vmatprep.subr.mxu0 0.0
    %811 = vmatpush1.msra.mxu0 0.0
    %812 = vmatprep.subr.mxu0 0.0
    %813 = vmatpush1.msra.mxu0 0.0
    %814 = vmatprep.subr.mxu0 0.0
    %815 = vmatpush1.msra.mxu0 0.0
    %816 = vmatprep.subr.mxu0 0.0
    %817 = vmatpush1.msra.mxu0 0.0
    %818 = vmatprep.subr.mxu0 0.0
    %819 = vmatpush1.msra.mxu0 0.0
    %820 = vmatprep.subr.mxu0 0.0
    %821 = vmatpush1.msra.mxu0 0.0
    %822 = vmatprep.subr.mxu0 0.0
    %823 = vmatpush1.msra.mxu0 0.0
    %824 = vmatprep.subr.mxu0 0.0
    %825 = vmatpush1.msra.mxu0 0.0
    %826 = vmatprep.subr.mxu0 0.0
    %827 = vmatpush1.msra.mxu0 0.0
    %828 = vmatprep.subr.mxu0 0.0
    %829 = vmatpush1.msra.mxu0 0.0
    %830 = vmatprep.mubr.f32.mxu0 0.0
    %831 = vmatmul.mubr.f32.gmra.mrb[0].mxu0 %v764
    %v832 = vpop.f32.mrb[0].mxu0
    %v833 = vadd.f32 0.0, %v832
    %v834 = vpop.f32.mrb[0].mxu0
    %835 = vdwg.mxu0
    %836 = vrot.lane.b32.xlu0 %v321, 120
    %v837 = vpop.permute.xlu0 %836
    %838 = vrot.lane.b32.xlu0 %v405, 120
    %v839 = vpop.permute.xlu0 %838
    %v840 = vsel %vm501, %v837, 0
    %v842 = vsel %vm501, %v839, 0
    %844 = vmatprep.subr.mxu0 0.0
    %845 = vmatpush1.xpose.msra.mxu0 %v842
    %846 = vmatprep.subr.mxu0 0.0
    %847 = vmatpush1.xpose.msra.mxu0 0.0
    %848 = vmatprep.subr.mxu0 0.0
    %849 = vmatpush1.xpose.msra.mxu0 0.0
    %850 = vmatprep.subr.mxu0 0.0
    %851 = vmatpush1.xpose.msra.mxu0 0.0
    %852 = vmatprep.subr.mxu0 0.0
    %853 = vmatpush1.xpose.msra.mxu0 0.0
    %854 = vmatprep.subr.mxu0 0.0
    %855 = vmatpush1.xpose.msra.mxu0 0.0
    %856 = vmatprep.subr.mxu0 0.0
    %857 = vmatpush1.xpose.msra.mxu0 0.0
    %858 = vmatprep.subr.mxu0 0.0
    %859 = vmatpush1.xpose.msra.mxu0 0.0
    %860 = vmatprep.subr.mxu0 0.0
    %861 = vmatpush1.xpose.msra.mxu0 0.0
    %862 = vmatprep.subr.mxu0 0.0
    %863 = vmatpush1.xpose.msra.mxu0 0.0
    %864 = vmatprep.subr.mxu0 0.0
    %865 = vmatpush1.xpose.msra.mxu0 0.0
    %866 = vmatprep.subr.mxu0 0.0
    %867 = vmatpush1.xpose.msra.mxu0 0.0
    %868 = vmatprep.subr.mxu0 0.0
    %869 = vmatpush1.xpose.msra.mxu0 0.0
    %870 = vmatprep.subr.mxu0 0.0
    %871 = vmatpush1.xpose.msra.mxu0 0.0
    %872 = vmatprep.subr.mxu0 0.0
    %873 = vmatpush1.xpose.msra.mxu0 0.0
    %874 = vmatprep.subr.mxu0 0.0
    %875 = vmatpush1.xpose.msra.mxu0 0.0
    %876 = vmatprep.subr.mxu0 0.0
    %877 = vmatpush1.xpose.msra.mxu0 0.0
    %878 = vmatprep.subr.mxu0 0.0
    %879 = vmatpush1.xpose.msra.mxu0 0.0
    %880 = vmatprep.subr.mxu0 0.0
    %881 = vmatpush1.xpose.msra.mxu0 0.0
    %882 = vmatprep.subr.mxu0 0.0
    %883 = vmatpush1.xpose.msra.mxu0 0.0
    %884 = vmatprep.subr.mxu0 0.0
    %885 = vmatpush1.xpose.msra.mxu0 0.0
    %886 = vmatprep.subr.mxu0 0.0
    %887 = vmatpush1.xpose.msra.mxu0 0.0
    %888 = vmatprep.subr.mxu0 0.0
    %889 = vmatpush1.xpose.msra.mxu0 0.0
    %890 = vmatprep.subr.mxu0 0.0
    %891 = vmatpush1.xpose.msra.mxu0 0.0
    %892 = vmatprep.subr.mxu0 0.0
    %893 = vmatpush1.xpose.msra.mxu0 0.0
    %894 = vmatprep.subr.mxu0 0.0
    %895 = vmatpush1.xpose.msra.mxu0 0.0
    %896 = vmatprep.subr.mxu0 0.0
    %897 = vmatpush1.xpose.msra.mxu0 0.0
    %898 = vmatprep.subr.mxu0 0.0
    %899 = vmatpush1.xpose.msra.mxu0 0.0
    %900 = vmatprep.subr.mxu0 0.0
    %901 = vmatpush1.xpose.msra.mxu0 0.0
    %902 = vmatprep.subr.mxu0 0.0
    %903 = vmatpush1.xpose.msra.mxu0 0.0
    %904 = vmatprep.subr.mxu0 0.0
    %905 = vmatpush1.xpose.msra.mxu0 0.0
    %906 = vmatprep.subr.mxu0 0.0
    %907 = vmatpush1.xpose.msra.mxu0 0.0
    %908 = vmatprep.mubr.f32.mxu0 0.0
    %909 = vmatmul.mubr.f32.gmra.mrb[0].mxu0 %v840
    %v910 = vpop.f32.mrb[0].mxu0
    %v911 = vadd.f32 0.0, %v910
    %v912 = vpop.f32.mrb[0].mxu0
    %913 = vdwg.mxu0
    %914 = vrot.lane.b32.xlu0 %v326, 120
    %v915 = vpop.permute.xlu0 %914
    %916 = vrot.lane.b32.xlu0 %v410, 120
    %v917 = vpop.permute.xlu0 %916
    %v918 = vsel %vm501, %v915, 0
    %v920 = vsel %vm501, %v917, 0
    %922 = vmatprep.subr.mxu0 0.0
    %923 = vmatpush1.xpose.msra.mxu0 %v920
    %924 = vmatprep.subr.mxu0 0.0
    %925 = vmatpush1.xpose.msra.mxu0 0.0
    %926 = vmatprep.subr.mxu0 0.0
    %927 = vmatpush1.xpose.msra.mxu0 0.0
    %928 = vmatprep.subr.mxu0 0.0
    %929 = vmatpush1.xpose.msra.mxu0 0.0
    %930 = vmatprep.subr.mxu0 0.0
    %931 = vmatpush1.xpose.msra.mxu0 0.0
    %932 = vmatprep.subr.mxu0 0.0
    %933 = vmatpush1.xpose.msra.mxu0 0.0
    %934 = vmatprep.subr.mxu0 0.0
    %935 = vmatpush1.xpose.msra.mxu0 0.0
    %936 = vmatprep.subr.mxu0 0.0
    %937 = vmatpush1.xpose.msra.mxu0 0.0
    %938 = vmatprep.subr.mxu0 0.0
    %939 = vmatpush1.xpose.msra.mxu0 0.0
    %940 = vmatprep.subr.mxu0 0.0
    %941 = vmatpush1.xpose.msra.mxu0 0.0
    %942 = vmatprep.subr.mxu0 0.0
    %943 = vmatpush1.xpose.msra.mxu0 0.0
    %944 = vmatprep.subr.mxu0 0.0
    %945 = vmatpush1.xpose.msra.mxu0 0.0
    %946 = vmatprep.subr.mxu0 0.0
    %947 = vmatpush1.xpose.msra.mxu0 0.0
    %948 = vmatprep.subr.mxu0 0.0
    %949 = vmatpush1.xpose.msra.mxu0 0.0
    %950 = vmatprep.subr.mxu0 0.0
    %951 = vmatpush1.xpose.msra.mxu0 0.0
    %952 = vmatprep.subr.mxu0 0.0
    %953 = vmatpush1.xpose.msra.mxu0 0.0
    %954 = vmatprep.subr.mxu0 0.0
    %955 = vmatpush1.xpose.msra.mxu0 0.0
    %956 = vmatprep.subr.mxu0 0.0
    %957 = vmatpush1.xpose.msra.mxu0 0.0
    %958 = vmatprep.subr.mxu0 0.0
    %959 = vmatpush1.xpose.msra.mxu0 0.0
    %960 = vmatprep.subr.mxu0 0.0
    %961 = vmatpush1.xpose.msra.mxu0 0.0
    %962 = vmatprep.subr.mxu0 0.0
    %963 = vmatpush1.xpose.msra.mxu0 0.0
    %964 = vmatprep.subr.mxu0 0.0
    %965 = vmatpush1.xpose.msra.mxu0 0.0
    %966 = vmatprep.subr.mxu0 0.0
    %967 = vmatpush1.xpose.msra.mxu0 0.0
    %968 = vmatprep.subr.mxu0 0.0
    %969 = vmatpush1.xpose.msra.mxu0 0.0
    %970 = vmatprep.subr.mxu0 0.0
    %971 = vmatpush1.xpose.msra.mxu0 0.0
    %972 = vmatprep.subr.mxu0 0.0
    %973 = vmatpush1.xpose.msra.mxu0 0.0
    %974 = vmatprep.subr.mxu0 0.0
    %975 = vmatpush1.xpose.msra.mxu0 0.0
    %976 = vmatprep.subr.mxu0 0.0
    %977 = vmatpush1.xpose.msra.mxu0 0.0
    %978 = vmatprep.subr.mxu0 0.0
    %979 = vmatpush1.xpose.msra.mxu0 0.0
    %980 = vmatprep.subr.mxu0 0.0
    %981 = vmatpush1.xpose.msra.mxu0 0.0
    %982 = vmatprep.subr.mxu0 0.0
    %983 = vmatpush1.xpose.msra.mxu0 0.0
    %984 = vmatprep.subr.mxu0 0.0
    %985 = vmatpush1.xpose.msra.mxu0 0.0
    %986 = vmatprep.mubr.f32.mxu0 0.0
    %987 = vmatmul.mubr.f32.gmra.mrb[0].mxu0 %v918
    %v988 = vpop.f32.mrb[0].mxu0
    %v989 = vadd.f32 0.0, %v988
    %v990 = vpop.f32.mrb[0].mxu0
    %991 = vdwg.mxu0
    %v992 = vmul.f32 %v911, 0.35355338
    %v993 = vmul.f32 %v989, 0.35355338
    %v994 = vadd.f32 %v992, %v659
    %v995 = vadd.f32 %v993, %v663
    %v996 = vsel %vm501, %v994, -inf
    %997 = vmax.xlane.f32.xlu0 %v996
    %v998 = vpop.xlane.xlu0 %997
    %v999 = vsel %vm501, %v995, -inf
    %1000 = vmax.xlane.f32.xlu0 %v999
    %v1001 = vpop.xlane.xlu0 %1000
    %v1002 = vsub.f32 %v994, %v998
    %v1003 = vsub.f32 %v995, %v1001
    %v1004 = vmul.f32 %v1002, 1.442695
    %v1005 = vpow.pop %v1004
    %v1006 = vmul.f32 %v1003, 1.442695
    %v1007 = vpow.pop %v1006
    %v1008 = vsel %vm501, %v1005, 0.0
    %1009 = vadd.xlane.f32.xlu0 %v1008
    %v1010 = vpop.xlane.xlu0 %1009
    %v1011 = vsel %vm501, %v1007, 0.0
    %1012 = vadd.xlane.f32.xlu0 %v1011
    %v1013 = vpop.xlane.xlu0 %1012
    %v1014 = vrcp.pop %v1010
    %v1015 = vrcp.pop %v1013
    %v1016 = vmul.f32 %v1005, %v1014
    %v1017 = vmul.f32 %v1007, %v1015
    %1019 = vrot.lane.b32.xlu0 %v489, 120
    %v1020 = vpop.permute.xlu0 %1019
    %v1023 = vsel %vm501, %v1016, 0
    %1025 = vmatprep.subr.mxu0 0.0
    %1026 = vmatpush1.msra.mxu0 %v1020
    %1027 = vmatprep.subr.mxu0 0.0
    %1028 = vmatpush1.msra.mxu0 0.0
    %1029 = vmatprep.subr.mxu0 0.0
    %1030 = vmatpush1.msra.mxu0 0.0
    %1031 = vmatprep.subr.mxu0 0.0
    %1032 = vmatpush1.msra.mxu0 0.0
    %1033 = vmatprep.subr.mxu0 0.0
    %1034 = vmatpush1.msra.mxu0 0.0
    %1035 = vmatprep.subr.mxu0 0.0
    %1036 = vmatpush1.msra.mxu0 0.0
    %1037 = vmatprep.subr.mxu0 0.0
    %1038 = vmatpush1.msra.mxu0 0.0
    %1039 = vmatprep.subr.mxu0 0.0
    %1040 = vmatpush1.msra.mxu0 0.0
    %1041 = vmatprep.subr.mxu0 0.0
    %1042 = vmatpush1.msra.mxu0 0.0
    %1043 = vmatprep.subr.mxu0 0.0
    %1044 = vmatpush1.msra.mxu0 0.0
    %1045 = vmatprep.subr.mxu0 0.0
    %1046 = vmatpush1.msra.mxu0 0.0
    %1047 = vmatprep.subr.mxu0 0.0
    %1048 = vmatpush1.msra.mxu0 0.0
    %1049 = vmatprep.subr.mxu0 0.0
    %1050 = vmatpush1.msra.mxu0 0.0
    %1051 = vmatprep.subr.mxu0 0.0
    %1052 = vmatpush1.msra.mxu0 0.0
    %1053 = vmatprep.subr.mxu0 0.0
    %1054 = vmatpush1.msra.mxu0 0.0
    %1055 = vmatprep.subr.mxu0 0.0
    %1056 = vmatpush1.msra.mxu0 0.0
    %1057 = vmatprep.subr.mxu0 0.0
    %1058 = vmatpush1.msra.mxu0 0.0
    %1059 = vmatprep.subr.mxu0 0.0
    %1060 = vmatpush1.msra.mxu0 0.0
    %1061 = vmatprep.subr.mxu0 0.0
    %1062 = vmatpush1.msra.mxu0 0.0
    %1063 = vmatprep.subr.mxu0 0.0
    %1064 = vmatpush1.msra.mxu0 0.0
    %1065 = vmatprep.subr.mxu0 0.0
    %1066 = vmatpush1.msra.mxu0 0.0
    %1067 = vmatprep.subr.mxu0 0.0
    %1068 = vmatpush1.msra.mxu0 0.0
    %1069 = vmatprep.subr.mxu0 0.0
    %1070 = vmatpush1.msra.mxu0 0.0
    %1071 = vmatprep.subr.mxu0 0.0
    %1072 = vmatpush1.msra.mxu0 0.0
    %1073 = vmatprep.subr.mxu0 0.0
    %1074 = vmatpush1.msra.mxu0 0.0
    %1075 = vmatprep.subr.mxu0 0.0
    %1076 = vmatpush1.msra.mxu0 0.0
    %1077 = vmatprep.subr.mxu0 0.0
    %1078 = vmatpush1.msra.mxu0 0.0
    %1079 = vmatprep.subr.mxu0 0.0
    %1080 = vmatpush1.msra.mxu0 0.0
    %1081 = vmatprep.subr.mxu0 0.0
    %1082 = vmatpush1.msra.mxu0 0.0
    %1083 = vmatprep.subr.mxu0 0.0
    %1084 = vmatpush1.msra.mxu0 0.0
    %1085 = vmatprep.subr.mxu0 0.0
    %1086 = vmatpush1.msra.mxu0 0.0
    %1087 = vmatprep.subr.mxu0 0.0
    %1088 = vmatpush1.msra.mxu0 0.0
    %1089 = vmatprep.mubr.f32.mxu0 0.0
    %1090 = vmatmul.mubr.f32.gmra.mrb[0].mxu0 %v1023
    %v1091 = vpop.f32.mrb[0].mxu0
    %v1092 = vadd.f32 0.0, %v1091
    %v1093 = vpop.f32.mrb[0].mxu0
    %1094 = vdwg.mxu0
    %1096 = vrot.lane.b32.xlu0 %v494, 120
    %v1097 = vpop.permute.xlu0 %1096
    %v1100 = vsel %vm501, %v1017, 0
    %1102 = vmatprep.subr.mxu0 0.0
    %1103 = vmatpush1.msra.mxu0 %v1097
    %1104 = vmatprep.subr.mxu0 0.0
    %1105 = vmatpush1.msra.mxu0 0.0
    %1106 = vmatprep.subr.mxu0 0.0
    %1107 = vmatpush1.msra.mxu0 0.0
    %1108 = vmatprep.subr.mxu0 0.0
    %1109 = vmatpush1.msra.mxu0 0.0
    %1110 = vmatprep.subr.mxu0 0.0
    %1111 = vmatpush1.msra.mxu0 0.0
    %1112 = vmatprep.subr.mxu0 0.0
    %1113 = vmatpush1.msra.mxu0 0.0
    %1114 = vmatprep.subr.mxu0 0.0
    %1115 = vmatpush1.msra.mxu0 0.0
    %1116 = vmatprep.subr.mxu0 0.0
    %1117 = vmatpush1.msra.mxu0 0.0
    %1118 = vmatprep.subr.mxu0 0.0
    %1119 = vmatpush1.msra.mxu0 0.0
    %1120 = vmatprep.subr.mxu0 0.0
    %1121 = vmatpush1.msra.mxu0 0.0
    %1122 = vmatprep.subr.mxu0 0.0
    %1123 = vmatpush1.msra.mxu0 0.0
    %1124 = vmatprep.subr.mxu0 0.0
    %1125 = vmatpush1.msra.mxu0 0.0
    %1126 = vmatprep.subr.mxu0 0.0
    %1127 = vmatpush1.msra.mxu0 0.0
    %1128 = vmatprep.subr.mxu0 0.0
    %1129 = vmatpush1.msra.mxu0 0.0
    %1130 = vmatprep.subr.mxu0 0.0
    %1131 = vmatpush1.msra.mxu0 0.0
    %1132 = vmatprep.subr.mxu0 0.0
    %1133 = vmatpush1.msra.mxu0 0.0
    %1134 = vmatprep.subr.mxu0 0.0
    %1135 = vmatpush1.msra.mxu0 0.0
    %1136 = vmatprep.subr.mxu0 0.0
    %1137 = vmatpush1.msra.mxu0 0.0
    %1138 = vmatprep.subr.mxu0 0.0
    %1139 = vmatpush1.msra.mxu0 0.0
    %1140 = vmatprep.subr.mxu0 0.0
    %1141 = vmatpush1.msra.mxu0 0.0
    %1142 = vmatprep.subr.mxu0 0.0
    %1143 = vmatpush1.msra.mxu0 0.0
    %1144 = vmatprep.subr.mxu0 0.0
    %1145 = vmatpush1.msra.mxu0 0.0
    %1146 = vmatprep.subr.mxu0 0.0
    %1147 = vmatpush1.msra.mxu0 0.0
    %1148 = vmatprep.subr.mxu0 0.0
    %1149 = vmatpush1.msra.mxu0 0.0
    %1150 = vmatprep.subr.mxu0 0.0
    %1151 = vmatpush1.msra.mxu0 0.0
    %1152 = vmatprep.subr.mxu0 0.0
    %1153 = vmatpush1.msra.mxu0 0.0
    %1154 = vmatprep.subr.mxu0 0.0
    %1155 = vmatpush1.msra.mxu0 0.0
    %1156 = vmatprep.subr.mxu0 0.0
    %1157 = vmatpush1.msra.mxu0 0.0
    %1158 = vmatprep.subr.mxu0 0.0
    %1159 = vmatpush1.msra.mxu0 0.0
    %1160 = vmatprep.subr.mxu0 0.0
    %1161 = vmatpush1.msra.mxu0 0.0
    %1162 = vmatprep.subr.mxu0 0.0
    %1163 = vmatpush1.msra.mxu0 0.0
    %1164 = vmatprep.subr.mxu0 0.0
    %1165 = vmatpush1.msra.mxu0 0.0
    %1166 = vmatprep.mubr.f32.mxu0 0.0
    %1167 = vmatmul.mubr.f32.gmra.mrb[0].mxu0 %v1100
    %v1168 = vpop.f32.mrb[0].mxu0
    %v1169 = vadd.f32 0.0, %v1168
    %v1170 = vpop.f32.mrb[0].mxu0
    %1171 = vdwg.mxu0
    %v1173 = vsel %vm501, %v1092, 0
    %v1176 = vsel %vm501, %v1169, 0
    %1178 = vmatprep.subr.mxu0 0.0
    %1179 = vmatpush1.msra.mxu0 %v498
    %1180 = vmatprep.subr.mxu0 0.0
    %1181 = vmatpush1.msra.mxu0 0.0
    %1182 = vmatprep.subr.mxu0 0.0
    %1183 = vmatpush1.msra.mxu0 0.0
    %1184 = vmatprep.subr.mxu0 0.0
    %1185 = vmatpush1.msra.mxu0 0.0
    %1186 = vmatprep.subr.mxu0 0.0
    %1187 = vmatpush1.msra.mxu0 0.0
    %1188 = vmatprep.subr.mxu0 0.0
    %1189 = vmatpush1.msra.mxu0 0.0
    %1190 = vmatprep.subr.mxu0 0.0
    %1191 = vmatpush1.msra.mxu0 0.0
    %1192 = vmatprep.subr.mxu0 0.0
    %1193 = vmatpush1.msra.mxu0 0.0
    %1194 = vmatprep.subr.mxu0 0.0
    %1195 = vmatpush1.msra.mxu0 0.0
    %1196 = vmatprep.subr.mxu0 0.0
    %1197 = vmatpush1.msra.mxu0 0.0
    %1198 = vmatprep.subr.mxu0 0.0
    %1199 = vmatpush1.msra.mxu0 0.0
    %1200 = vmatprep.subr.mxu0 0.0
    %1201 = vmatpush1.msra.mxu0 0.0
    %1202 = vmatprep.subr.mxu0 0.0
    %1203 = vmatpush1.msra.mxu0 0.0
    %1204 = vmatprep.subr.mxu0 0.0
    %1205 = vmatpush1.msra.mxu0 0.0
    %1206 = vmatprep.subr.mxu0 0.0
    %1207 = vmatpush1.msra.mxu0 0.0
    %1208 = vmatprep.subr.mxu0 0.0
    %1209 = vmatpush1.msra.mxu0 0.0
    %1210 = vmatprep.subr.mxu0 0.0
    %1211 = vmatpush1.msra.mxu0 0.0
    %1212 = vmatprep.subr.mxu0 0.0
    %1213 = vmatpush1.msra.mxu0 0.0
    %1214 = vmatprep.subr.mxu0 0.0
    %1215 = vmatpush1.msra.mxu0 0.0
    %1216 = vmatprep.subr.mxu0 0.0
    %1217 = vmatpush1.msra.mxu0 0.0
    %1218 = vmatprep.subr.mxu0 0.0
    %1219 = vmatpush1.msra.mxu0 0.0
    %1220 = vmatprep.subr.mxu0 0.0
    %1221 = vmatpush1.msra.mxu0 0.0
    %1222 = vmatprep.subr.mxu0 0.0
    %1223 = vmatpush1.msra.mxu0 0.0
    %1224 = vmatprep.subr.mxu0 0.0
    %1225 = vmatpush1.msra.mxu0 0.0
    %1226 = vmatprep.subr.mxu0 0.0
    %1227 = vmatpush1.msra.mxu0 0.0
    %1228 = vmatprep.subr.mxu0 0.0
    %1229 = vmatpush1.msra.mxu0 0.0
    %1230 = vmatprep.subr.mxu0 0.0
    %1231 = vmatpush1.msra.mxu0 0.0
    %1232 = vmatprep.subr.mxu0 0.0
    %1233 = vmatpush1.msra.mxu0 0.0
    %1234 = vmatprep.subr.mxu0 0.0
    %1235 = vmatpush1.msra.mxu0 0.0
    %1236 = vmatprep.subr.mxu0 0.0
    %1237 = vmatpush1.msra.mxu0 0.0
    %1238 = vmatprep.subr.mxu0 0.0
    %1239 = vmatpush1.msra.mxu0 0.0
    %1240 = vmatprep.subr.mxu0 0.0
    %1241 = vmatpush1.msra.mxu0 0.0
    %1242 = vmatprep.mubr.f32.mxu0 0.0
    %1243 = vmatmul.mubr.f32.gmra.mrb[0].mxu0 %v1173
    %v1244 = vpop.f32.mrb[0].mxu0
    %v1245 = vadd.f32 0.0, %v1244
    %v1246 = vpop.f32.mrb[0].mxu0
    %1247 = vmatprep.mubr.f32.mxu0 0.0
    %1248 = vmatmul.mubr.f32.gmra.mrb[0].mxu0 %v1176
    %v1249 = vpop.f32.mrb[0].mxu0
    %v1250 = vadd.f32 0.0, %v1249
    %v1251 = vpop.f32.mrb[0].mxu0
    %1252 = vdwg.mxu0
    %v1254 = vsel %vm501, %v760, 0
    %v1257 = vsel %vm501, %v833, 0
    %1259 = vmatprep.subr.mxu0 0.0
    %1260 = vmatpush1.msra.mxu0 %v497
    %1261 = vmatprep.subr.mxu0 0.0
    %1262 = vmatpush1.msra.mxu0 0.0
    %1263 = vmatprep.subr.mxu0 0.0
    %1264 = vmatpush1.msra.mxu0 0.0
    %1265 = vmatprep.subr.mxu0 0.0
    %1266 = vmatpush1.msra.mxu0 0.0
    %1267 = vmatprep.subr.mxu0 0.0
    %1268 = vmatpush1.msra.mxu0 0.0
    %1269 = vmatprep.subr.mxu0 0.0
    %1270 = vmatpush1.msra.mxu0 0.0
    %1271 = vmatprep.subr.mxu0 0.0
    %1272 = vmatpush1.msra.mxu0 0.0
    %1273 = vmatprep.subr.mxu0 0.0
    %1274 = vmatpush1.msra.mxu0 0.0
    %1275 = vmatprep.subr.mxu0 0.0
    %1276 = vmatpush1.msra.mxu0 0.0
    %1277 = vmatprep.subr.mxu0 0.0
    %1278 = vmatpush1.msra.mxu0 0.0
    %1279 = vmatprep.subr.mxu0 0.0
    %1280 = vmatpush1.msra.mxu0 0.0
    %1281 = vmatprep.subr.mxu0 0.0
    %1282 = vmatpush1.msra.mxu0 0.0
    %1283 = vmatprep.subr.mxu0 0.0
    %1284 = vmatpush1.msra.mxu0 0.0
    %1285 = vmatprep.subr.mxu0 0.0
    %1286 = vmatpush1.msra.mxu0 0.0
    %1287 = vmatprep.subr.mxu0 0.0
    %1288 = vmatpush1.msra.mxu0 0.0
    %1289 = vmatprep.subr.mxu0 0.0
    %1290 = vmatpush1.msra.mxu0 0.0
    %1291 = vmatprep.subr.mxu0 0.0
    %1292 = vmatpush1.msra.mxu0 0.0
    %1293 = vmatprep.subr.mxu0 0.0
    %1294 = vmatpush1.msra.mxu0 0.0
    %1295 = vmatprep.subr.mxu0 0.0
    %1296 = vmatpush1.msra.mxu0 0.0
    %1297 = vmatprep.subr.mxu0 0.0
    %1298 = vmatpush1.msra.mxu0 0.0
    %1299 = vmatprep.subr.mxu0 0.0
    %1300 = vmatpush1.msra.mxu0 0.0
    %1301 = vmatprep.subr.mxu0 0.0
    %1302 = vmatpush1.msra.mxu0 0.0
    %1303 = vmatprep.subr.mxu0 0.0
    %1304 = vmatpush1.msra.mxu0 0.0
    %1305 = vmatprep.subr.mxu0 0.0
    %1306 = vmatpush1.msra.mxu0 0.0
    %1307 = vmatprep.subr.mxu0 0.0
    %1308 = vmatpush1.msra.mxu0 0.0
    %1309 = vmatprep.subr.mxu0 0.0
    %1310 = vmatpush1.msra.mxu0 0.0
    %1311 = vmatprep.subr.mxu0 0.0
    %1312 = vmatpush1.msra.mxu0 0.0
    %1313 = vmatprep.subr.mxu0 0.0
    %1314 = vmatpush1.msra.mxu0 0.0
    %1315 = vmatprep.subr.mxu0 0.0
    %1316 = vmatpush1.msra.mxu0 0.0
    %1317 = vmatprep.subr.mxu0 0.0
    %1318 = vmatpush1.msra.mxu0 0.0
    %1319 = vmatprep.subr.mxu0 0.0
    %1320 = vmatpush1.msra.mxu0 0.0
    %1321 = vmatprep.subr.mxu0 0.0
    %1322 = vmatpush1.msra.mxu0 0.0
    %1323 = vmatprep.mubr.f32.mxu0 0.0
    %1324 = vmatmul.mubr.f32.gmra.mrb[0].mxu0 %v1254
    %v1325 = vpop.f32.mrb[0].mxu0
    %v1326 = vadd.f32 %v1245, %v1325
    %v1327 = vpop.f32.mrb[0].mxu0
    %1328 = vmatprep.mubr.f32.mxu0 0.0
    %1329 = vmatmul.mubr.f32.gmra.mrb[0].mxu0 %v1257
    %v1330 = vpop.f32.mrb[0].mxu0
    %v1331 = vadd.f32 %v1250, %v1330
    %v1332 = vpop.f32.mrb[0].mxu0
    %1333 = vdwg.mxu0
    %1334 = vrot.lane.b32.xlu0 %v321, 112
    %v1335 = vpop.permute.xlu0 %1334
    %1336 = vrot.lane.b32.xlu0 %v405, 112
    %v1337 = vpop.permute.xlu0 %1336
    %v1338 = vsel %vm501, %v1335, 0
    %v1340 = vsel %vm501, %v1337, 0
    %1342 = vmatprep.subr.mxu0 0.0
    %1343 = vmatpush1.xpose.msra.mxu0 %v1340
    %1344 = vmatprep.subr.mxu0 0.0
    %1345 = vmatpush1.xpose.msra.mxu0 0.0
    %1346 = vmatprep.subr.mxu0 0.0
    %1347 = vmatpush1.xpose.msra.mxu0 0.0
    %1348 = vmatprep.subr.mxu0 0.0
    %1349 = vmatpush1.xpose.msra.mxu0 0.0
    %1350 = vmatprep.subr.mxu0 0.0
    %1351 = vmatpush1.xpose.msra.mxu0 0.0
    %1352 = vmatprep.subr.mxu0 0.0
    %1353 = vmatpush1.xpose.msra.mxu0 0.0
    %1354 = vmatprep.subr.mxu0 0.0
    %1355 = vmatpush1.xpose.msra.mxu0 0.0
    %1356 = vmatprep.subr.mxu0 0.0
    %1357 = vmatpush1.xpose.msra.mxu0 0.0
    %1358 = vmatprep.subr.mxu0 0.0
    %1359 = vmatpush1.xpose.msra.mxu0 0.0
    %1360 = vmatprep.subr.mxu0 0.0
    %1361 = vmatpush1.xpose.msra.mxu0 0.0
    %1362 = vmatprep.subr.mxu0 0.0
    %1363 = vmatpush1.xpose.msra.mxu0 0.0
    %1364 = vmatprep.subr.mxu0 0.0
    %1365 = vmatpush1.xpose.msra.mxu0 0.0
    %1366 = vmatprep.subr.mxu0 0.0
    %1367 = vmatpush1.xpose.msra.mxu0 0.0
    %1368 = vmatprep.subr.mxu0 0.0
    %1369 = vmatpush1.xpose.msra.mxu0 0.0
    %1370 = vmatprep.subr.mxu0 0.0
    %1371 = vmatpush1.xpose.msra.mxu0 0.0
    %1372 = vmatprep.subr.mxu0 0.0
    %1373 = vmatpush1.xpose.msra.mxu0 0.0
    %1374 = vmatprep.subr.mxu0 0.0
    %1375 = vmatpush1.xpose.msra.mxu0 0.0
    %1376 = vmatprep.subr.mxu0 0.0
    %1377 = vmatpush1.xpose.msra.mxu0 0.0
    %1378 = vmatprep.subr.mxu0 0.0
    %1379 = vmatpush1.xpose.msra.mxu0 0.0
    %1380 = vmatprep.subr.mxu0 0.0
    %1381 = vmatpush1.xpose.msra.mxu0 0.0
    %1382 = vmatprep.subr.mxu0 0.0
    %1383 = vmatpush1.xpose.msra.mxu0 0.0
    %1384 = vmatprep.subr.mxu0 0.0
    %1385 = vmatpush1.xpose.msra.mxu0 0.0
    %1386 = vmatprep.subr.mxu0 0.0
    %1387 = vmatpush1.xpose.msra.mxu0 0.0
    %1388 = vmatprep.subr.mxu0 0.0
    %1389 = vmatpush1.xpose.msra.mxu0 0.0
    %1390 = vmatprep.subr.mxu0 0.0
    %1391 = vmatpush1.xpose.msra.mxu0 0.0
    %1392 = vmatprep.subr.mxu0 0.0
    %1393 = vmatpush1.xpose.msra.mxu0 0.0
    %1394 = vmatprep.subr.mxu0 0.0
    %1395 = vmatpush1.xpose.msra.mxu0 0.0
    %1396 = vmatprep.subr.mxu0 0.0
    %1397 = vmatpush1.xpose.msra.mxu0 0.0
    %1398 = vmatprep.subr.mxu0 0.0
    %1399 = vmatpush1.xpose.msra.mxu0 0.0
    %1400 = vmatprep.subr.mxu0 0.0
    %1401 = vmatpush1.xpose.msra.mxu0 0.0
    %1402 = vmatprep.subr.mxu0 0.0
    %1403 = vmatpush1.xpose.msra.mxu0 0.0
    %1404 = vmatprep.subr.mxu0 0.0
    %1405 = vmatpush1.xpose.msra.mxu0 0.0
    %1406 = vmatprep.mubr.f32.mxu0 0.0
    %1407 = vmatmul.mubr.f32.gmra.mrb[0].mxu0 %v1338
    %v1408 = vpop.f32.mrb[0].mxu0
    %v1409 = vadd.f32 0.0, %v1408
    %v1410 = vpop.f32.mrb[0].mxu0
    %1411 = vdwg.mxu0
    %1412 = vrot.lane.b32.xlu0 %v326, 112
    %v1413 = vpop.permute.xlu0 %1412
    %1414 = vrot.lane.b32.xlu0 %v410, 112
    %v1415 = vpop.permute.xlu0 %1414
    %v1416 = vsel %vm501, %v1413, 0
    %v1418 = vsel %vm501, %v1415, 0
    %1420 = vmatprep.subr.mxu0 0.0
    %1421 = vmatpush1.xpose.msra.mxu0 %v1418
    %1422 = vmatprep.subr.mxu0 0.0
    %1423 = vmatpush1.xpose.msra.mxu0 0.0
    %1424 = vmatprep.subr.mxu0 0.0
    %1425 = vmatpush1.xpose.msra.mxu0 0.0
    %1426 = vmatprep.subr.mxu0 0.0
    %1427 = vmatpush1.xpose.msra.mxu0 0.0
    %1428 = vmatprep.subr.mxu0 0.0
    %1429 = vmatpush1.xpose.msra.mxu0 0.0
    %1430 = vmatprep.subr.mxu0 0.0
    %1431 = vmatpush1.xpose.msra.mxu0 0.0
    %1432 = vmatprep.subr.mxu0 0.0
    %1433 = vmatpush1.xpose.msra.mxu0 0.0
    %1434 = vmatprep.subr.mxu0 0.0
    %1435 = vmatpush1.xpose.msra.mxu0 0.0
    %1436 = vmatprep.subr.mxu0 0.0
    %1437 = vmatpush1.xpose.msra.mxu0 0.0
    %1438 = vmatprep.subr.mxu0 0.0
    %1439 = vmatpush1.xpose.msra.mxu0 0.0
    %1440 = vmatprep.subr.mxu0 0.0
    %1441 = vmatpush1.xpose.msra.mxu0 0.0
    %1442 = vmatprep.subr.mxu0 0.0
    %1443 = vmatpush1.xpose.msra.mxu0 0.0
    %1444 = vmatprep.subr.mxu0 0.0
    %1445 = vmatpush1.xpose.msra.mxu0 0.0
    %1446 = vmatprep.subr.mxu0 0.0
    %1447 = vmatpush1.xpose.msra.mxu0 0.0
    %1448 = vmatprep.subr.mxu0 0.0
    %1449 = vmatpush1.xpose.msra.mxu0 0.0
    %1450 = vmatprep.subr.mxu0 0.0
    %1451 = vmatpush1.xpose.msra.mxu0 0.0
    %1452 = vmatprep.subr.mxu0 0.0
    %1453 = vmatpush1.xpose.msra.mxu0 0.0
    %1454 = vmatprep.subr.mxu0 0.0
    %1455 = vmatpush1.xpose.msra.mxu0 0.0
    %1456 = vmatprep.subr.mxu0 0.0
    %1457 = vmatpush1.xpose.msra.mxu0 0.0
    %1458 = vmatprep.subr.mxu0 0.0
    %1459 = vmatpush1.xpose.msra.mxu0 0.0
    %1460 = vmatprep.subr.mxu0 0.0
    %1461 = vmatpush1.xpose.msra.mxu0 0.0
    %1462 = vmatprep.subr.mxu0 0.0
    %1463 = vmatpush1.xpose.msra.mxu0 0.0
    %1464 = vmatprep.subr.mxu0 0.0
    %1465 = vmatpush1.xpose.msra.mxu0 0.0
    %1466 = vmatprep.subr.mxu0 0.0
    %1467 = vmatpush1.xpose.msra.mxu0 0.0
    %1468 = vmatprep.subr.mxu0 0.0
    %1469 = vmatpush1.xpose.msra.mxu0 0.0
    %1470 = vmatprep.subr.mxu0 0.0
    %1471 = vmatpush1.xpose.msra.mxu0 0.0
    %1472 = vmatprep.subr.mxu0 0.0
    %1473 = vmatpush1.xpose.msra.mxu0 0.0
    %1474 = vmatprep.subr.mxu0 0.0
    %1475 = vmatpush1.xpose.msra.mxu0 0.0
    %1476 = vmatprep.subr.mxu0 0.0
    %1477 = vmatpush1.xpose.msra.mxu0 0.0
    %1478 = vmatprep.subr.mxu0 0.0
    %1479 = vmatpush1.xpose.msra.mxu0 0.0
    %1480 = vmatprep.subr.mxu0 0.0
    %1481 = vmatpush1.xpose.msra.mxu0 0.0
    %1482 = vmatprep.subr.mxu0 0.0
    %1483 = vmatpush1.xpose.msra.mxu0 0.0
    %1484 = vmatprep.mubr.f32.mxu0 0.0
    %1485 = vmatmul.mubr.f32.gmra.mrb[0].mxu0 %v1416
    %v1486 = vpop.f32.mrb[0].mxu0
    %v1487 = vadd.f32 0.0, %v1486
    %v1488 = vpop.f32.mrb[0].mxu0
    %1489 = vdwg.mxu0
    %v1490 = vmul.f32 %v1409, 0.35355338
    %v1491 = vmul.f32 %v1487, 0.35355338
    %v1492 = vadd.f32 %v1490, %v659
    %v1493 = vadd.f32 %v1491, %v663
    %v1494 = vsel %vm501, %v1492, -inf
    %1495 = vmax.xlane.f32.xlu0 %v1494
    %v1496 = vpop.xlane.xlu0 %1495
    %v1497 = vsel %vm501, %v1493, -inf
    %1498 = vmax.xlane.f32.xlu0 %v1497
    %v1499 = vpop.xlane.xlu0 %1498
    %v1500 = vsub.f32 %v1492, %v1496
    %v1501 = vsub.f32 %v1493, %v1499
    %v1502 = vmul.f32 %v1500, 1.442695
    %v1503 = vpow.pop %v1502
    %v1504 = vmul.f32 %v1501, 1.442695
    %v1505 = vpow.pop %v1504
    %v1506 = vsel %vm501, %v1503, 0.0
    %1507 = vadd.xlane.f32.xlu0 %v1506
    %v1508 = vpop.xlane.xlu0 %1507
    %v1509 = vsel %vm501, %v1505, 0.0
    %1510 = vadd.xlane.f32.xlu0 %v1509
    %v1511 = vpop.xlane.xlu0 %1510
    %v1512 = vrcp.pop %v1508
    %v1513 = vrcp.pop %v1511
    %v1514 = vmul.f32 %v1503, %v1512
    %v1515 = vmul.f32 %v1505, %v1513
    %1516 = vrot.lane.b32.xlu0 %v489, 112
    %v1517 = vpop.permute.xlu0 %1516
    %v1520 = vsel %vm501, %v1514, 0
    %1522 = vmatprep.subr.mxu0 0.0
    %1523 = vmatpush1.msra.mxu0 %v1517
    %1524 = vmatprep.subr.mxu0 0.0
    %1525 = vmatpush1.msra.mxu0 0.0
    %1526 = vmatprep.subr.mxu0 0.0
    %1527 = vmatpush1.msra.mxu0 0.0
    %1528 = vmatprep.subr.mxu0 0.0
    %1529 = vmatpush1.msra.mxu0 0.0
    %1530 = vmatprep.subr.mxu0 0.0
    %1531 = vmatpush1.msra.mxu0 0.0
    %1532 = vmatprep.subr.mxu0 0.0
    %1533 = vmatpush1.msra.mxu0 0.0
    %1534 = vmatprep.subr.mxu0 0.0
    %1535 = vmatpush1.msra.mxu0 0.0
    %1536 = vmatprep.subr.mxu0 0.0
    %1537 = vmatpush1.msra.mxu0 0.0
    %1538 = vmatprep.subr.mxu0 0.0
    %1539 = vmatpush1.msra.mxu0 0.0
    %1540 = vmatprep.subr.mxu0 0.0
    %1541 = vmatpush1.msra.mxu0 0.0
    %1542 = vmatprep.subr.mxu0 0.0
    %1543 = vmatpush1.msra.mxu0 0.0
    %1544 = vmatprep.subr.mxu0 0.0
    %1545 = vmatpush1.msra.mxu0 0.0
    %1546 = vmatprep.subr.mxu0 0.0
    %1547 = vmatpush1.msra.mxu0 0.0
    %1548 = vmatprep.subr.mxu0 0.0
    %1549 = vmatpush1.msra.mxu0 0.0
    %1550 = vmatprep.subr.mxu0 0.0
    %1551 = vmatpush1.msra.mxu0 0.0
    %1552 = vmatprep.subr.mxu0 0.0
    %1553 = vmatpush1.msra.mxu0 0.0
    %1554 = vmatprep.subr.mxu0 0.0
    %1555 = vmatpush1.msra.mxu0 0.0
    %1556 = vmatprep.subr.mxu0 0.0
    %1557 = vmatpush1.msra.mxu0 0.0
    %1558 = vmatprep.subr.mxu0 0.0
    %1559 = vmatpush1.msra.mxu0 0.0
    %1560 = vmatprep.subr.mxu0 0.0
    %1561 = vmatpush1.msra.mxu0 0.0
    %1562 = vmatprep.subr.mxu0 0.0
    %1563 = vmatpush1.msra.mxu0 0.0
    %1564 = vmatprep.subr.mxu0 0.0
    %1565 = vmatpush1.msra.mxu0 0.0
    %1566 = vmatprep.subr.mxu0 0.0
    %1567 = vmatpush1.msra.mxu0 0.0
    %1568 = vmatprep.subr.mxu0 0.0
    %1569 = vmatpush1.msra.mxu0 0.0
    %1570 = vmatprep.subr.mxu0 0.0
    %1571 = vmatpush1.msra.mxu0 0.0
    %1572 = vmatprep.subr.mxu0 0.0
    %1573 = vmatpush1.msra.mxu0 0.0
    %1574 = vmatprep.subr.mxu0 0.0
    %1575 = vmatpush1.msra.mxu0 0.0
    %1576 = vmatprep.subr.mxu0 0.0
    %1577 = vmatpush1.msra.mxu0 0.0
    %1578 = vmatprep.subr.mxu0 0.0
    %1579 = vmatpush1.msra.mxu0 0.0
    %1580 = vmatprep.subr.mxu0 0.0
    %1581 = vmatpush1.msra.mxu0 0.0
    %1582 = vmatprep.subr.mxu0 0.0
    %1583 = vmatpush1.msra.mxu0 0.0
    %1584 = vmatprep.subr.mxu0 0.0
    %1585 = vmatpush1.msra.mxu0 0.0
    %1586 = vmatprep.mubr.f32.mxu0 0.0
    %1587 = vmatmul.mubr.f32.gmra.mrb[0].mxu0 %v1520
    %v1588 = vpop.f32.mrb[0].mxu0
    %v1589 = vadd.f32 0.0, %v1588
    %v1590 = vpop.f32.mrb[0].mxu0
    %1591 = vdwg.mxu0
    %1592 = vrot.lane.b32.xlu0 %v494, 112
    %v1593 = vpop.permute.xlu0 %1592
    %v1596 = vsel %vm501, %v1515, 0
    %1598 = vmatprep.subr.mxu0 0.0
    %1599 = vmatpush1.msra.mxu0 %v1593
    %1600 = vmatprep.subr.mxu0 0.0
    %1601 = vmatpush1.msra.mxu0 0.0
    %1602 = vmatprep.subr.mxu0 0.0
    %1603 = vmatpush1.msra.mxu0 0.0
    %1604 = vmatprep.subr.mxu0 0.0
    %1605 = vmatpush1.msra.mxu0 0.0
    %1606 = vmatprep.subr.mxu0 0.0
    %1607 = vmatpush1.msra.mxu0 0.0
    %1608 = vmatprep.subr.mxu0 0.0
    %1609 = vmatpush1.msra.mxu0 0.0
    %1610 = vmatprep.subr.mxu0 0.0
    %1611 = vmatpush1.msra.mxu0 0.0
    %1612 = vmatprep.subr.mxu0 0.0
    %1613 = vmatpush1.msra.mxu0 0.0
    %1614 = vmatprep.subr.mxu0 0.0
    %1615 = vmatpush1.msra.mxu0 0.0
    %1616 = vmatprep.subr.mxu0 0.0
    %1617 = vmatpush1.msra.mxu0 0.0
    %1618 = vmatprep.subr.mxu0 0.0
    %1619 = vmatpush1.msra.mxu0 0.0
    %1620 = vmatprep.subr.mxu0 0.0
    %1621 = vmatpush1.msra.mxu0 0.0
    %1622 = vmatprep.subr.mxu0 0.0
    %1623 = vmatpush1.msra.mxu0 0.0
    %1624 = vmatprep.subr.mxu0 0.0
    %1625 = vmatpush1.msra.mxu0 0.0
    %1626 = vmatprep.subr.mxu0 0.0
    %1627 = vmatpush1.msra.mxu0 0.0
    %1628 = vmatprep.subr.mxu0 0.0
    %1629 = vmatpush1.msra.mxu0 0.0
    %1630 = vmatprep.subr.mxu0 0.0
    %1631 = vmatpush1.msra.mxu0 0.0
    %1632 = vmatprep.subr.mxu0 0.0
    %1633 = vmatpush1.msra.mxu0 0.0
    %1634 = vmatprep.subr.mxu0 0.0
    %1635 = vmatpush1.msra.mxu0 0.0
    %1636 = vmatprep.subr.mxu0 0.0
    %1637 = vmatpush1.msra.mxu0 0.0
    %1638 = vmatprep.subr.mxu0 0.0
    %1639 = vmatpush1.msra.mxu0 0.0
    %1640 = vmatprep.subr.mxu0 0.0
    %1641 = vmatpush1.msra.mxu0 0.0
    %1642 = vmatprep.subr.mxu0 0.0
    %1643 = vmatpush1.msra.mxu0 0.0
    %1644 = vmatprep.subr.mxu0 0.0
    %1645 = vmatpush1.msra.mxu0 0.0
    %1646 = vmatprep.subr.mxu0 0.0
    %1647 = vmatpush1.msra.mxu0 0.0
    %1648 = vmatprep.subr.mxu0 0.0
    %1649 = vmatpush1.msra.mxu0 0.0
    %1650 = vmatprep.subr.mxu0 0.0
    %1651 = vmatpush1.msra.mxu0 0.0
    %1652 = vmatprep.subr.mxu0 0.0
    %1653 = vmatpush1.msra.mxu0 0.0
    %1654 = vmatprep.subr.mxu0 0.0
    %1655 = vmatpush1.msra.mxu0 0.0
    %1656 = vmatprep.subr.mxu0 0.0
    %1657 = vmatpush1.msra.mxu0 0.0
    %1658 = vmatprep.subr.mxu0 0.0
    %1659 = vmatpush1.msra.mxu0 0.0
    %1660 = vmatprep.subr.mxu0 0.0
    %1661 = vmatpush1.msra.mxu0 0.0
    %1662 = vmatprep.mubr.f32.mxu0 0.0
    %1663 = vmatmul.mubr.f32.gmra.mrb[0].mxu0 %v1596
    %v1664 = vpop.f32.mrb[0].mxu0
    %v1665 = vadd.f32 0.0, %v1664
    %v1666 = vpop.f32.mrb[0].mxu0
    %1667 = vdwg.mxu0
    %v1669 = vsel %vm501, %v1589, 0
    %v1672 = vsel %vm501, %v1665, 0
    %1674 = vmatprep.subr.mxu0 0.0
    %1675 = vmatpush1.msra.mxu0 %v499
    %1676 = vmatprep.subr.mxu0 0.0
    %1677 = vmatpush1.msra.mxu0 0.0
    %1678 = vmatprep.subr.mxu0 0.0
    %1679 = vmatpush1.msra.mxu0 0.0
    %1680 = vmatprep.subr.mxu0 0.0
    %1681 = vmatpush1.msra.mxu0 0.0
    %1682 = vmatprep.subr.mxu0 0.0
    %1683 = vmatpush1.msra.mxu0 0.0
    %1684 = vmatprep.subr.mxu0 0.0
    %1685 = vmatpush1.msra.mxu0 0.0
    %1686 = vmatprep.subr.mxu0 0.0
    %1687 = vmatpush1.msra.mxu0 0.0
    %1688 = vmatprep.subr.mxu0 0.0
    %1689 = vmatpush1.msra.mxu0 0.0
    %1690 = vmatprep.subr.mxu0 0.0
    %1691 = vmatpush1.msra.mxu0 0.0
    %1692 = vmatprep.subr.mxu0 0.0
    %1693 = vmatpush1.msra.mxu0 0.0
    %1694 = vmatprep.subr.mxu0 0.0
    %1695 = vmatpush1.msra.mxu0 0.0
    %1696 = vmatprep.subr.mxu0 0.0
    %1697 = vmatpush1.msra.mxu0 0.0
    %1698 = vmatprep.subr.mxu0 0.0
    %1699 = vmatpush1.msra.mxu0 0.0
    %1700 = vmatprep.subr.mxu0 0.0
    %1701 = vmatpush1.msra.mxu0 0.0
    %1702 = vmatprep.subr.mxu0 0.0
    %1703 = vmatpush1.msra.mxu0 0.0
    %1704 = vmatprep.subr.mxu0 0.0
    %1705 = vmatpush1.msra.mxu0 0.0
    %1706 = vmatprep.subr.mxu0 0.0
    %1707 = vmatpush1.msra.mxu0 0.0
    %1708 = vmatprep.subr.mxu0 0.0
    %1709 = vmatpush1.msra.mxu0 0.0
    %1710 = vmatprep.subr.mxu0 0.0
    %1711 = vmatpush1.msra.mxu0 0.0
    %1712 = vmatprep.subr.mxu0 0.0
    %1713 = vmatpush1.msra.mxu0 0.0
    %1714 = vmatprep.subr.mxu0 0.0
    %1715 = vmatpush1.msra.mxu0 0.0
    %1716 = vmatprep.subr.mxu0 0.0
    %1717 = vmatpush1.msra.mxu0 0.0
    %1718 = vmatprep.subr.mxu0 0.0
    %1719 = vmatpush1.msra.mxu0 0.0
    %1720 = vmatprep.subr.mxu0 0.0
    %1721 = vmatpush1.msra.mxu0 0.0
    %1722 = vmatprep.subr.mxu0 0.0
    %1723 = vmatpush1.msra.mxu0 0.0
    %1724 = vmatprep.subr.mxu0 0.0
    %1725 = vmatpush1.msra.mxu0 0.0
    %1726 = vmatprep.subr.mxu0 0.0
    %1727 = vmatpush1.msra.mxu0 0.0
    %1728 = vmatprep.subr.mxu0 0.0
    %1729 = vmatpush1.msra.mxu0 0.0
    %1730 = vmatprep.subr.mxu0 0.0
    %1731 = vmatpush1.msra.mxu0 0.0
    %1732 = vmatprep.subr.mxu0 0.0
    %1733 = vmatpush1.msra.mxu0 0.0
    %1734 = vmatprep.subr.mxu0 0.0
    %1735 = vmatpush1.msra.mxu0 0.0
    %1736 = vmatprep.subr.mxu0 0.0
    %1737 = vmatpush1.msra.mxu0 0.0
    %1738 = vmatprep.mubr.f32.mxu0 0.0
    %1739 = vmatmul.mubr.f32.gmra.mrb[0].mxu0 %v1669
    %v1740 = vpop.f32.mrb[0].mxu0
    %v1741 = vadd.f32 0.0, %v1740
    %v1742 = vpop.f32.mrb[0].mxu0
    %1743 = vmatprep.mubr.f32.mxu0 0.0
    %1744 = vmatmul.mubr.f32.gmra.mrb[0].mxu0 %v1672
    %v1745 = vpop.f32.mrb[0].mxu0
    %v1746 = vadd.f32 0.0, %v1745
    %v1747 = vpop.f32.mrb[0].mxu0
    %1748 = vdwg.mxu0
    %v1749 = vadd.f32 %v1326, %v1741
    %v1750 = vadd.f32 %v1331, %v1746
    %1751 = vrot.lane.b32.xlu0 %v321, 104
    %v1752 = vpop.permute.xlu0 %1751
    %1753 = vrot.lane.b32.xlu0 %v405, 104
    %v1754 = vpop.permute.xlu0 %1753
    %v1755 = vsel %vm501, %v1752, 0
    %v1757 = vsel %vm501, %v1754, 0
    %1759 = vmatprep.subr.mxu0 0.0
    %1760 = vmatpush1.xpose.msra.mxu0 %v1757
    %1761 = vmatprep.subr.mxu0 0.0
    %1762 = vmatpush1.xpose.msra.mxu0 0.0
    %1763 = vmatprep.subr.mxu0 0.0
    %1764 = vmatpush1.xpose.msra.mxu0 0.0
    %1765 = vmatprep.subr.mxu0 0.0
    %1766 = vmatpush1.xpose.msra.mxu0 0.0
    %1767 = vmatprep.subr.mxu0 0.0
    %1768 = vmatpush1.xpose.msra.mxu0 0.0
    %1769 = vmatprep.subr.mxu0 0.0
    %1770 = vmatpush1.xpose.msra.mxu0 0.0
    %1771 = vmatprep.subr.mxu0 0.0
    %1772 = vmatpush1.xpose.msra.mxu0 0.0
    %1773 = vmatprep.subr.mxu0 0.0
    %1774 = vmatpush1.xpose.msra.mxu0 0.0
    %1775 = vmatprep.subr.mxu0 0.0
    %1776 = vmatpush1.xpose.msra.mxu0 0.0
    %1777 = vmatprep.subr.mxu0 0.0
    %1778 = vmatpush1.xpose.msra.mxu0 0.0
    %1779 = vmatprep.subr.mxu0 0.0
    %1780 = vmatpush1.xpose.msra.mxu0 0.0
    %1781 = vmatprep.subr.mxu0 0.0
    %1782 = vmatpush1.xpose.msra.mxu0 0.0
    %1783 = vmatprep.subr.mxu0 0.0
    %1784 = vmatpush1.xpose.msra.mxu0 0.0
    %1785 = vmatprep.subr.mxu0 0.0
    %1786 = vmatpush1.xpose.msra.mxu0 0.0
    %1787 = vmatprep.subr.mxu0 0.0
    %1788 = vmatpush1.xpose.msra.mxu0 0.0
    %1789 = vmatprep.subr.mxu0 0.0
    %1790 = vmatpush1.xpose.msra.mxu0 0.0
    %1791 = vmatprep.subr.mxu0 0.0
    %1792 = vmatpush1.xpose.msra.mxu0 0.0
    %1793 = vmatprep.subr.mxu0 0.0
    %1794 = vmatpush1.xpose.msra.mxu0 0.0
    %1795 = vmatprep.subr.mxu0 0.0
    %1796 = vmatpush1.xpose.msra.mxu0 0.0
    %1797 = vmatprep.subr.mxu0 0.0
    %1798 = vmatpush1.xpose.msra.mxu0 0.0
    %1799 = vmatprep.subr.mxu0 0.0
    %1800 = vmatpush1.xpose.msra.mxu0 0.0
    %1801 = vmatprep.subr.mxu0 0.0
    %1802 = vmatpush1.xpose.msra.mxu0 0.0
    %1803 = vmatprep.subr.mxu0 0.0
    %1804 = vmatpush1.xpose.msra.mxu0 0.0
    %1805 = vmatprep.subr.mxu0 0.0
    %1806 = vmatpush1.xpose.msra.mxu0 0.0
    %1807 = vmatprep.subr.mxu0 0.0
    %1808 = vmatpush1.xpose.msra.mxu0 0.0
    %1809 = vmatprep.subr.mxu0 0.0
    %1810 = vmatpush1.xpose.msra.mxu0 0.0
    %1811 = vmatprep.subr.mxu0 0.0
    %1812 = vmatpush1.xpose.msra.mxu0 0.0
    %1813 = vmatprep.subr.mxu0 0.0
    %1814 = vmatpush1.xpose.msra.mxu0 0.0
    %1815 = vmatprep.subr.mxu0 0.0
    %1816 = vmatpush1.xpose.msra.mxu0 0.0
    %1817 = vmatprep.subr.mxu0 0.0
    %1818 = vmatpush1.xpose.msra.mxu0 0.0
    %1819 = vmatprep.subr.mxu0 0.0
    %1820 = vmatpush1.xpose.msra.mxu0 0.0
    %1821 = vmatprep.subr.mxu0 0.0
    %1822 = vmatpush1.xpose.msra.mxu0 0.0
    %1823 = vmatprep.mubr.f32.mxu0 0.0
    %1824 = vmatmul.mubr.f32.gmra.mrb[0].mxu0 %v1755
    %v1825 = vpop.f32.mrb[0].mxu0
    %v1826 = vadd.f32 0.0, %v1825
    %v1827 = vpop.f32.mrb[0].mxu0
    %1828 = vdwg.mxu0
    %1829 = vrot.lane.b32.xlu0 %v326, 104
    %v1830 = vpop.permute.xlu0 %1829
    %1831 = vrot.lane.b32.xlu0 %v410, 104
    %v1832 = vpop.permute.xlu0 %1831
    %v1833 = vsel %vm501, %v1830, 0
    %v1835 = vsel %vm501, %v1832, 0
    %1837 = vmatprep.subr.mxu0 0.0
    %1838 = vmatpush1.xpose.msra.mxu0 %v1835
    %1839 = vmatprep.subr.mxu0 0.0
    %1840 = vmatpush1.xpose.msra.mxu0 0.0
    %1841 = vmatprep.subr.mxu0 0.0
    %1842 = vmatpush1.xpose.msra.mxu0 0.0
    %1843 = vmatprep.subr.mxu0 0.0
    %1844 = vmatpush1.xpose.msra.mxu0 0.0
    %1845 = vmatprep.subr.mxu0 0.0
    %1846 = vmatpush1.xpose.msra.mxu0 0.0
    %1847 = vmatprep.subr.mxu0 0.0
    %1848 = vmatpush1.xpose.msra.mxu0 0.0
    %1849 = vmatprep.subr.mxu0 0.0
    %1850 = vmatpush1.xpose.msra.mxu0 0.0
    %1851 = vmatprep.subr.mxu0 0.0
    %1852 = vmatpush1.xpose.msra.mxu0 0.0
    %1853 = vmatprep.subr.mxu0 0.0
    %1854 = vmatpush1.xpose.msra.mxu0 0.0
    %1855 = vmatprep.subr.mxu0 0.0
    %1856 = vmatpush1.xpose.msra.mxu0 0.0
    %1857 = vmatprep.subr.mxu0 0.0
    %1858 = vmatpush1.xpose.msra.mxu0 0.0
    %1859 = vmatprep.subr.mxu0 0.0
    %1860 = vmatpush1.xpose.msra.mxu0 0.0
    %1861 = vmatprep.subr.mxu0 0.0
    %1862 = vmatpush1.xpose.msra.mxu0 0.0
    %1863 = vmatprep.subr.mxu0 0.0
    %1864 = vmatpush1.xpose.msra.mxu0 0.0
    %1865 = vmatprep.subr.mxu0 0.0
    %1866 = vmatpush1.xpose.msra.mxu0 0.0
    %1867 = vmatprep.subr.mxu0 0.0
    %1868 = vmatpush1.xpose.msra.mxu0 0.0
    %1869 = vmatprep.subr.mxu0 0.0
    %1870 = vmatpush1.xpose.msra.mxu0 0.0
    %1871 = vmatprep.subr.mxu0 0.0
    %1872 = vmatpush1.xpose.msra.mxu0 0.0
    %1873 = vmatprep.subr.mxu0 0.0
    %1874 = vmatpush1.xpose.msra.mxu0 0.0
    %1875 = vmatprep.subr.mxu0 0.0
    %1876 = vmatpush1.xpose.msra.mxu0 0.0
    %1877 = vmatprep.subr.mxu0 0.0
    %1878 = vmatpush1.xpose.msra.mxu0 0.0
    %1879 = vmatprep.subr.mxu0 0.0
    %1880 = vmatpush1.xpose.msra.mxu0 0.0
    %1881 = vmatprep.subr.mxu0 0.0
    %1882 = vmatpush1.xpose.msra.mxu0 0.0
    %1883 = vmatprep.subr.mxu0 0.0
    %1884 = vmatpush1.xpose.msra.mxu0 0.0
    %1885 = vmatprep.subr.mxu0 0.0
    %1886 = vmatpush1.xpose.msra.mxu0 0.0
    %1887 = vmatprep.subr.mxu0 0.0
    %1888 = vmatpush1.xpose.msra.mxu0 0.0
    %1889 = vmatprep.subr.mxu0 0.0
    %1890 = vmatpush1.xpose.msra.mxu0 0.0
    %1891 = vmatprep.subr.mxu0 0.0
    %1892 = vmatpush1.xpose.msra.mxu0 0.0
    %1893 = vmatprep.subr.mxu0 0.0
    %1894 = vmatpush1.xpose.msra.mxu0 0.0
    %1895 = vmatprep.subr.mxu0 0.0
    %1896 = vmatpush1.xpose.msra.mxu0 0.0
    %1897 = vmatprep.subr.mxu0 0.0
    %1898 = vmatpush1.xpose.msra.mxu0 0.0
    %1899 = vmatprep.subr.mxu0 0.0
    %1900 = vmatpush1.xpose.msra.mxu0 0.0
    %1901 = vmatprep.mubr.f32.mxu0 0.0
    %1902 = vmatmul.mubr.f32.gmra.mrb[0].mxu0 %v1833
    %v1903 = vpop.f32.mrb[0].mxu0
    %v1904 = vadd.f32 0.0, %v1903
    %v1905 = vpop.f32.mrb[0].mxu0
    %1906 = vdwg.mxu0
    %v1907 = vmul.f32 %v1826, 0.35355338
    %v1908 = vmul.f32 %v1904, 0.35355338
    %v1909 = vadd.f32 %v1907, %v659
    %v1910 = vadd.f32 %v1908, %v663
    %v1911 = vsel %vm501, %v1909, -inf
    %1912 = vmax.xlane.f32.xlu0 %v1911
    %v1913 = vpop.xlane.xlu0 %1912
    %v1914 = vsel %vm501, %v1910, -inf
    %1915 = vmax.xlane.f32.xlu0 %v1914
    %v1916 = vpop.xlane.xlu0 %1915
    %v1917 = vsub.f32 %v1909, %v1913
    %v1918 = vsub.f32 %v1910, %v1916
    %v1919 = vmul.f32 %v1917, 1.442695
    %v1920 = vpow.pop %v1919
    %v1921 = vmul.f32 %v1918, 1.442695
    %v1922 = vpow.pop %v1921
    %v1923 = vsel %vm501, %v1920, 0.0
    %1924 = vadd.xlane.f32.xlu0 %v1923
    %v1925 = vpop.xlane.xlu0 %1924
    %v1926 = vsel %vm501, %v1922, 0.0
    %1927 = vadd.xlane.f32.xlu0 %v1926
    %v1928 = vpop.xlane.xlu0 %1927
    %v1929 = vrcp.pop %v1925
    %v1930 = vrcp.pop %v1928
    %v1931 = vmul.f32 %v1920, %v1929
    %v1932 = vmul.f32 %v1922, %v1930
    %1933 = vrot.lane.b32.xlu0 %v489, 104
    %v1934 = vpop.permute.xlu0 %1933
    %v1937 = vsel %vm501, %v1931, 0
    %1939 = vmatprep.subr.mxu0 0.0
    %1940 = vmatpush1.msra.mxu0 %v1934
    %1941 = vmatprep.subr.mxu0 0.0
    %1942 = vmatpush1.msra.mxu0 0.0
    %1943 = vmatprep.subr.mxu0 0.0
    %1944 = vmatpush1.msra.mxu0 0.0
    %1945 = vmatprep.subr.mxu0 0.0
    %1946 = vmatpush1.msra.mxu0 0.0
    %1947 = vmatprep.subr.mxu0 0.0
    %1948 = vmatpush1.msra.mxu0 0.0
    %1949 = vmatprep.subr.mxu0 0.0
    %1950 = vmatpush1.msra.mxu0 0.0
    %1951 = vmatprep.subr.mxu0 0.0
    %1952 = vmatpush1.msra.mxu0 0.0
    %1953 = vmatprep.subr.mxu0 0.0
    %1954 = vmatpush1.msra.mxu0 0.0
    %1955 = vmatprep.subr.mxu0 0.0
    %1956 = vmatpush1.msra.mxu0 0.0
    %1957 = vmatprep.subr.mxu0 0.0
    %1958 = vmatpush1.msra.mxu0 0.0
    %1959 = vmatprep.subr.mxu0 0.0
    %1960 = vmatpush1.msra.mxu0 0.0
    %1961 = vmatprep.subr.mxu0 0.0
    %1962 = vmatpush1.msra.mxu0 0.0
    %1963 = vmatprep.subr.mxu0 0.0
    %1964 = vmatpush1.msra.mxu0 0.0
    %1965 = vmatprep.subr.mxu0 0.0
    %1966 = vmatpush1.msra.mxu0 0.0
    %1967 = vmatprep.subr.mxu0 0.0
    %1968 = vmatpush1.msra.mxu0 0.0
    %1969 = vmatprep.subr.mxu0 0.0
    %1970 = vmatpush1.msra.mxu0 0.0
    %1971 = vmatprep.subr.mxu0 0.0
    %1972 = vmatpush1.msra.mxu0 0.0
    %1973 = vmatprep.subr.mxu0 0.0
    %1974 = vmatpush1.msra.mxu0 0.0
    %1975 = vmatprep.subr.mxu0 0.0
    %1976 = vmatpush1.msra.mxu0 0.0
    %1977 = vmatprep.subr.mxu0 0.0
    %1978 = vmatpush1.msra.mxu0 0.0
    %1979 = vmatprep.subr.mxu0 0.0
    %1980 = vmatpush1.msra.mxu0 0.0
    %1981 = vmatprep.subr.mxu0 0.0
    %1982 = vmatpush1.msra.mxu0 0.0
    %1983 = vmatprep.subr.mxu0 0.0
    %1984 = vmatpush1.msra.mxu0 0.0
    %1985 = vmatprep.subr.mxu0 0.0
    %1986 = vmatpush1.msra.mxu0 0.0
    %1987 = vmatprep.subr.mxu0 0.0
    %1988 = vmatpush1.msra.mxu0 0.0
    %1989 = vmatprep.subr.mxu0 0.0
    %1990 = vmatpush1.msra.mxu0 0.0
    %1991 = vmatprep.subr.mxu0 0.0
    %1992 = vmatpush1.msra.mxu0 0.0
    %1993 = vmatprep.subr.mxu0 0.0
    %1994 = vmatpush1.msra.mxu0 0.0
    %1995 = vmatprep.subr.mxu0 0.0
    %1996 = vmatpush1.msra.mxu0 0.0
    %1997 = vmatprep.subr.mxu0 0.0
    %1998 = vmatpush1.msra.mxu0 0.0
    %1999 = vmatprep.subr.mxu0 0.0
    %2000 = vmatpush1.msra.mxu0 0.0
    %2001 = vmatprep.subr.mxu0 0.0
    %2002 = vmatpush1.msra.mxu0 0.0
    %2003 = vmatprep.mubr.f32.mxu0 0.0
    %2004 = vmatmul.mubr.f32.gmra.mrb[0].mxu0 %v1937
    %v2005 = vpop.f32.mrb[0].mxu0
    %v2006 = vadd.f32 0.0, %v2005
    %v2007 = vpop.f32.mrb[0].mxu0
    %2008 = vdwg.mxu0
    %2009 = vrot.lane.b32.xlu0 %v494, 104
    %v2010 = vpop.permute.xlu0 %2009
    %v2013 = vsel %vm501, %v1932, 0
    %2015 = vmatprep.subr.mxu0 0.0
    %2016 = vmatpush1.msra.mxu0 %v2010
    %2017 = vmatprep.subr.mxu0 0.0
    %2018 = vmatpush1.msra.mxu0 0.0
    %2019 = vmatprep.subr.mxu0 0.0
    %2020 = vmatpush1.msra.mxu0 0.0
    %2021 = vmatprep.subr.mxu0 0.0
    %2022 = vmatpush1.msra.mxu0 0.0
    %2023 = vmatprep.subr.mxu0 0.0
    %2024 = vmatpush1.msra.mxu0 0.0
    %2025 = vmatprep.subr.mxu0 0.0
    %2026 = vmatpush1.msra.mxu0 0.0
    %2027 = vmatprep.subr.mxu0 0.0
    %2028 = vmatpush1.msra.mxu0 0.0
    %2029 = vmatprep.subr.mxu0 0.0
    %2030 = vmatpush1.msra.mxu0 0.0
    %2031 = vmatprep.subr.mxu0 0.0
    %2032 = vmatpush1.msra.mxu0 0.0
    %2033 = vmatprep.subr.mxu0 0.0
    %2034 = vmatpush1.msra.mxu0 0.0
    %2035 = vmatprep.subr.mxu0 0.0
    %2036 = vmatpush1.msra.mxu0 0.0
    %2037 = vmatprep.subr.mxu0 0.0
    %2038 = vmatpush1.msra.mxu0 0.0
    %2039 = vmatprep.subr.mxu0 0.0
    %2040 = vmatpush1.msra.mxu0 0.0
    %2041 = vmatprep.subr.mxu0 0.0
    %2042 = vmatpush1.msra.mxu0 0.0
    %2043 = vmatprep.subr.mxu0 0.0
    %2044 = vmatpush1.msra.mxu0 0.0
    %2045 = vmatprep.subr.mxu0 0.0
    %2046 = vmatpush1.msra.mxu0 0.0
    %2047 = vmatprep.subr.mxu0 0.0
    %2048 = vmatpush1.msra.mxu0 0.0
    %2049 = vmatprep.subr.mxu0 0.0
    %2050 = vmatpush1.msra.mxu0 0.0
    %2051 = vmatprep.subr.mxu0 0.0
    %2052 = vmatpush1.msra.mxu0 0.0
    %2053 = vmatprep.subr.mxu0 0.0
    %2054 = vmatpush1.msra.mxu0 0.0
    %2055 = vmatprep.subr.mxu0 0.0
    %2056 = vmatpush1.msra.mxu0 0.0
    %2057 = vmatprep.subr.mxu0 0.0
    %2058 = vmatpush1.msra.mxu0 0.0
    %2059 = vmatprep.subr.mxu0 0.0
    %2060 = vmatpush1.msra.mxu0 0.0
    %2061 = vmatprep.subr.mxu0 0.0
    %2062 = vmatpush1.msra.mxu0 0.0
    %2063 = vmatprep.subr.mxu0 0.0
    %2064 = vmatpush1.msra.mxu0 0.0
    %2065 = vmatprep.subr.mxu0 0.0
    %2066 = vmatpush1.msra.mxu0 0.0
    %2067 = vmatprep.subr.mxu0 0.0
    %2068 = vmatpush1.msra.mxu0 0.0
    %2069 = vmatprep.subr.mxu0 0.0
    %2070 = vmatpush1.msra.mxu0 0.0
    %2071 = vmatprep.subr.mxu0 0.0
    %2072 = vmatpush1.msra.mxu0 0.0
    %2073 = vmatprep.subr.mxu0 0.0
    %2074 = vmatpush1.msra.mxu0 0.0
    %2075 = vmatprep.subr.mxu0 0.0
    %2076 = vmatpush1.msra.mxu0 0.0
    %2077 = vmatprep.subr.mxu0 0.0
    %2078 = vmatpush1.msra.mxu0 0.0
    %2079 = vmatprep.mubr.f32.mxu0 0.0
    %2080 = vmatmul.mubr.f32.gmra.mrb[0].mxu0 %v2013
    %v2081 = vpop.f32.mrb[0].mxu0
    %v2082 = vadd.f32 0.0, %v2081
    %v2083 = vpop.f32.mrb[0].mxu0
    %2084 = vdwg.mxu0
    %v2086 = vsel %vm501, %v2006, 0
    %v2089 = vsel %vm501, %v2082, 0
    %2091 = vmatprep.subr.mxu0 0.0
    %2092 = vmatpush1.msra.mxu0 %v500
    %2093 = vmatprep.subr.mxu0 0.0
    %2094 = vmatpush1.msra.mxu0 0.0
    %2095 = vmatprep.subr.mxu0 0.0
    %2096 = vmatpush1.msra.mxu0 0.0
    %2097 = vmatprep.subr.mxu0 0.0
    %2098 = vmatpush1.msra.mxu0 0.0
    %2099 = vmatprep.subr.mxu0 0.0
    %2100 = vmatpush1.msra.mxu0 0.0
    %2101 = vmatprep.subr.mxu0 0.0
    %2102 = vmatpush1.msra.mxu0 0.0
    %2103 = vmatprep.subr.mxu0 0.0
    %2104 = vmatpush1.msra.mxu0 0.0
    %2105 = vmatprep.subr.mxu0 0.0
    %2106 = vmatpush1.msra.mxu0 0.0
    %2107 = vmatprep.subr.mxu0 0.0
    %2108 = vmatpush1.msra.mxu0 0.0
    %2109 = vmatprep.subr.mxu0 0.0
    %2110 = vmatpush1.msra.mxu0 0.0
    %2111 = vmatprep.subr.mxu0 0.0
    %2112 = vmatpush1.msra.mxu0 0.0
    %2113 = vmatprep.subr.mxu0 0.0
    %2114 = vmatpush1.msra.mxu0 0.0
    %2115 = vmatprep.subr.mxu0 0.0
    %2116 = vmatpush1.msra.mxu0 0.0
    %2117 = vmatprep.subr.mxu0 0.0
    %2118 = vmatpush1.msra.mxu0 0.0
    %2119 = vmatprep.subr.mxu0 0.0
    %2120 = vmatpush1.msra.mxu0 0.0
    %2121 = vmatprep.subr.mxu0 0.0
    %2122 = vmatpush1.msra.mxu0 0.0
    %2123 = vmatprep.subr.mxu0 0.0
    %2124 = vmatpush1.msra.mxu0 0.0
    %2125 = vmatprep.subr.mxu0 0.0
    %2126 = vmatpush1.msra.mxu0 0.0
    %2127 = vmatprep.subr.mxu0 0.0
    %2128 = vmatpush1.msra.mxu0 0.0
    %2129 = vmatprep.subr.mxu0 0.0
    %2130 = vmatpush1.msra.mxu0 0.0
    %2131 = vmatprep.subr.mxu0 0.0
    %2132 = vmatpush1.msra.mxu0 0.0
    %2133 = vmatprep.subr.mxu0 0.0
    %2134 = vmatpush1.msra.mxu0 0.0
    %2135 = vmatprep.subr.mxu0 0.0
    %2136 = vmatpush1.msra.mxu0 0.0
    %2137 = vmatprep.subr.mxu0 0.0
    %2138 = vmatpush1.msra.mxu0 0.0
    %2139 = vmatprep.subr.mxu0 0.0
    %2140 = vmatpush1.msra.mxu0 0.0
    %2141 = vmatprep.subr.mxu0 0.0
    %2142 = vmatpush1.msra.mxu0 0.0
    %2143 = vmatprep.subr.mxu0 0.0
    %2144 = vmatpush1.msra.mxu0 0.0
    %2145 = vmatprep.subr.mxu0 0.0
    %2146 = vmatpush1.msra.mxu0 0.0
    %2147 = vmatprep.subr.mxu0 0.0
    %2148 = vmatpush1.msra.mxu0 0.0
    %2149 = vmatprep.subr.mxu0 0.0
    %2150 = vmatpush1.msra.mxu0 0.0
    %2151 = vmatprep.subr.mxu0 0.0
    %2152 = vmatpush1.msra.mxu0 0.0
    %2153 = vmatprep.subr.mxu0 0.0
    %2154 = vmatpush1.msra.mxu0 0.0
    %2155 = vmatprep.mubr.f32.mxu0 0.0
    %2156 = vmatmul.mubr.f32.gmra.mrb[0].mxu0 %v2086
    %v2157 = vpop.f32.mrb[0].mxu0
    %v2158 = vadd.f32 0.0, %v2157
    %v2159 = vpop.f32.mrb[0].mxu0
    %2160 = vmatprep.mubr.f32.mxu0 0.0
    %2161 = vmatmul.mubr.f32.gmra.mrb[0].mxu0 %v2089
    %v2162 = vpop.f32.mrb[0].mxu0
    %v2163 = vadd.f32 0.0, %v2162
    %v2164 = vpop.f32.mrb[0].mxu0
    %2165 = vdwg.mxu0
    %v2166 = vadd.f32 %v1749, %v2158
    %v2167 = vadd.f32 %v1750, %v2163
    %v2168 = vld [vmem:[%s3 + $0x5] sm:$0x1]
    %v2169 = vlaneseq
    %v2170 = vshrl.u32 %v2169, 7
    %v2171 = vsub.s32 0, %v2170
    %v2172 = vrot.slane %v2168, %v2171
    %v2173 = vadd.f32 %v2166, %v2172
    %v2174 = vadd.f32 %v2167, %v2172
    %v2175 = vadd.f32 %v2173, %v211
    %v2176 = vadd.f32 %v2174, %v212
    %v2177 = vld [vmem:[%s3 + $0x6] sm:$0x1]
    %v2178 = vld [vmem:[%s3 + $0x7] sm:$0x1]
    %v2179 = vsel %vm173, %v2175, 0.0
    %2180 = vadd.xlane.f32.xlu0 %v2179
    %v2181 = vpop.xlane.xlu0 %2180
    %v2182 = vsel %vm173, %v2176, 0.0
    %2183 = vadd.xlane.f32.xlu0 %v2182
    %v2184 = vpop.xlane.xlu0 %2183
    %v2185 = vmul.f32 %v2181, %v180
    %v2186 = vmul.f32 %v2184, %v180
    %v2187 = vsub.f32 %v2175, %v2185
    %v2188 = vsub.f32 %v2176, %v2186
    %v2189 = vmul.f32 %v2187, %v2187
    %v2190 = vmul.f32 %v2188, %v2188
    %v2191 = vsel %vm173, %v2189, 0.0
    %2192 = vadd.xlane.f32.xlu0 %v2191
    %v2193 = vpop.xlane.xlu0 %2192
    %v2194 = vsel %vm173, %v2190, 0.0
    %2195 = vadd.xlane.f32.xlu0 %v2194
    %v2196 = vpop.xlane.xlu0 %2195
    %v2197 = vmul.f32 %v2193, %v180
    %v2198 = vmul.f32 %v2196, %v180
    %v2199 = vadd.f32 %v2197, 1e-12
    %v2200 = vadd.f32 %v2198, 1e-12
    %v2201 = vrsqrt.pop %v2199
    %v2202 = vrsqrt.pop %v2200
    %v2203 = vmul.f32 %v2187, %v2201
    %v2204 = vmul.f32 %v2188, %v2202
    %v2205 = vlaneseq
    %v2206 = vshrl.u32 %v2205, 7
    %v2207 = vsub.s32 0, %v2206
    %v2208 = vrot.slane %v2177, %v2207
    %v2209 = vmul.f32 %v2203, %v2208
    %v2210 = vmul.f32 %v2204, %v2208
    %v2211 = vlaneseq
    %v2212 = vshrl.u32 %v2211, 7
    %v2213 = vsub.s32 0, %v2212
    %v2214 = vrot.slane %v2178, %v2213
    %v2215 = vadd.f32 %v2209, %v2214
    %v2216 = vadd.f32 %v2210, %v2214
    %v2217 = vld [vmem:[#allocation2 + $0x118] sm:$0xff]
    %v2218 = vld [vmem:[#allocation2 + $0x120] sm:$0xff]
    %v2219 = vld [vmem:[#allocation2 + $0x128] sm:$0xff]
    %v2220 = vld [vmem:[#allocation2 + $0x130] sm:$0xff]
    %v2221 = vld [vmem:[%s3 + $0x8] sm:$0x1]
    %v2222 = vlaneseq
    %v2223 = vshrl.u32 %v2222, 7
    %v2224 = vsub.s32 0, %v2223
    %v2225 = vrot.slane %v2221, %v2224
    %v2227 = vsel %vm173, %v2215, 0
    %v2230 = vsel %vm173, %v2216, 0
    %2232 = vmatprep.subr.mxu0 0.0
    %2233 = vmatpush1.msra.mxu0 %v2217
    %2234 = vmatprep.subr.mxu0 0.0
    %2235 = vmatpush1.msra.mxu0 %v2218
    %2236 = vmatprep.subr.mxu0 0.0
    %2237 = vmatpush1.msra.mxu0 %v2219
    %2238 = vmatprep.subr.mxu0 0.0
    %2239 = vmatpush1.msra.mxu0 %v2220
    %2240 = vmatprep.subr.mxu0 0.0
    %2241 = vmatpush1.msra.mxu0 0.0
    %2242 = vmatprep.subr.mxu0 0.0
    %2243 = vmatpush1.msra.mxu0 0.0
    %2244 = vmatprep.subr.mxu0 0.0
    %2245 = vmatpush1.msra.mxu0 0.0
    %2246 = vmatprep.subr.mxu0 0.0
    %2247 = vmatpush1.msra.mxu0 0.0
    %2248 = vmatprep.subr.mxu0 0.0
    %2249 = vmatpush1.msra.mxu0 0.0
    %2250 = vmatprep.subr.mxu0 0.0
    %2251 = vmatpush1.msra.mxu0 0.0
    %2252 = vmatprep.subr.mxu0 0.0
    %2253 = vmatpush1.msra.mxu0 0.0
    %2254 = vmatprep.subr.mxu0 0.0
    %2255 = vmatpush1.msra.mxu0 0.0
    %2256 = vmatprep.subr.mxu0 0.0
    %2257 = vmatpush1.msra.mxu0 0.0
    %2258 = vmatprep.subr.mxu0 0.0
    %2259 = vmatpush1.msra.mxu0 0.0
    %2260 = vmatprep.subr.mxu0 0.0
    %2261 = vmatpush1.msra.mxu0 0.0
    %2262 = vmatprep.subr.mxu0 0.0
    %2263 = vmatpush1.msra.mxu0 0.0
    %2264 = vmatprep.subr.mxu0 0.0
    %2265 = vmatpush1.msra.mxu0 0.0
    %2266 = vmatprep.subr.mxu0 0.0
    %2267 = vmatpush1.msra.mxu0 0.0
    %2268 = vmatprep.subr.mxu0 0.0
    %2269 = vmatpush1.msra.mxu0 0.0
    %2270 = vmatprep.subr.mxu0 0.0
    %2271 = vmatpush1.msra.mxu0 0.0
    %2272 = vmatprep.subr.mxu0 0.0
    %2273 = vmatpush1.msra.mxu0 0.0
    %2274 = vmatprep.subr.mxu0 0.0
    %2275 = vmatpush1.msra.mxu0 0.0
    %2276 = vmatprep.subr.mxu0 0.0
    %2277 = vmatpush1.msra.mxu0 0.0
    %2278 = vmatprep.subr.mxu0 0.0
    %2279 = vmatpush1.msra.mxu0 0.0
    %2280 = vmatprep.subr.mxu0 0.0
    %2281 = vmatpush1.msra.mxu0 0.0
    %2282 = vmatprep.subr.mxu0 0.0
    %2283 = vmatpush1.msra.mxu0 0.0
    %2284 = vmatprep.subr.mxu0 0.0
    %2285 = vmatpush1.msra.mxu0 0.0
    %2286 = vmatprep.subr.mxu0 0.0
    %2287 = vmatpush1.msra.mxu0 0.0
    %2288 = vmatprep.subr.mxu0 0.0
    %2289 = vmatpush1.msra.mxu0 0.0
    %2290 = vmatprep.subr.mxu0 0.0
    %2291 = vmatpush1.msra.mxu0 0.0
    %2292 = vmatprep.subr.mxu0 0.0
    %2293 = vmatpush1.msra.mxu0 0.0
    %2294 = vmatprep.subr.mxu0 0.0
    %2295 = vmatpush1.msra.mxu0 0.0
    %2296 = vmatprep.mubr.f32.mxu0 0.0
    %2297 = vmatmul.mubr.f32.gmra.mrb[0].mxu0 %v2227
    %v2298 = vpop.f32.mrb[0].mxu0
    %v2299 = vadd.f32 %v2225, %v2298
    %v2300 = vpop.f32.mrb[0].mxu0
    %2301 = vmatprep.mubr.f32.mxu0 0.0
    %2302 = vmatmul.mubr.f32.gmra.mrb[0].mxu0 %v2230
    %v2303 = vpop.f32.mrb[0].mxu0
    %v2304 = vadd.f32 %v2225, %v2303
    %v2305 = vpop.f32.mrb[0].mxu0
    %2306 = vdwg.mxu0
    %v2307 = vmul.f32 %v2299, 0.5
    %v2308 = vmul.f32 %v2304, 0.5
    %v2309 = vmul.f32 %v2299, 0.044715
    %v2310 = vmul.f32 %v2304, 0.044715
    %v2311 = vmul.f32 %v2309, %v2299
    %v2312 = vmul.f32 %v2310, %v2304
    %v2313 = vmul.f32 %v2311, %v2299
    %v2314 = vmul.f32 %v2312, %v2304
    %v2315 = vadd.f32 %v2299, %v2313
    %v2316 = vadd.f32 %v2304, %v2314
    %v2317 = vmul.f32 %v2315, 0.7978846
    %v2318 = vmul.f32 %v2316, 0.7978846
    %v2319 = vtanh.pop %v2317
    %v2320 = vtanh.pop %v2318
    %v2321 = vadd.f32 %v2319, 1.0
    %v2322 = vadd.f32 %v2320, 1.0
    %v2323 = vmul.f32 %v2307, %v2321
    %v2324 = vmul.f32 %v2308, %v2322
    %v2325 = vld [vmem:[#allocation2 + $0x138] sm:$0xff]
    %v2326 = vld [vmem:[#allocation2 + $0x140] sm:$0xff]
    %v2327 = vld [vmem:[#allocation2 + $0x148] sm:$0xff]
    %v2328 = vld [vmem:[#allocation2 + $0x150] sm:$0xff]
    %v2329 = vld [vmem:[#allocation2 + $0x158] sm:$0xff]
    %v2330 = vld [vmem:[#allocation2 + $0x160] sm:$0xff]
    %v2331 = vld [vmem:[#allocation2 + $0x168] sm:$0xff]
    %v2332 = vld [vmem:[#allocation2 + $0x170] sm:$0xff]
    %v2333 = vld [vmem:[%s3 + $0x9] sm:$0x1]
    %v2334 = vlaneseq
    %v2335 = vshrl.u32 %v2334, 7
    %v2336 = vsub.s32 0, %v2335
    %v2337 = vrot.slane %v2333, %v2336
    %vm2338 = vcmask 523264
    %v2340 = vsel %vm2338, %v2323, 0
    %v2343 = vsel %vm2338, %v2324, 0
    %2345 = vmatprep.subr.mxu0 0.0
    %2346 = vmatpush1.msra.mxu0 %v2325
    %2347 = vmatprep.subr.mxu0 0.0
    %2348 = vmatpush1.msra.mxu0 %v2326
    %2349 = vmatprep.subr.mxu0 0.0
    %2350 = vmatpush1.msra.mxu0 %v2327
    %2351 = vmatprep.subr.mxu0 0.0
    %2352 = vmatpush1.msra.mxu0 %v2328
    %2353 = vmatprep.subr.mxu0 0.0
    %2354 = vmatpush1.msra.mxu0 %v2329
    %2355 = vmatprep.subr.mxu0 0.0
    %2356 = vmatpush1.msra.mxu0 %v2330
    %2357 = vmatprep.subr.mxu0 0.0
    %2358 = vmatpush1.msra.mxu0 %v2331
    %2359 = vmatprep.subr.mxu0 0.0
    %2360 = vmatpush1.msra.mxu0 %v2332
    %2361 = vmatprep.subr.mxu0 0.0
    %2362 = vmatpush1.msra.mxu0 0.0
    %2363 = vmatprep.subr.mxu0 0.0
    %2364 = vmatpush1.msra.mxu0 0.0
    %2365 = vmatprep.subr.mxu0 0.0
    %2366 = vmatpush1.msra.mxu0 0.0
    %2367 = vmatprep.subr.mxu0 0.0
    %2368 = vmatpush1.msra.mxu0 0.0
    %2369 = vmatprep.subr.mxu0 0.0
    %2370 = vmatpush1.msra.mxu0 0.0
    %2371 = vmatprep.subr.mxu0 0.0
    %2372 = vmatpush1.msra.mxu0 0.0
    %2373 = vmatprep.subr.mxu0 0.0
    %2374 = vmatpush1.msra.mxu0 0.0
    %2375 = vmatprep.subr.mxu0 0.0
    %2376 = vmatpush1.msra.mxu0 0.0
    %2377 = vmatprep.subr.mxu0 0.0
    %2378 = vmatpush1.msra.mxu0 0.0
    %2379 = vmatprep.subr.mxu0 0.0
    %2380 = vmatpush1.msra.mxu0 0.0
    %2381 = vmatprep.subr.mxu0 0.0
    %2382 = vmatpush1.msra.mxu0 0.0
    %2383 = vmatprep.subr.mxu0 0.0
    %2384 = vmatpush1.msra.mxu0 0.0
    %2385 = vmatprep.subr.mxu0 0.0
    %2386 = vmatpush1.msra.mxu0 0.0
    %2387 = vmatprep.subr.mxu0 0.0
    %2388 = vmatpush1.msra.mxu0 0.0
    %2389 = vmatprep.subr.mxu0 0.0
    %2390 = vmatpush1.msra.mxu0 0.0
    %2391 = vmatprep.subr.mxu0 0.0
    %2392 = vmatpush1.msra.mxu0 0.0
    %2393 = vmatprep.subr.mxu0 0.0
    %2394 = vmatpush1.msra.mxu0 0.0
    %2395 = vmatprep.subr.mxu0 0.0
    %2396 = vmatpush1.msra.mxu0 0.0
    %2397 = vmatprep.subr.mxu0 0.0
    %2398 = vmatpush1.msra.mxu0 0.0
    %2399 = vmatprep.subr.mxu0 0.0
    %2400 = vmatpush1.msra.mxu0 0.0
    %2401 = vmatprep.subr.mxu0 0.0
    %2402 = vmatpush1.msra.mxu0 0.0
    %2403 = vmatprep.subr.mxu0 0.0
    %2404 = vmatpush1.msra.mxu0 0.0
    %2405 = vmatprep.subr.mxu0 0.0
    %2406 = vmatpush1.msra.mxu0 0.0
    %2407 = vmatprep.subr.mxu0 0.0
    %2408 = vmatpush1.msra.mxu0 0.0
    %2409 = vmatprep.mubr.f32.mxu0 0.0
    %2410 = vmatmul.mubr.f32.gmra.mrb[0].mxu0 %v2340
    %v2411 = vpop.f32.mrb[0].mxu0
    %v2412 = vadd.f32 %v2337, %v2411
    %v2413 = vpop.f32.mrb[0].mxu0
    %2414 = vmatprep.mubr.f32.mxu0 0.0
    %2415 = vmatmul.mubr.f32.gmra.mrb[0].mxu0 %v2343
    %v2416 = vpop.f32.mrb[0].mxu0
    %v2417 = vadd.f32 %v2337, %v2416
    %v2418 = vpop.f32.mrb[0].mxu0
    %2419 = vdwg.mxu0
    %v2420 = vadd.f32 %v2412, %v2215
    %v2421 = vadd.f32 %v2417, %v2216
    %v2422 = vld [vmem:[%s3 + $0xa] sm:$0x1]
    %v2423 = vld [vmem:[%s3 + $0xb] sm:$0x1]
    %v2424 = vsel %vm173, %v2420, 0.0
    %2425 = vadd.xlane.f32.xlu0 %v2424
    %v2426 = vpop.xlane.xlu0 %2425
    %v2427 = vsel %vm173, %v2421, 0.0
    %2428 = vadd.xlane.f32.xlu0 %v2427
    %v2429 = vpop.xlane.xlu0 %2428
    %v2430 = vmul.f32 %v2426, %v180
    %v2431 = vmul.f32 %v2429, %v180
    %v2432 = vsub.f32 %v2420, %v2430
    %v2433 = vsub.f32 %v2421, %v2431
    %v2434 = vmul.f32 %v2432, %v2432
    %v2435 = vmul.f32 %v2433, %v2433
    %v2436 = vsel %vm173, %v2434, 0.0
    %2437 = vadd.xlane.f32.xlu0 %v2436
    %v2438 = vpop.xlane.xlu0 %2437
    %v2439 = vsel %vm173, %v2435, 0.0
    %2440 = vadd.xlane.f32.xlu0 %v2439
    %v2441 = vpop.xlane.xlu0 %2440
    %v2442 = vmul.f32 %v2438, %v180
    %v2443 = vmul.f32 %v2441, %v180
    %v2444 = vadd.f32 %v2442, 1e-12
    %v2445 = vadd.f32 %v2443, 1e-12
    %v2446 = vrsqrt.pop %v2444
    %v2447 = vrsqrt.pop %v2445
    %v2448 = vmul.f32 %v2432, %v2446
    %v2449 = vmul.f32 %v2433, %v2447
    %v2450 = vlaneseq
    %v2451 = vshrl.u32 %v2450, 7
    %v2452 = vsub.s32 0, %v2451
    %v2453 = vrot.slane %v2422, %v2452
    %v2454 = vmul.f32 %v2448, %v2453
    %v2455 = vmul.f32 %v2449, %v2453
    %v2456 = vlaneseq
    %v2457 = vshrl.u32 %v2456, 7
    %v2458 = vsub.s32 0, %v2457
    %v2459 = vrot.slane %v2423, %v2458
    %v2460 = vadd.f32 %v2454, %v2459
    %v2461 = vadd.f32 %v2455, %v2459
    %v2462 = vld [vmem:[#allocation2 + $0x178] sm:$0xff]
    %v2463 = vld [vmem:[#allocation2 + $0x180] sm:$0xff]
    %v2464 = vld [vmem:[#allocation2 + $0x188] sm:$0xff]
    %v2465 = vld [vmem:[#allocation2 + $0x190] sm:$0xff]
    %v2466 = vld [vmem:[%s3 + $0xc] sm:$0x1]
    %v2467 = vlaneseq
    %v2468 = vshrl.u32 %v2467, 7
    %v2469 = vsub.s32 0, %v2468
    %v2470 = vrot.slane %v2466, %v2469
    %v2472 = vsel %vm173, %v2460, 0
    %v2475 = vsel %vm173, %v2461, 0
    %2477 = vmatprep.subr.mxu0 0.0
    %2478 = vmatpush1.msra.mxu0 %v2462
    %2479 = vmatprep.subr.mxu0 0.0
    %2480 = vmatpush1.msra.mxu0 %v2463
    %2481 = vmatprep.subr.mxu0 0.0
    %2482 = vmatpush1.msra.mxu0 %v2464
    %2483 = vmatprep.subr.mxu0 0.0
    %2484 = vmatpush1.msra.mxu0 %v2465
    %2485 = vmatprep.subr.mxu0 0.0
    %2486 = vmatpush1.msra.mxu0 0.0
    %2487 = vmatprep.subr.mxu0 0.0
    %2488 = vmatpush1.msra.mxu0 0.0
    %2489 = vmatprep.subr.mxu0 0.0
    %2490 = vmatpush1.msra.mxu0 0.0
    %2491 = vmatprep.subr.mxu0 0.0
    %2492 = vmatpush1.msra.mxu0 0.0
    %2493 = vmatprep.subr.mxu0 0.0
    %2494 = vmatpush1.msra.mxu0 0.0
    %2495 = vmatprep.subr.mxu0 0.0
    %2496 = vmatpush1.msra.mxu0 0.0
    %2497 = vmatprep.subr.mxu0 0.0
    %2498 = vmatpush1.msra.mxu0 0.0
    %2499 = vmatprep.subr.mxu0 0.0
    %2500 = vmatpush1.msra.mxu0 0.0
    %2501 = vmatprep.subr.mxu0 0.0
    %2502 = vmatpush1.msra.mxu0 0.0
    %2503 = vmatprep.subr.mxu0 0.0
    %2504 = vmatpush1.msra.mxu0 0.0
    %2505 = vmatprep.subr.mxu0 0.0
    %2506 = vmatpush1.msra.mxu0 0.0
    %2507 = vmatprep.subr.mxu0 0.0
    %2508 = vmatpush1.msra.mxu0 0.0
    %2509 = vmatprep.subr.mxu0 0.0
    %2510 = vmatpush1.msra.mxu0 0.0
    %2511 = vmatprep.subr.mxu0 0.0
    %2512 = vmatpush1.msra.mxu0 0.0
    %2513 = vmatprep.subr.mxu0 0.0
    %2514 = vmatpush1.msra.mxu0 0.0
    %2515 = vmatprep.subr.mxu0 0.0
    %2516 = vmatpush1.msra.mxu0 0.0
    %2517 = vmatprep.subr.mxu0 0.0
    %2518 = vmatpush1.msra.mxu0 0.0
    %2519 = vmatprep.subr.mxu0 0.0
    %2520 = vmatpush1.msra.mxu0 0.0
    %2521 = vmatprep.subr.mxu0 0.0
    %2522 = vmatpush1.msra.mxu0 0.0
    %2523 = vmatprep.subr.mxu0 0.0
    %2524 = vmatpush1.msra.mxu0 0.0
    %2525 = vmatprep.subr.mxu0 0.0
    %2526 = vmatpush1.msra.mxu0 0.0
    %2527 = vmatprep.subr.mxu0 0.0
    %2528 = vmatpush1.msra.mxu0 0.0
    %2529 = vmatprep.subr.mxu0 0.0
    %2530 = vmatpush1.msra.mxu0 0.0
    %2531 = vmatprep.subr.mxu0 0.0
    %2532 = vmatpush1.msra.mxu0 0.0
    %2533 = vmatprep.subr.mxu0 0.0
    %2534 = vmatpush1.msra.mxu0 0.0
    %2535 = vmatprep.subr.mxu0 0.0
    %2536 = vmatpush1.msra.mxu0 0.0
    %2537 = vmatprep.subr.mxu0 0.0
    %2538 = vmatpush1.msra.mxu0 0.0
    %2539 = vmatprep.subr.mxu0 0.0
    %2540 = vmatpush1.msra.mxu0 0.0
    %2541 = vmatprep.mubr.f32.mxu0 0.0
    %2542 = vmatmul.mubr.f32.gmra.mrb[0].mxu0 %v2472
    %v2543 = vpop.f32.mrb[0].mxu0
    %v2544 = vadd.f32 %v2470, %v2543
    %v2545 = vpop.f32.mrb[0].mxu0
    %2546 = vmatprep.mubr.f32.mxu0 0.0
    %2547 = vmatmul.mubr.f32.gmra.mrb[0].mxu0 %v2475
    %v2548 = vpop.f32.mrb[0].mxu0
    %v2549 = vadd.f32 %v2470, %v2548
    %v2550 = vpop.f32.mrb[0].mxu0
    %2551 = vdwg.mxu0
    %v2552 = vld [vmem:[#allocation2 + $0x198] sm:$0xff]
    %v2553 = vld [vmem:[#allocation2 + $0x1a0] sm:$0xff]
    %v2554 = vld [vmem:[#allocation2 + $0x1a8] sm:$0xff]
    %v2555 = vld [vmem:[#allocation2 + $0x1b0] sm:$0xff]
    %v2556 = vld [vmem:[%s3 + $0xd] sm:$0x1]
    %v2557 = vlaneseq
    %v2558 = vshrl.u32 %v2557, 7
    %v2559 = vsub.s32 0, %v2558
    %v2560 = vrot.slane %v2556, %v2559
    %2561 = vmatprep.subr.mxu0 0.0
    %2562 = vmatpush1.msra.mxu0 %v2552
    %2563 = vmatprep.subr.mxu0 0.0
    %2564 = vmatpush1.msra.mxu0 %v2553
    %2565 = vmatprep.subr.mxu0 0.0
    %2566 = vmatpush1.msra.mxu0 %v2554
    %2567 = vmatprep.subr.mxu0 0.0
    %2568 = vmatpush1.msra.mxu0 %v2555
    %2569 = vmatprep.subr.mxu0 0.0
    %2570 = vmatpush1.msra.mxu0 0.0
    %2571 = vmatprep.subr.mxu0 0.0
    %2572 = vmatpush1.msra.mxu0 0.0
    %2573 = vmatprep.subr.mxu0 0.0
    %2574 = vmatpush1.msra.mxu0 0.0
    %2575 = vmatprep.subr.mxu0 0.0
    %2576 = vmatpush1.msra.mxu0 0.0
    %2577 = vmatprep.subr.mxu0 0.0
    %2578 = vmatpush1.msra.mxu0 0.0
    %2579 = vmatprep.subr.mxu0 0.0
    %2580 = vmatpush1.msra.mxu0 0.0
    %2581 = vmatprep.subr.mxu0 0.0
    %2582 = vmatpush1.msra.mxu0 0.0
    %2583 = vmatprep.subr.mxu0 0.0
    %2584 = vmatpush1.msra.mxu0 0.0
    %2585 = vmatprep.subr.mxu0 0.0
    %2586 = vmatpush1.msra.mxu0 0.0
    %2587 = vmatprep.subr.mxu0 0.0
    %2588 = vmatpush1.msra.mxu0 0.0
    %2589 = vmatprep.subr.mxu0 0.0
    %2590 = vmatpush1.msra.mxu0 0.0
    %2591 = vmatprep.subr.mxu0 0.0
    %2592 = vmatpush1.msra.mxu0 0.0
    %2593 = vmatprep.subr.mxu0 0.0
    %2594 = vmatpush1.msra.mxu0 0.0
    %2595 = vmatprep.subr.mxu0 0.0
    %2596 = vmatpush1.msra.mxu0 0.0
    %2597 = vmatprep.subr.mxu0 0.0
    %2598 = vmatpush1.msra.mxu0 0.0
    %2599 = vmatprep.subr.mxu0 0.0
    %2600 = vmatpush1.msra.mxu0 0.0
    %2601 = vmatprep.subr.mxu0 0.0
    %2602 = vmatpush1.msra.mxu0 0.0
    %2603 = vmatprep.subr.mxu0 0.0
    %2604 = vmatpush1.msra.mxu0 0.0
    %2605 = vmatprep.subr.mxu0 0.0
    %2606 = vmatpush1.msra.mxu0 0.0
    %2607 = vmatprep.subr.mxu0 0.0
    %2608 = vmatpush1.msra.mxu0 0.0
    %2609 = vmatprep.subr.mxu0 0.0
    %2610 = vmatpush1.msra.mxu0 0.0
    %2611 = vmatprep.subr.mxu0 0.0
    %2612 = vmatpush1.msra.mxu0 0.0
    %2613 = vmatprep.subr.mxu0 0.0
    %2614 = vmatpush1.msra.mxu0 0.0
    %2615 = vmatprep.subr.mxu0 0.0
    %2616 = vmatpush1.msra.mxu0 0.0
    %2617 = vmatprep.subr.mxu0 0.0
    %2618 = vmatpush1.msra.mxu0 0.0
    %2619 = vmatprep.subr.mxu0 0.0
    %2620 = vmatpush1.msra.mxu0 0.0
    %2621 = vmatprep.subr.mxu0 0.0
    %2622 = vmatpush1.msra.mxu0 0.0
    %2623 = vmatprep.subr.mxu0 0.0
    %2624 = vmatpush1.msra.mxu0 0.0
    %2625 = vmatprep.mubr.f32.mxu0 0.0
    %2626 = vmatmul.mubr.f32.gmra.mrb[0].mxu0 %v2472
    %v2627 = vpop.f32.mrb[0].mxu0
    %v2628 = vadd.f32 %v2560, %v2627
    %v2629 = vpop.f32.mrb[0].mxu0
    %2630 = vmatprep.mubr.f32.mxu0 0.0
    %2631 = vmatmul.mubr.f32.gmra.mrb[0].mxu0 %v2475
    %v2632 = vpop.f32.mrb[0].mxu0
    %v2633 = vadd.f32 %v2560, %v2632
    %v2634 = vpop.f32.mrb[0].mxu0
    %2635 = vdwg.mxu0
    %v2636 = vld [vmem:[#allocation2 + $0x1b8] sm:$0xff]
    %v2637 = vld [vmem:[#allocation2 + $0x1c0] sm:$0xff]
    %v2638 = vld [vmem:[#allocation2 + $0x1c8] sm:$0xff]
    %v2639 = vld [vmem:[#allocation2 + $0x1d0] sm:$0xff]
    %v2640 = vld [vmem:[%s3 + $0xe] sm:$0x1]
    %v2641 = vlaneseq
    %v2642 = vshrl.u32 %v2641, 7
    %v2643 = vsub.s32 0, %v2642
    %v2644 = vrot.slane %v2640, %v2643
    %2645 = vmatprep.subr.mxu0 0.0
    %2646 = vmatpush1.msra.mxu0 %v2636
    %2647 = vmatprep.subr.mxu0 0.0
    %2648 = vmatpush1.msra.mxu0 %v2637
    %2649 = vmatprep.subr.mxu0 0.0
    %2650 = vmatpush1.msra.mxu0 %v2638
    %2651 = vmatprep.subr.mxu0 0.0
    %2652 = vmatpush1.msra.mxu0 %v2639
    %2653 = vmatprep.subr.mxu0 0.0
    %2654 = vmatpush1.msra.mxu0 0.0
    %2655 = vmatprep.subr.mxu0 0.0
    %2656 = vmatpush1.msra.mxu0 0.0
    %2657 = vmatprep.subr.mxu0 0.0
    %2658 = vmatpush1.msra.mxu0 0.0
    %2659 = vmatprep.subr.mxu0 0.0
    %2660 = vmatpush1.msra.mxu0 0.0
    %2661 = vmatprep.subr.mxu0 0.0
    %2662 = vmatpush1.msra.mxu0 0.0
    %2663 = vmatprep.subr.mxu0 0.0
    %2664 = vmatpush1.msra.mxu0 0.0
    %2665 = vmatprep.subr.mxu0 0.0
    %2666 = vmatpush1.msra.mxu0 0.0
    %2667 = vmatprep.subr.mxu0 0.0
    %2668 = vmatpush1.msra.mxu0 0.0
    %2669 = vmatprep.subr.mxu0 0.0
    %2670 = vmatpush1.msra.mxu0 0.0
    %2671 = vmatprep.subr.mxu0 0.0
    %2672 = vmatpush1.msra.mxu0 0.0
    %2673 = vmatprep.subr.mxu0 0.0
    %2674 = vmatpush1.msra.mxu0 0.0
    %2675 = vmatprep.subr.mxu0 0.0
    %2676 = vmatpush1.msra.mxu0 0.0
    %2677 = vmatprep.subr.mxu0 0.0
    %2678 = vmatpush1.msra.mxu0 0.0
    %2679 = vmatprep.subr.mxu0 0.0
    %2680 = vmatpush1.msra.mxu0 0.0
    %2681 = vmatprep.subr.mxu0 0.0
    %2682 = vmatpush1.msra.mxu0 0.0
    %2683 = vmatprep.subr.mxu0 0.0
    %2684 = vmatpush1.msra.mxu0 0.0
    %2685 = vmatprep.subr.mxu0 0.0
    %2686 = vmatpush1.msra.mxu0 0.0
    %2687 = vmatprep.subr.mxu0 0.0
    %2688 = vmatpush1.msra.mxu0 0.0
    %2689 = vmatprep.subr.mxu0 0.0
    %2690 = vmatpush1.msra.mxu0 0.0
    %2691 = vmatprep.subr.mxu0 0.0
    %2692 = vmatpush1.msra.mxu0 0.0
    %2693 = vmatprep.subr.mxu0 0.0
    %2694 = vmatpush1.msra.mxu0 0.0
    %2695 = vmatprep.subr.mxu0 0.0
    %2696 = vmatpush1.msra.mxu0 0.0
    %2697 = vmatprep.subr.mxu0 0.0
    %2698 = vmatpush1.msra.mxu0 0.0
    %2699 = vmatprep.subr.mxu0 0.0
    %2700 = vmatpush1.msra.mxu0 0.0
    %2701 = vmatprep.subr.mxu0 0.0
    %2702 = vmatpush1.msra.mxu0 0.0
    %2703 = vmatprep.subr.mxu0 0.0
    %2704 = vmatpush1.msra.mxu0 0.0
    %2705 = vmatprep.subr.mxu0 0.0
    %2706 = vmatpush1.msra.mxu0 0.0
    %2707 = vmatprep.subr.mxu0 0.0
    %2708 = vmatpush1.msra.mxu0 0.0
    %2709 = vmatprep.mubr.f32.mxu0 0.0
    %2710 = vmatmul.mubr.f32.gmra.mrb[0].mxu0 %v2472
    %v2711 = vpop.f32.mrb[0].mxu0
    %v2712 = vadd.f32 %v2644, %v2711
    %v2713 = vpop.f32.mrb[0].mxu0
    %2714 = vmatprep.mubr.f32.mxu0 0.0
    %2715 = vmatmul.mubr.f32.gmra.mrb[0].mxu0 %v2475
    %v2716 = vpop.f32.mrb[0].mxu0
    %v2717 = vadd.f32 %v2644, %v2716
    %v2718 = vpop.f32.mrb[0].mxu0
    %2719 = vdwg.mxu0
    %v2720 = vld [vmem:[#allocation2 + $0x1d8] sm:$0xff]
    %v2721 = vld [vmem:[#allocation2 + $0x1e0] sm:$0xff]
    %v2722 = vld [vmem:[#allocation2 + $0x1e8] sm:$0xff]
    %v2723 = vld [vmem:[#allocation2 + $0x1f0] sm:$0xff]
    %v2725 = vsel %vm501, %v2544, 0
    %v2728 = vsel %vm501, %v2628, 0
    %2730 = vmatprep.subr.mxu0 0.0
    %2731 = vmatpush1.xpose.msra.mxu0 %v2728
    %2732 = vmatprep.subr.mxu0 0.0
    %2733 = vmatpush1.xpose.msra.mxu0 0.0
    %2734 = vmatprep.subr.mxu0 0.0
    %2735 = vmatpush1.xpose.msra.mxu0 0.0
    %2736 = vmatprep.subr.mxu0 0.0
    %2737 = vmatpush1.xpose.msra.mxu0 0.0
    %2738 = vmatprep.subr.mxu0 0.0
    %2739 = vmatpush1.xpose.msra.mxu0 0.0
    %2740 = vmatprep.subr.mxu0 0.0
    %2741 = vmatpush1.xpose.msra.mxu0 0.0
    %2742 = vmatprep.subr.mxu0 0.0
    %2743 = vmatpush1.xpose.msra.mxu0 0.0
    %2744 = vmatprep.subr.mxu0 0.0
    %2745 = vmatpush1.xpose.msra.mxu0 0.0
    %2746 = vmatprep.subr.mxu0 0.0
    %2747 = vmatpush1.xpose.msra.mxu0 0.0
    %2748 = vmatprep.subr.mxu0 0.0
    %2749 = vmatpush1.xpose.msra.mxu0 0.0
    %2750 = vmatprep.subr.mxu0 0.0
    %2751 = vmatpush1.xpose.msra.mxu0 0.0
    %2752 = vmatprep.subr.mxu0 0.0
    %2753 = vmatpush1.xpose.msra.mxu0 0.0
    %2754 = vmatprep.subr.mxu0 0.0
    %2755 = vmatpush1.xpose.msra.mxu0 0.0
    %2756 = vmatprep.subr.mxu0 0.0
    %2757 = vmatpush1.xpose.msra.mxu0 0.0
    %2758 = vmatprep.subr.mxu0 0.0
    %2759 = vmatpush1.xpose.msra.mxu0 0.0
    %2760 = vmatprep.subr.mxu0 0.0
    %2761 = vmatpush1.xpose.msra.mxu0 0.0
    %2762 = vmatprep.subr.mxu0 0.0
    %2763 = vmatpush1.xpose.msra.mxu0 0.0
    %2764 = vmatprep.subr.mxu0 0.0
    %2765 = vmatpush1.xpose.msra.mxu0 0.0
    %2766 = vmatprep.subr.mxu0 0.0
    %2767 = vmatpush1.xpose.msra.mxu0 0.0
    %2768 = vmatprep.subr.mxu0 0.0
    %2769 = vmatpush1.xpose.msra.mxu0 0.0
    %2770 = vmatprep.subr.mxu0 0.0
    %2771 = vmatpush1.xpose.msra.mxu0 0.0
    %2772 = vmatprep.subr.mxu0 0.0
    %2773 = vmatpush1.xpose.msra.mxu0 0.0
    %2774 = vmatprep.subr.mxu0 0.0
    %2775 = vmatpush1.xpose.msra.mxu0 0.0
    %2776 = vmatprep.subr.mxu0 0.0
    %2777 = vmatpush1.xpose.msra.mxu0 0.0
    %2778 = vmatprep.subr.mxu0 0.0
    %2779 = vmatpush1.xpose.msra.mxu0 0.0
    %2780 = vmatprep.subr.mxu0 0.0
    %2781 = vmatpush1.xpose.msra.mxu0 0.0
    %2782 = vmatprep.subr.mxu0 0.0
    %2783 = vmatpush1.xpose.msra.mxu0 0.0
    %2784 = vmatprep.subr.mxu0 0.0
    %2785 = vmatpush1.xpose.msra.mxu0 0.0
    %2786 = vmatprep.subr.mxu0 0.0
    %2787 = vmatpush1.xpose.msra.mxu0 0.0
    %2788 = vmatprep.subr.mxu0 0.0
    %2789 = vmatpush1.xpose.msra.mxu0 0.0
    %2790 = vmatprep.subr.mxu0 0.0
    %2791 = vmatpush1.xpose.msra.mxu0 0.0
    %2792 = vmatprep.subr.mxu0 0.0
    %2793 = vmatpush1.xpose.msra.mxu0 0.0
    %2794 = vmatprep.mubr.f32.mxu0 0.0
    %2795 = vmatmul.mubr.f32.gmra.mrb[0].mxu0 %v2725
    %v2796 = vpop.f32.mrb[0].mxu0
    %v2797 = vadd.f32 0.0, %v2796
    %v2798 = vpop.f32.mrb[0].mxu0
    %2799 = vdwg.mxu0
    %v2801 = vsel %vm501, %v2549, 0
    %v2804 = vsel %vm501, %v2633, 0
    %2806 = vmatprep.subr.mxu0 0.0
    %2807 = vmatpush1.xpose.msra.mxu0 %v2804
    %2808 = vmatprep.subr.mxu0 0.0
    %2809 = vmatpush1.xpose.msra.mxu0 0.0
    %2810 = vmatprep.subr.mxu0 0.0
    %2811 = vmatpush1.xpose.msra.mxu0 0.0
    %2812 = vmatprep.subr.mxu0 0.0
    %2813 = vmatpush1.xpose.msra.mxu0 0.0
    %2814 = vmatprep.subr.mxu0 0.0
    %2815 = vmatpush1.xpose.msra.mxu0 0.0
    %2816 = vmatprep.subr.mxu0 0.0
    %2817 = vmatpush1.xpose.msra.mxu0 0.0
    %2818 = vmatprep.subr.mxu0 0.0
    %2819 = vmatpush1.xpose.msra.mxu0 0.0
    %2820 = vmatprep.subr.mxu0 0.0
    %2821 = vmatpush1.xpose.msra.mxu0 0.0
    %2822 = vmatprep.subr.mxu0 0.0
    %2823 = vmatpush1.xpose.msra.mxu0 0.0
    %2824 = vmatprep.subr.mxu0 0.0
    %2825 = vmatpush1.xpose.msra.mxu0 0.0
    %2826 = vmatprep.subr.mxu0 0.0
    %2827 = vmatpush1.xpose.msra.mxu0 0.0
    %2828 = vmatprep.subr.mxu0 0.0
    %2829 = vmatpush1.xpose.msra.mxu0 0.0
    %2830 = vmatprep.subr.mxu0 0.0
    %2831 = vmatpush1.xpose.msra.mxu0 0.0
    %2832 = vmatprep.subr.mxu0 0.0
    %2833 = vmatpush1.xpose.msra.mxu0 0.0
    %2834 = vmatprep.subr.mxu0 0.0
    %2835 = vmatpush1.xpose.msra.mxu0 0.0
    %2836 = vmatprep.subr.mxu0 0.0
    %2837 = vmatpush1.xpose.msra.mxu0 0.0
    %2838 = vmatprep.subr.mxu0 0.0
    %2839 = vmatpush1.xpose.msra.mxu0 0.0
    %2840 = vmatprep.subr.mxu0 0.0
    %2841 = vmatpush1.xpose.msra.mxu0 0.0
    %2842 = vmatprep.subr.mxu0 0.0
    %2843 = vmatpush1.xpose.msra.mxu0 0.0
    %2844 = vmatprep.subr.mxu0 0.0
    %2845 = vmatpush1.xpose.msra.mxu0 0.0
    %2846 = vmatprep.subr.mxu0 0.0
    %2847 = vmatpush1.xpose.msra.mxu0 0.0
    %2848 = vmatprep.subr.mxu0 0.0
    %2849 = vmatpush1.xpose.msra.mxu0 0.0
    %2850 = vmatprep.subr.mxu0 0.0
    %2851 = vmatpush1.xpose.msra.mxu0 0.0
    %2852 = vmatprep.subr.mxu0 0.0
    %2853 = vmatpush1.xpose.msra.mxu0 0.0
    %2854 = vmatprep.subr.mxu0 0.0
    %2855 = vmatpush1.xpose.msra.mxu0 0.0
    %2856 = vmatprep.subr.mxu0 0.0
    %2857 = vmatpush1.xpose.msra.mxu0 0.0
    %2858 = vmatprep.subr.mxu0 0.0
    %2859 = vmatpush1.xpose.msra.mxu0 0.0
    %2860 = vmatprep.subr.mxu0 0.0
    %2861 = vmatpush1.xpose.msra.mxu0 0.0
    %2862 = vmatprep.subr.mxu0 0.0
    %2863 = vmatpush1.xpose.msra.mxu0 0.0
    %2864 = vmatprep.subr.mxu0 0.0
    %2865 = vmatpush1.xpose.msra.mxu0 0.0
    %2866 = vmatprep.subr.mxu0 0.0
    %2867 = vmatpush1.xpose.msra.mxu0 0.0
    %2868 = vmatprep.subr.mxu0 0.0
    %2869 = vmatpush1.xpose.msra.mxu0 0.0
    %2870 = vmatprep.mubr.f32.mxu0 0.0
    %2871 = vmatmul.mubr.f32.gmra.mrb[0].mxu0 %v2801
    %v2872 = vpop.f32.mrb[0].mxu0
    %v2873 = vadd.f32 0.0, %v2872
    %v2874 = vpop.f32.mrb[0].mxu0
    %2875 = vdwg.mxu0
    %v2876 = vmul.f32 %v2797, 0.35355338
    %v2877 = vmul.f32 %v2873, 0.35355338
    %v2878 = vadd.f32 %v2876, %v659
    %v2879 = vadd.f32 %v2877, %v663
    %v2880 = vsel %vm501, %v2878, -inf
    %2881 = vmax.xlane.f32.xlu0 %v2880
    %v2882 = vpop.xlane.xlu0 %2881
    %v2883 = vsel %vm501, %v2879, -inf
    %2884 = vmax.xlane.f32.xlu0 %v2883
    %v2885 = vpop.xlane.xlu0 %2884
    %v2886 = vsub.f32 %v2878, %v2882
    %v2887 = vsub.f32 %v2879, %v2885
    %v2888 = vmul.f32 %v2886, 1.442695
    %v2889 = vpow.pop %v2888
    %v2890 = vmul.f32 %v2887, 1.442695
    %v2891 = vpow.pop %v2890
    %v2892 = vsel %vm501, %v2889, 0.0
    %2893 = vadd.xlane.f32.xlu0 %v2892
    %v2894 = vpop.xlane.xlu0 %2893
    %v2895 = vsel %vm501, %v2891, 0.0
    %2896 = vadd.xlane.f32.xlu0 %v2895
    %v2897 = vpop.xlane.xlu0 %2896
    %v2898 = vrcp.pop %v2894
    %v2899 = vrcp.pop %v2897
    %v2900 = vmul.f32 %v2889, %v2898
    %v2901 = vmul.f32 %v2891, %v2899
    %v2903 = vsel %vm501, %v2900, 0
    %2905 = vmatprep.subr.mxu0 0.0
    %2906 = vmatpush1.msra.mxu0 %v2712
    %2907 = vmatprep.subr.mxu0 0.0
    %2908 = vmatpush1.msra.mxu0 0.0
    %2909 = vmatprep.subr.mxu0 0.0
    %2910 = vmatpush1.msra.mxu0 0.0
    %2911 = vmatprep.subr.mxu0 0.0
    %2912 = vmatpush1.msra.mxu0 0.0
    %2913 = vmatprep.subr.mxu0 0.0
    %2914 = vmatpush1.msra.mxu0 0.0
    %2915 = vmatprep.subr.mxu0 0.0
    %2916 = vmatpush1.msra.mxu0 0.0
    %2917 = vmatprep.subr.mxu0 0.0
    %2918 = vmatpush1.msra.mxu0 0.0
    %2919 = vmatprep.subr.mxu0 0.0
    %2920 = vmatpush1.msra.mxu0 0.0
    %2921 = vmatprep.subr.mxu0 0.0
    %2922 = vmatpush1.msra.mxu0 0.0
    %2923 = vmatprep.subr.mxu0 0.0
    %2924 = vmatpush1.msra.mxu0 0.0
    %2925 = vmatprep.subr.mxu0 0.0
    %2926 = vmatpush1.msra.mxu0 0.0
    %2927 = vmatprep.subr.mxu0 0.0
    %2928 = vmatpush1.msra.mxu0 0.0
    %2929 = vmatprep.subr.mxu0 0.0
    %2930 = vmatpush1.msra.mxu0 0.0
    %2931 = vmatprep.subr.mxu0 0.0
    %2932 = vmatpush1.msra.mxu0 0.0
    %2933 = vmatprep.subr.mxu0 0.0
    %2934 = vmatpush1.msra.mxu0 0.0
    %2935 = vmatprep.subr.mxu0 0.0
    %2936 = vmatpush1.msra.mxu0 0.0
    %2937 = vmatprep.subr.mxu0 0.0
    %2938 = vmatpush1.msra.mxu0 0.0
    %2939 = vmatprep.subr.mxu0 0.0
    %2940 = vmatpush1.msra.mxu0 0.0
    %2941 = vmatprep.subr.mxu0 0.0
    %2942 = vmatpush1.msra.mxu0 0.0
    %2943 = vmatprep.subr.mxu0 0.0
    %2944 = vmatpush1.msra.mxu0 0.0
    %2945 = vmatprep.subr.mxu0 0.0
    %2946 = vmatpush1.msra.mxu0 0.0
    %2947 = vmatprep.subr.mxu0 0.0
    %2948 = vmatpush1.msra.mxu0 0.0
    %2949 = vmatprep.subr.mxu0 0.0
    %2950 = vmatpush1.msra.mxu0 0.0
    %2951 = vmatprep.subr.mxu0 0.0
    %2952 = vmatpush1.msra.mxu0 0.0
    %2953 = vmatprep.subr.mxu0 0.0
    %2954 = vmatpush1.msra.mxu0 0.0
    %2955 = vmatprep.subr.mxu0 0.0
    %2956 = vmatpush1.msra.mxu0 0.0
    %2957 = vmatprep.subr.mxu0 0.0
    %2958 = vmatpush1.msra.mxu0 0.0
    %2959 = vmatprep.subr.mxu0 0.0
    %2960 = vmatpush1.msra.mxu0 0.0
    %2961 = vmatprep.subr.mxu0 0.0
    %2962 = vmatpush1.msra.mxu0 0.0
    %2963 = vmatprep.subr.mxu0 0.0
    %2964 = vmatpush1.msra.mxu0 0.0
    %2965 = vmatprep.subr.mxu0 0.0
    %2966 = vmatpush1.msra.mxu0 0.0
    %2967 = vmatprep.subr.mxu0 0.0
    %2968 = vmatpush1.msra.mxu0 0.0
    %2969 = vmatprep.mubr.f32.mxu0 0.0
    %2970 = vmatmul.mubr.f32.gmra.mrb[0].mxu0 %v2903
    %v2971 = vpop.f32.mrb[0].mxu0
    %v2972 = vadd.f32 0.0, %v2971
    %v2973 = vpop.f32.mrb[0].mxu0
    %2974 = vdwg.mxu0
    %v2976 = vsel %vm501, %v2901, 0
    %2978 = vmatprep.subr.mxu0 0.0
    %2979 = vmatpush1.msra.mxu0 %v2717
    %2980 = vmatprep.subr.mxu0 0.0
    %2981 = vmatpush1.msra.mxu0 0.0
    %2982 = vmatprep.subr.mxu0 0.0
    %2983 = vmatpush1.msra.mxu0 0.0
    %2984 = vmatprep.subr.mxu0 0.0
    %2985 = vmatpush1.msra.mxu0 0.0
    %2986 = vmatprep.subr.mxu0 0.0
    %2987 = vmatpush1.msra.mxu0 0.0
    %2988 = vmatprep.subr.mxu0 0.0
    %2989 = vmatpush1.msra.mxu0 0.0
    %2990 = vmatprep.subr.mxu0 0.0
    %2991 = vmatpush1.msra.mxu0 0.0
    %2992 = vmatprep.subr.mxu0 0.0
    %2993 = vmatpush1.msra.mxu0 0.0
    %2994 = vmatprep.subr.mxu0 0.0
    %2995 = vmatpush1.msra.mxu0 0.0
    %2996 = vmatprep.subr.mxu0 0.0
    %2997 = vmatpush1.msra.mxu0 0.0
    %2998 = vmatprep.subr.mxu0 0.0
    %2999 = vmatpush1.msra.mxu0 0.0
    %3000 = vmatprep.subr.mxu0 0.0
    %3001 = vmatpush1.msra.mxu0 0.0
    %3002 = vmatprep.subr.mxu0 0.0
    %3003 = vmatpush1.msra.mxu0 0.0
    %3004 = vmatprep.subr.mxu0 0.0
    %3005 = vmatpush1.msra.mxu0 0.0
    %3006 = vmatprep.subr.mxu0 0.0
    %3007 = vmatpush1.msra.mxu0 0.0
    %3008 = vmatprep.subr.mxu0 0.0
    %3009 = vmatpush1.msra.mxu0 0.0
    %3010 = vmatprep.subr.mxu0 0.0
    %3011 = vmatpush1.msra.mxu0 0.0
    %3012 = vmatprep.subr.mxu0 0.0
    %3013 = vmatpush1.msra.mxu0 0.0
    %3014 = vmatprep.subr.mxu0 0.0
    %3015 = vmatpush1.msra.mxu0 0.0
    %3016 = vmatprep.subr.mxu0 0.0
    %3017 = vmatpush1.msra.mxu0 0.0
    %3018 = vmatprep.subr.mxu0 0.0
    %3019 = vmatpush1.msra.mxu0 0.0
    %3020 = vmatprep.subr.mxu0 0.0
    %3021 = vmatpush1.msra.mxu0 0.0
    %3022 = vmatprep.subr.mxu0 0.0
    %3023 = vmatpush1.msra.mxu0 0.0
    %3024 = vmatprep.subr.mxu0 0.0
    %3025 = vmatpush1.msra.mxu0 0.0
    %3026 = vmatprep.subr.mxu0 0.0
    %3027 = vmatpush1.msra.mxu0 0.0
    %3028 = vmatprep.subr.mxu0 0.0
    %3029 = vmatpush1.msra.mxu0 0.0
    %3030 = vmatprep.subr.mxu0 0.0
    %3031 = vmatpush1.msra.mxu0 0.0
    %3032 = vmatprep.subr.mxu0 0.0
    %3033 = vmatpush1.msra.mxu0 0.0
    %3034 = vmatprep.subr.mxu0 0.0
    %3035 = vmatpush1.msra.mxu0 0.0
    %3036 = vmatprep.subr.mxu0 0.0
    %3037 = vmatpush1.msra.mxu0 0.0
    %3038 = vmatprep.subr.mxu0 0.0
    %3039 = vmatpush1.msra.mxu0 0.0
    %3040 = vmatprep.subr.mxu0 0.0
    %3041 = vmatpush1.msra.mxu0 0.0
    %3042 = vmatprep.mubr.f32.mxu0 0.0
    %3043 = vmatmul.mubr.f32.gmra.mrb[0].mxu0 %v2976
    %v3044 = vpop.f32.mrb[0].mxu0
    %v3045 = vadd.f32 0.0, %v3044
    %v3046 = vpop.f32.mrb[0].mxu0
    %3047 = vdwg.mxu0
    %3048 = vrot.lane.b32.xlu0 %v2544, 120
    %v3049 = vpop.permute.xlu0 %3048
    %3050 = vrot.lane.b32.xlu0 %v2628, 120
    %v3051 = vpop.permute.xlu0 %3050
    %v3052 = vsel %vm501, %v3049, 0
    %v3054 = vsel %vm501, %v3051, 0
    %3056 = vmatprep.subr.mxu0 0.0
    %3057 = vmatpush1.xpose.msra.mxu0 %v3054
    %3058 = vmatprep.subr.mxu0 0.0
    %3059 = vmatpush1.xpose.msra.mxu0 0.0
    %3060 = vmatprep.subr.mxu0 0.0
    %3061 = vmatpush1.xpose.msra.mxu0 0.0
    %3062 = vmatprep.subr.mxu0 0.0
    %3063 = vmatpush1.xpose.msra.mxu0 0.0
    %3064 = vmatprep.subr.mxu0 0.0
    %3065 = vmatpush1.xpose.msra.mxu0 0.0
    %3066 = vmatprep.subr.mxu0 0.0
    %3067 = vmatpush1.xpose.msra.mxu0 0.0
    %3068 = vmatprep.subr.mxu0 0.0
    %3069 = vmatpush1.xpose.msra.mxu0 0.0
    %3070 = vmatprep.subr.mxu0 0.0
    %3071 = vmatpush1.xpose.msra.mxu0 0.0
    %3072 = vmatprep.subr.mxu0 0.0
    %3073 = vmatpush1.xpose.msra.mxu0 0.0
    %3074 = vmatprep.subr.mxu0 0.0
    %3075 = vmatpush1.xpose.msra.mxu0 0.0
    %3076 = vmatprep.subr.mxu0 0.0
    %3077 = vmatpush1.xpose.msra.mxu0 0.0
    %3078 = vmatprep.subr.mxu0 0.0
    %3079 = vmatpush1.xpose.msra.mxu0 0.0
    %3080 = vmatprep.subr.mxu0 0.0
    %3081 = vmatpush1.xpose.msra.mxu0 0.0
    %3082 = vmatprep.subr.mxu0 0.0
    %3083 = vmatpush1.xpose.msra.mxu0 0.0
    %3084 = vmatprep.subr.mxu0 0.0
    %3085 = vmatpush1.xpose.msra.mxu0 0.0
    %3086 = vmatprep.subr.mxu0 0.0
    %3087 = vmatpush1.xpose.msra.mxu0 0.0
    %3088 = vmatprep.subr.mxu0 0.0
    %3089 = vmatpush1.xpose.msra.mxu0 0.0
    %3090 = vmatprep.subr.mxu0 0.0
    %3091 = vmatpush1.xpose.msra.mxu0 0.0
    %3092 = vmatprep.subr.mxu0 0.0
    %3093 = vmatpush1.xpose.msra.mxu0 0.0
    %3094 = vmatprep.subr.mxu0 0.0
    %3095 = vmatpush1.xpose.msra.mxu0 0.0
    %3096 = vmatprep.subr.mxu0 0.0
    %3097 = vmatpush1.xpose.msra.mxu0 0.0
    %3098 = vmatprep.subr.mxu0 0.0
    %3099 = vmatpush1.xpose.msra.mxu0 0.0
    %3100 = vmatprep.subr.mxu0 0.0
    %3101 = vmatpush1.xpose.msra.mxu0 0.0
    %3102 = vmatprep.subr.mxu0 0.0
    %3103 = vmatpush1.xpose.msra.mxu0 0.0
    %3104 = vmatprep.subr.mxu0 0.0
    %3105 = vmatpush1.xpose.msra.mxu0 0.0
    %3106 = vmatprep.subr.mxu0 0.0
    %3107 = vmatpush1.xpose.msra.mxu0 0.0
    %3108 = vmatprep.subr.mxu0 0.0
    %3109 = vmatpush1.xpose.msra.mxu0 0.0
    %3110 = vmatprep.subr.mxu0 0.0
    %3111 = vmatpush1.xpose.msra.mxu0 0.0
    %3112 = vmatprep.subr.mxu0 0.0
    %3113 = vmatpush1.xpose.msra.mxu0 0.0
    %3114 = vmatprep.subr.mxu0 0.0
    %3115 = vmatpush1.xpose.msra.mxu0 0.0
    %3116 = vmatprep.subr.mxu0 0.0
    %3117 = vmatpush1.xpose.msra.mxu0 0.0
    %3118 = vmatprep.subr.mxu0 0.0
    %3119 = vmatpush1.xpose.msra.mxu0 0.0
    %3120 = vmatprep.mubr.f32.mxu0 0.0
    %3121 = vmatmul.mubr.f32.gmra.mrb[0].mxu0 %v3052
    %v3122 = vpop.f32.mrb[0].mxu0
    %v3123 = vadd.f32 0.0, %v3122
    %v3124 = vpop.f32.mrb[0].mxu0
    %3125 = vdwg.mxu0
    %3126 = vrot.lane.b32.xlu0 %v2549, 120
    %v3127 = vpop.permute.xlu0 %3126
    %3128 = vrot.lane.b32.xlu0 %v2633, 120
    %v3129 = vpop.permute.xlu0 %3128
    %v3130 = vsel %vm501, %v3127, 0
    %v3132 = vsel %vm501, %v3129, 0
    %3134 = vmatprep.subr.mxu0 0.0
    %3135 = vmatpush1.xpose.msra.mxu0 %v3132
    %3136 = vmatprep.subr.mxu0 0.0
    %3137 = vmatpush1.xpose.msra.mxu0 0.0
    %3138 = vmatprep.subr.mxu0 0.0
    %3139 = vmatpush1.xpose.msra.mxu0 0.0
    %3140 = vmatprep.subr.mxu0 0.0
    %3141 = vmatpush1.xpose.msra.mxu0 0.0
    %3142 = vmatprep.subr.mxu0 0.0
    %3143 = vmatpush1.xpose.msra.mxu0 0.0
    %3144 = vmatprep.subr.mxu0 0.0
    %3145 = vmatpush1.xpose.msra.mxu0 0.0
    %3146 = vmatprep.subr.mxu0 0.0
    %3147 = vmatpush1.xpose.msra.mxu0 0.0
    %3148 = vmatprep.subr.mxu0 0.0
    %3149 = vmatpush1.xpose.msra.mxu0 0.0
    %3150 = vmatprep.subr.mxu0 0.0
    %3151 = vmatpush1.xpose.msra.mxu0 0.0
    %3152 = vmatprep.subr.mxu0 0.0
    %3153 = vmatpush1.xpose.msra.mxu0 0.0
    %3154 = vmatprep.subr.mxu0 0.0
    %3155 = vmatpush1.xpose.msra.mxu0 0.0
    %3156 = vmatprep.subr.mxu0 0.0
    %3157 = vmatpush1.xpose.msra.mxu0 0.0
    %3158 = vmatprep.subr.mxu0 0.0
    %3159 = vmatpush1.xpose.msra.mxu0 0.0
    %3160 = vmatprep.subr.mxu0 0.0
    %3161 = vmatpush1.xpose.msra.mxu0 0.0
    %3162 = vmatprep.subr.mxu0 0.0
    %3163 = vmatpush1.xpose.msra.mxu0 0.0
    %3164 = vmatprep.subr.mxu0 0.0
    %3165 = vmatpush1.xpose.msra.mxu0 0.0
    %3166 = vmatprep.subr.mxu0 0.0
    %3167 = vmatpush1.xpose.msra.mxu0 0.0
    %3168 = vmatprep.subr.mxu0 0.0
    %3169 = vmatpush1.xpose.msra.mxu0 0.0
    %3170 = vmatprep.subr.mxu0 0.0
    %3171 = vmatpush1.xpose.msra.mxu0 0.0
    %3172 = vmatprep.subr.mxu0 0.0
    %3173 = vmatpush1.xpose.msra.mxu0 0.0
    %3174 = vmatprep.subr.mxu0 0.0
    %3175 = vmatpush1.xpose.msra.mxu0 0.0
    %3176 = vmatprep.subr.mxu0 0.0
    %3177 = vmatpush1.xpose.msra.mxu0 0.0
    %3178 = vmatprep.subr.mxu0 0.0
    %3179 = vmatpush1.xpose.msra.mxu0 0.0
    %3180 = vmatprep.subr.mxu0 0.0
    %3181 = vmatpush1.xpose.msra.mxu0 0.0
    %3182 = vmatprep.subr.mxu0 0.0
    %3183 = vmatpush1.xpose.msra.mxu0 0.0
    %3184 = vmatprep.subr.mxu0 0.0
    %3185 = vmatpush1.xpose.msra.mxu0 0.0
    %3186 = vmatprep.subr.mxu0 0.0
    %3187 = vmatpush1.xpose.msra.mxu0 0.0
    %3188 = vmatprep.subr.mxu0 0.0
    %3189 = vmatpush1.xpose.msra.mxu0 0.0
    %3190 = vmatprep.subr.mxu0 0.0
    %3191 = vmatpush1.xpose.msra.mxu0 0.0
    %3192 = vmatprep.subr.mxu0 0.0
    %3193 = vmatpush1.xpose.msra.mxu0 0.0
    %3194 = vmatprep.subr.mxu0 0.0
    %3195 = vmatpush1.xpose.msra.mxu0 0.0
    %3196 = vmatprep.subr.mxu0 0.0
    %3197 = vmatpush1.xpose.msra.mxu0 0.0
    %3198 = vmatprep.mubr.f32.mxu0 0.0
    %3199 = vmatmul.mubr.f32.gmra.mrb[0].mxu0 %v3130
    %v3200 = vpop.f32.mrb[0].mxu0
    %v3201 = vadd.f32 0.0, %v3200
    %v3202 = vpop.f32.mrb[0].mxu0
    %3203 = vdwg.mxu0
    %v3204 = vmul.f32 %v3123, 0.35355338
    %v3205 = vmul.f32 %v3201, 0.35355338
    %v3206 = vadd.f32 %v3204, %v659
    %v3207 = vadd.f32 %v3205, %v663
    %v3208 = vsel %vm501, %v3206, -inf
    %3209 = vmax.xlane.f32.xlu0 %v3208
    %v3210 = vpop.xlane.xlu0 %3209
    %v3211 = vsel %vm501, %v3207, -inf
    %3212 = vmax.xlane.f32.xlu0 %v3211
    %v3213 = vpop.xlane.xlu0 %3212
    %v3214 = vsub.f32 %v3206, %v3210
    %v3215 = vsub.f32 %v3207, %v3213
    %v3216 = vmul.f32 %v3214, 1.442695
    %v3217 = vpow.pop %v3216
    %v3218 = vmul.f32 %v3215, 1.442695
    %v3219 = vpow.pop %v3218
    %v3220 = vsel %vm501, %v3217, 0.0
    %3221 = vadd.xlane.f32.xlu0 %v3220
    %v3222 = vpop.xlane.xlu0 %3221
    %v3223 = vsel %vm501, %v3219, 0.0
    %3224 = vadd.xlane.f32.xlu0 %v3223
    %v3225 = vpop.xlane.xlu0 %3224
    %v3226 = vrcp.pop %v3222
    %v3227 = vrcp.pop %v3225
    %v3228 = vmul.f32 %v3217, %v3226
    %v3229 = vmul.f32 %v3219, %v3227
    %3231 = vrot.lane.b32.xlu0 %v2712, 120
    %v3232 = vpop.permute.xlu0 %3231
    %v3235 = vsel %vm501, %v3228, 0
    %3237 = vmatprep.subr.mxu0 0.0
    %3238 = vmatpush1.msra.mxu0 %v3232
    %3239 = vmatprep.subr.mxu0 0.0
    %3240 = vmatpush1.msra.mxu0 0.0
    %3241 = vmatprep.subr.mxu0 0.0
    %3242 = vmatpush1.msra.mxu0 0.0
    %3243 = vmatprep.subr.mxu0 0.0
    %3244 = vmatpush1.msra.mxu0 0.0
    %3245 = vmatprep.subr.mxu0 0.0
    %3246 = vmatpush1.msra.mxu0 0.0
    %3247 = vmatprep.subr.mxu0 0.0
    %3248 = vmatpush1.msra.mxu0 0.0
    %3249 = vmatprep.subr.mxu0 0.0
    %3250 = vmatpush1.msra.mxu0 0.0
    %3251 = vmatprep.subr.mxu0 0.0
    %3252 = vmatpush1.msra.mxu0 0.0
    %3253 = vmatprep.subr.mxu0 0.0
    %3254 = vmatpush1.msra.mxu0 0.0
    %3255 = vmatprep.subr.mxu0 0.0
    %3256 = vmatpush1.msra.mxu0 0.0
    %3257 = vmatprep.subr.mxu0 0.0
    %3258 = vmatpush1.msra.mxu0 0.0
    %3259 = vmatprep.subr.mxu0 0.0
    %3260 = vmatpush1.msra.mxu0 0.0
    %3261 = vmatprep.subr.mxu0 0.0
    %3262 = vmatpush1.msra.mxu0 0.0
    %3263 = vmatprep.subr.mxu0 0.0
    %3264 = vmatpush1.msra.mxu0 0.0
    %3265 = vmatprep.subr.mxu0 0.0
    %3266 = vmatpush1.msra.mxu0 0.0
    %3267 = vmatprep.subr.mxu0 0.0
    %3268 = vmatpush1.msra.mxu0 0.0
    %3269 = vmatprep.subr.mxu0 0.0
    %3270 = vmatpush1.msra.mxu0 0.0
    %3271 = vmatprep.subr.mxu0 0.0
    %3272 = vmatpush1.msra.mxu0 0.0
    %3273 = vmatprep.subr.mxu0 0.0
    %3274 = vmatpush1.msra.mxu0 0.0
    %3275 = vmatprep.subr.mxu0 0.0
    %3276 = vmatpush1.msra.mxu0 0.0
    %3277 = vmatprep.subr.mxu0 0.0
    %3278 = vmatpush1.msra.mxu0 0.0
    %3279 = vmatprep.subr.mxu0 0.0
    %3280 = vmatpush1.msra.mxu0 0.0
    %3281 = vmatprep.subr.mxu0 0.0
    %3282 = vmatpush1.msra.mxu0 0.0
    %3283 = vmatprep.subr.mxu0 0.0
    %3284 = vmatpush1.msra.mxu0 0.0
    %3285 = vmatprep.subr.mxu0 0.0
    %3286 = vmatpush1.msra.mxu0 0.0
    %3287 = vmatprep.subr.mxu0 0.0
    %3288 = vmatpush1.msra.mxu0 0.0
    %3289 = vmatprep.subr.mxu0 0.0
    %3290 = vmatpush1.msra.mxu0 0.0
    %3291 = vmatprep.subr.mxu0 0.0
    %3292 = vmatpush1.msra.mxu0 0.0
    %3293 = vmatprep.subr.mxu0 0.0
    %3294 = vmatpush1.msra.mxu0 0.0
    %3295 = vmatprep.subr.mxu0 0.0
    %3296 = vmatpush1.msra.mxu0 0.0
    %3297 = vmatprep.subr.mxu0 0.0
    %3298 = vmatpush1.msra.mxu0 0.0
    %3299 = vmatprep.subr.mxu0 0.0
    %3300 = vmatpush1.msra.mxu0 0.0
    %3301 = vmatprep.mubr.f32.mxu0 0.0
    %3302 = vmatmul.mubr.f32.gmra.mrb[0].mxu0 %v3235
    %v3303 = vpop.f32.mrb[0].mxu0
    %v3304 = vadd.f32 0.0, %v3303
    %v3305 = vpop.f32.mrb[0].mxu0
    %3306 = vdwg.mxu0
    %3308 = vrot.lane.b32.xlu0 %v2717, 120
    %v3309 = vpop.permute.xlu0 %3308
    %v3312 = vsel %vm501, %v3229, 0
    %3314 = vmatprep.subr.mxu0 0.0
    %3315 = vmatpush1.msra.mxu0 %v3309
    %3316 = vmatprep.subr.mxu0 0.0
    %3317 = vmatpush1.msra.mxu0 0.0
    %3318 = vmatprep.subr.mxu0 0.0
    %3319 = vmatpush1.msra.mxu0 0.0
    %3320 = vmatprep.subr.mxu0 0.0
    %3321 = vmatpush1.msra.mxu0 0.0
    %3322 = vmatprep.subr.mxu0 0.0
    %3323 = vmatpush1.msra.mxu0 0.0
    %3324 = vmatprep.subr.mxu0 0.0
    %3325 = vmatpush1.msra.mxu0 0.0
    %3326 = vmatprep.subr.mxu0 0.0
    %3327 = vmatpush1.msra.mxu0 0.0
    %3328 = vmatprep.subr.mxu0 0.0
    %3329 = vmatpush1.msra.mxu0 0.0
    %3330 = vmatprep.subr.mxu0 0.0
    %3331 = vmatpush1.msra.mxu0 0.0
    %3332 = vmatprep.subr.mxu0 0.0
    %3333 = vmatpush1.msra.mxu0 0.0
    %3334 = vmatprep.subr.mxu0 0.0
    %3335 = vmatpush1.msra.mxu0 0.0
    %3336 = vmatprep.subr.mxu0 0.0
    %3337 = vmatpush1.msra.mxu0 0.0
    %3338 = vmatprep.subr.mxu0 0.0
    %3339 = vmatpush1.msra.mxu0 0.0
    %3340 = vmatprep.subr.mxu0 0.0
    %3341 = vmatpush1.msra.mxu0 0.0
    %3342 = vmatprep.subr.mxu0 0.0
    %3343 = vmatpush1.msra.mxu0 0.0
    %3344 = vmatprep.subr.mxu0 0.0
    %3345 = vmatpush1.msra.mxu0 0.0
    %3346 = vmatprep.subr.mxu0 0.0
    %3347 = vmatpush1.msra.mxu0 0.0
    %3348 = vmatprep.subr.mxu0 0.0
    %3349 = vmatpush1.msra.mxu0 0.0
    %3350 = vmatprep.subr.mxu0 0.0
    %3351 = vmatpush1.msra.mxu0 0.0
    %3352 = vmatprep.subr.mxu0 0.0
    %3353 = vmatpush1.msra.mxu0 0.0
    %3354 = vmatprep.subr.mxu0 0.0
    %3355 = vmatpush1.msra.mxu0 0.0
    %3356 = vmatprep.subr.mxu0 0.0
    %3357 = vmatpush1.msra.mxu0 0.0
    %3358 = vmatprep.subr.mxu0 0.0
    %3359 = vmatpush1.msra.mxu0 0.0
    %3360 = vmatprep.subr.mxu0 0.0
    %3361 = vmatpush1.msra.mxu0 0.0
    %3362 = vmatprep.subr.mxu0 0.0
    %3363 = vmatpush1.msra.mxu0 0.0
    %3364 = vmatprep.subr.mxu0 0.0
    %3365 = vmatpush1.msra.mxu0 0.0
    %3366 = vmatprep.subr.mxu0 0.0
    %3367 = vmatpush1.msra.mxu0 0.0
    %3368 = vmatprep.subr.mxu0 0.0
    %3369 = vmatpush1.msra.mxu0 0.0
    %3370 = vmatprep.subr.mxu0 0.0
    %3371 = vmatpush1.msra.mxu0 0.0
    %3372 = vmatprep.subr.mxu0 0.0
    %3373 = vmatpush1.msra.mxu0 0.0
    %3374 = vmatprep.subr.mxu0 0.0
    %3375 = vmatpush1.msra.mxu0 0.0
    %3376 = vmatprep.subr.mxu0 0.0
    %3377 = vmatpush1.msra.mxu0 0.0
    %3378 = vmatprep.mubr.f32.mxu0 0.0
    %3379 = vmatmul.mubr.f32.gmra.mrb[0].mxu0 %v3312
    %v3380 = vpop.f32.mrb[0].mxu0
    %v3381 = vadd.f32 0.0, %v3380
    %v3382 = vpop.f32.mrb[0].mxu0
    %3383 = vdwg.mxu0
    %v3385 = vsel %vm501, %v3304, 0
    %v3388 = vsel %vm501, %v3381, 0
    %3390 = vmatprep.subr.mxu0 0.0
    %3391 = vmatpush1.msra.mxu0 %v2721
    %3392 = vmatprep.subr.mxu0 0.0
    %3393 = vmatpush1.msra.mxu0 0.0
    %3394 = vmatprep.subr.mxu0 0.0
    %3395 = vmatpush1.msra.mxu0 0.0
    %3396 = vmatprep.subr.mxu0 0.0
    %3397 = vmatpush1.msra.mxu0 0.0
    %3398 = vmatprep.subr.mxu0 0.0
    %3399 = vmatpush1.msra.mxu0 0.0
    %3400 = vmatprep.subr.mxu0 0.0
    %3401 = vmatpush1.msra.mxu0 0.0
    %3402 = vmatprep.subr.mxu0 0.0
    %3403 = vmatpush1.msra.mxu0 0.0
    %3404 = vmatprep.subr.mxu0 0.0
    %3405 = vmatpush1.msra.mxu0 0.0
    %3406 = vmatprep.subr.mxu0 0.0
    %3407 = vmatpush1.msra.mxu0 0.0
    %3408 = vmatprep.subr.mxu0 0.0
    %3409 = vmatpush1.msra.mxu0 0.0
    %3410 = vmatprep.subr.mxu0 0.0
    %3411 = vmatpush1.msra.mxu0 0.0
    %3412 = vmatprep.subr.mxu0 0.0
    %3413 = vmatpush1.msra.mxu0 0.0
    %3414 = vmatprep.subr.mxu0 0.0
    %3415 = vmatpush1.msra.mxu0 0.0
    %3416 = vmatprep.subr.mxu0 0.0
    %3417 = vmatpush1.msra.mxu0 0.0
    %3418 = vmatprep.subr.mxu0 0.0
    %3419 = vmatpush1.msra.mxu0 0.0
    %3420 = vmatprep.subr.mxu0 0.0
    %3421 = vmatpush1.msra.mxu0 0.0
    %3422 = vmatprep.subr.mxu0 0.0
    %3423 = vmatpush1.msra.mxu0 0.0
    %3424 = vmatprep.subr.mxu0 0.0
    %3425 = vmatpush1.msra.mxu0 0.0
    %3426 = vmatprep.subr.mxu0 0.0
    %3427 = vmatpush1.msra.mxu0 0.0
    %3428 = vmatprep.subr.mxu0 0.0
    %3429 = vmatpush1.msra.mxu0 0.0
    %3430 = vmatprep.subr.mxu0 0.0
    %3431 = vmatpush1.msra.mxu0 0.0
    %3432 = vmatprep.subr.mxu0 0.0
    %3433 = vmatpush1.msra.mxu0 0.0
    %3434 = vmatprep.subr.mxu0 0.0
    %3435 = vmatpush1.msra.mxu0 0.0
    %3436 = vmatprep.subr.mxu0 0.0
    %3437 = vmatpush1.msra.mxu0 0.0
    %3438 = vmatprep.subr.mxu0 0.0
    %3439 = vmatpush1.msra.mxu0 0.0
    %3440 = vmatprep.subr.mxu0 0.0
    %3441 = vmatpush1.msra.mxu0 0.0
    %3442 = vmatprep.subr.mxu0 0.0
    %3443 = vmatpush1.msra.mxu0 0.0
    %3444 = vmatprep.subr.mxu0 0.0
    %3445 = vmatpush1.msra.mxu0 0.0
    %3446 = vmatprep.subr.mxu0 0.0
    %3447 = vmatpush1.msra.mxu0 0.0
    %3448 = vmatprep.subr.mxu0 0.0
    %3449 = vmatpush1.msra.mxu0 0.0
    %3450 = vmatprep.subr.mxu0 0.0
    %3451 = vmatpush1.msra.mxu0 0.0
    %3452 = vmatprep.subr.mxu0 0.0
    %3453 = vmatpush1.msra.mxu0 0.0
    %3454 = vmatprep.mubr.f32.mxu0 0.0
    %3455 = vmatmul.mubr.f32.gmra.mrb[0].mxu0 %v3385
    %v3456 = vpop.f32.mrb[0].mxu0
    %v3457 = vadd.f32 0.0, %v3456
    %v3458 = vpop.f32.mrb[0].mxu0
    %3459 = vmatprep.mubr.f32.mxu0 0.0
    %3460 = vmatmul.mubr.f32.gmra.mrb[0].mxu0 %v3388
    %v3461 = vpop.f32.mrb[0].mxu0
    %v3462 = vadd.f32 0.0, %v3461
    %v3463 = vpop.f32.mrb[0].mxu0
    %3464 = vdwg.mxu0
    %v3466 = vsel %vm501, %v2972, 0
    %v3469 = vsel %vm501, %v3045, 0
    %3471 = vmatprep.subr.mxu0 0.0
    %3472 = vmatpush1.msra.mxu0 %v2720
    %3473 = vmatprep.subr.mxu0 0.0
    %3474 = vmatpush1.msra.mxu0 0.0
    %3475 = vmatprep.subr.mxu0 0.0
    %3476 = vmatpush1.msra.mxu0 0.0
    %3477 = vmatprep.subr.mxu0 0.0
    %3478 = vmatpush1.msra.mxu0 0.0
    %3479 = vmatprep.subr.mxu0 0.0
    %3480 = vmatpush1.msra.mxu0 0.0
    %3481 = vmatprep.subr.mxu0 0.0
    %3482 = vmatpush1.msra.mxu0 0.0
    %3483 = vmatprep.subr.mxu0 0.0
    %3484 = vmatpush1.msra.mxu0 0.0
    %3485 = vmatprep.subr.mxu0 0.0
    %3486 = vmatpush1.msra.mxu0 0.0
    %3487 = vmatprep.subr.mxu0 0.0
    %3488 = vmatpush1.msra.mxu0 0.0
    %3489 = vmatprep.subr.mxu0 0.0
    %3490 = vmatpush1.msra.mxu0 0.0
    %3491 = vmatprep.subr.mxu0 0.0
    %3492 = vmatpush1.msra.mxu0 0.0
    %3493 = vmatprep.subr.mxu0 0.0
    %3494 = vmatpush1.msra.mxu0 0.0
    %3495 = vmatprep.subr.mxu0 0.0
    %3496 = vmatpush1.msra.mxu0 0.0
    %3497 = vmatprep.subr.mxu0 0.0
    %3498 = vmatpush1.msra.mxu0 0.0
    %3499 = vmatprep.subr.mxu0 0.0
    %3500 = vmatpush1.msra.mxu0 0.0
    %3501 = vmatprep.subr.mxu0 0.0
    %3502 = vmatpush1.msra.mxu0 0.0
    %3503 = vmatprep.subr.mxu0 0.0
    %3504 = vmatpush1.msra.mxu0 0.0
    %3505 = vmatprep.subr.mxu0 0.0
    %3506 = vmatpush1.msra.mxu0 0.0
    %3507 = vmatprep.subr.mxu0 0.0
    %3508 = vmatpush1.msra.mxu0 0.0
    %3509 = vmatprep.subr.mxu0 0.0
    %3510 = vmatpush1.msra.mxu0 0.0
    %3511 = vmatprep.subr.mxu0 0.0
    %3512 = vmatpush1.msra.mxu0 0.0
    %3513 = vmatprep.subr.mxu0 0.0
    %3514 = vmatpush1.msra.mxu0 0.0
    %3515 = vmatprep.subr.mxu0 0.0
    %3516 = vmatpush1.msra.mxu0 0.0
    %3517 = vmatprep.subr.mxu0 0.0
    %3518 = vmatpush1.msra.mxu0 0.0
    %3519 = vmatprep.subr.mxu0 0.0
    %3520 = vmatpush1.msra.mxu0 0.0
    %3521 = vmatprep.subr.mxu0 0.0
    %3522 = vmatpush1.msra.mxu0 0.0
    %3523 = vmatprep.subr.mxu0 0.0
    %3524 = vmatpush1.msra.mxu0 0.0
    %3525 = vmatprep.subr.mxu0 0.0
    %3526 = vmatpush1.msra.mxu0 0.0
    %3527 = vmatprep.subr.mxu0 0.0
    %3528 = vmatpush1.msra.mxu0 0.0
    %3529 = vmatprep.subr.mxu0 0.0
    %3530 = vmatpush1.msra.mxu0 0.0
    %3531 = vmatprep.subr.mxu0 0.0
    %3532 = vmatpush1.msra.mxu0 0.0
    %3533 = vmatprep.subr.mxu0 0.0
    %3534 = vmatpush1.msra.mxu0 0.0
    %3535 = vmatprep.mubr.f32.mxu0 0.0
    %3536 = vmatmul.mubr.f32.gmra.mrb[0].mxu0 %v3466
    %v3537 = vpop.f32.mrb[0].mxu0
    %v3538 = vadd.f32 %v3457, %v3537
    %v3539 = vpop.f32.mrb[0].mxu0
    %3540 = vmatprep.mubr.f32.mxu0 0.0
    %3541 = vmatmul.mubr.f32.gmra.mrb[0].mxu0 %v3469
    %v3542 = vpop.f32.mrb[0].mxu0
    %v3543 = vadd.f32 %v3462, %v3542
    %v3544 = vpop.f32.mrb[0].mxu0
    %3545 = vdwg.mxu0
    %3546 = vrot.lane.b32.xlu0 %v2544, 112
    %v3547 = vpop.permute.xlu0 %3546
    %3548 = vrot.lane.b32.xlu0 %v2628, 112
    %v3549 = vpop.permute.xlu0 %3548
    %v3550 = vsel %vm501, %v3547, 0
    %v3552 = vsel %vm501, %v3549, 0
    %3554 = vmatprep.subr.mxu0 0.0
    %3555 = vmatpush1.xpose.msra.mxu0 %v3552
    %3556 = vmatprep.subr.mxu0 0.0
    %3557 = vmatpush1.xpose.msra.mxu0 0.0
    %3558 = vmatprep.subr.mxu0 0.0
    %3559 = vmatpush1.xpose.msra.mxu0 0.0
    %3560 = vmatprep.subr.mxu0 0.0
    %3561 = vmatpush1.xpose.msra.mxu0 0.0
    %3562 = vmatprep.subr.mxu0 0.0
    %3563 = vmatpush1.xpose.msra.mxu0 0.0
    %3564 = vmatprep.subr.mxu0 0.0
    %3565 = vmatpush1.xpose.msra.mxu0 0.0
    %3566 = vmatprep.subr.mxu0 0.0
    %3567 = vmatpush1.xpose.msra.mxu0 0.0
    %3568 = vmatprep.subr.mxu0 0.0
    %3569 = vmatpush1.xpose.msra.mxu0 0.0
    %3570 = vmatprep.subr.mxu0 0.0
    %3571 = vmatpush1.xpose.msra.mxu0 0.0
    %3572 = vmatprep.subr.mxu0 0.0
    %3573 = vmatpush1.xpose.msra.mxu0 0.0
    %3574 = vmatprep.subr.mxu0 0.0
    %3575 = vmatpush1.xpose.msra.mxu0 0.0
    %3576 = vmatprep.subr.mxu0 0.0
    %3577 = vmatpush1.xpose.msra.mxu0 0.0
    %3578 = vmatprep.subr.mxu0 0.0
    %3579 = vmatpush1.xpose.msra.mxu0 0.0
    %3580 = vmatprep.subr.mxu0 0.0
    %3581 = vmatpush1.xpose.msra.mxu0 0.0
    %3582 = vmatprep.subr.mxu0 0.0
    %3583 = vmatpush1.xpose.msra.mxu0 0.0
    %3584 = vmatprep.subr.mxu0 0.0
    %3585 = vmatpush1.xpose.msra.mxu0 0.0
    %3586 = vmatprep.subr.mxu0 0.0
    %3587 = vmatpush1.xpose.msra.mxu0 0.0
    %3588 = vmatprep.subr.mxu0 0.0
    %3589 = vmatpush1.xpose.msra.mxu0 0.0
    %3590 = vmatprep.subr.mxu0 0.0
    %3591 = vmatpush1.xpose.msra.mxu0 0.0
    %3592 = vmatprep.subr.mxu0 0.0
    %3593 = vmatpush1.xpose.msra.mxu0 0.0
    %3594 = vmatprep.subr.mxu0 0.0
    %3595 = vmatpush1.xpose.msra.mxu0 0.0
    %3596 = vmatprep.subr.mxu0 0.0
    %3597 = vmatpush1.xpose.msra.mxu0 0.0
    %3598 = vmatprep.subr.mxu0 0.0
    %3599 = vmatpush1.xpose.msra.mxu0 0.0
    %3600 = vmatprep.subr.mxu0 0.0
    %3601 = vmatpush1.xpose.msra.mxu0 0.0
    %3602 = vmatprep.subr.mxu0 0.0
    %3603 = vmatpush1.xpose.msra.mxu0 0.0
    %3604 = vmatprep.subr.mxu0 0.0
    %3605 = vmatpush1.xpose.msra.mxu0 0.0
    %3606 = vmatprep.subr.mxu0 0.0
    %3607 = vmatpush1.xpose.msra.mxu0 0.0
    %3608 = vmatprep.subr.mxu0 0.0
    %3609 = vmatpush1.xpose.msra.mxu0 0.0
    %3610 = vmatprep.subr.mxu0 0.0
    %3611 = vmatpush1.xpose.msra.mxu0 0.0
    %3612 = vmatprep.subr.mxu0 0.0
    %3613 = vmatpush1.xpose.msra.mxu0 0.0
    %3614 = vmatprep.subr.mxu0 0.0
    %3615 = vmatpush1.xpose.msra.mxu0 0.0
    %3616 = vmatprep.subr.mxu0 0.0
    %3617 = vmatpush1.xpose.msra.mxu0 0.0
    %3618 = vmatprep.mubr.f32.mxu0 0.0
    %3619 = vmatmul.mubr.f32.gmra.mrb[0].mxu0 %v3550
    %v3620 = vpop.f32.mrb[0].mxu0
    %v3621 = vadd.f32 0.0, %v3620
    %v3622 = vpop.f32.mrb[0].mxu0
    %3623 = vdwg.mxu0
    %3624 = vrot.lane.b32.xlu0 %v2549, 112
    %v3625 = vpop.permute.xlu0 %3624
    %3626 = vrot.lane.b32.xlu0 %v2633, 112
    %v3627 = vpop.permute.xlu0 %3626
    %v3628 = vsel %vm501, %v3625, 0
    %v3630 = vsel %vm501, %v3627, 0
    %3632 = vmatprep.subr.mxu0 0.0
    %3633 = vmatpush1.xpose.msra.mxu0 %v3630
    %3634 = vmatprep.subr.mxu0 0.0
    %3635 = vmatpush1.xpose.msra.mxu0 0.0
    %3636 = vmatprep.subr.mxu0 0.0
    %3637 = vmatpush1.xpose.msra.mxu0 0.0
    %3638 = vmatprep.subr.mxu0 0.0
    %3639 = vmatpush1.xpose.msra.mxu0 0.0
    %3640 = vmatprep.subr.mxu0 0.0
    %3641 = vmatpush1.xpose.msra.mxu0 0.0
    %3642 = vmatprep.subr.mxu0 0.0
    %3643 = vmatpush1.xpose.msra.mxu0 0.0
    %3644 = vmatprep.subr.mxu0 0.0
    %3645 = vmatpush1.xpose.msra.mxu0 0.0
    %3646 = vmatprep.subr.mxu0 0.0
    %3647 = vmatpush1.xpose.msra.mxu0 0.0
    %3648 = vmatprep.subr.mxu0 0.0
    %3649 = vmatpush1.xpose.msra.mxu0 0.0
    %3650 = vmatprep.subr.mxu0 0.0
    %3651 = vmatpush1.xpose.msra.mxu0 0.0
    %3652 = vmatprep.subr.mxu0 0.0
    %3653 = vmatpush1.xpose.msra.mxu0 0.0
    %3654 = vmatprep.subr.mxu0 0.0
    %3655 = vmatpush1.xpose.msra.mxu0 0.0
    %3656 = vmatprep.subr.mxu0 0.0
    %3657 = vmatpush1.xpose.msra.mxu0 0.0
    %3658 = vmatprep.subr.mxu0 0.0
    %3659 = vmatpush1.xpose.msra.mxu0 0.0
    %3660 = vmatprep.subr.mxu0 0.0
    %3661 = vmatpush1.xpose.msra.mxu0 0.0
    %3662 = vmatprep.subr.mxu0 0.0
    %3663 = vmatpush1.xpose.msra.mxu0 0.0
    %3664 = vmatprep.subr.mxu0 0.0
    %3665 = vmatpush1.xpose.msra.mxu0 0.0
    %3666 = vmatprep.subr.mxu0 0.0
    %3667 = vmatpush1.xpose.msra.mxu0 0.0
    %3668 = vmatprep.subr.mxu0 0.0
    %3669 = vmatpush1.xpose.msra.mxu0 0.0
    %3670 = vmatprep.subr.mxu0 0.0
    %3671 = vmatpush1.xpose.msra.mxu0 0.0
    %3672 = vmatprep.subr.mxu0 0.0
    %3673 = vmatpush1.xpose.msra.mxu0 0.0
    %3674 = vmatprep.subr.mxu0 0.0
    %3675 = vmatpush1.xpose.msra.mxu0 0.0
    %3676 = vmatprep.subr.mxu0 0.0
    %3677 = vmatpush1.xpose.msra.mxu0 0.0
    %3678 = vmatprep.subr.mxu0 0.0
    %3679 = vmatpush1.xpose.msra.mxu0 0.0
    %3680 = vmatprep.subr.mxu0 0.0
    %3681 = vmatpush1.xpose.msra.mxu0 0.0
    %3682 = vmatprep.subr.mxu0 0.0
    %3683 = vmatpush1.xpose.msra.mxu0 0.0
    %3684 = vmatprep.subr.mxu0 0.0
    %3685 = vmatpush1.xpose.msra.mxu0 0.0
    %3686 = vmatprep.subr.mxu0 0.0
    %3687 = vmatpush1.xpose.msra.mxu0 0.0
    %3688 = vmatprep.subr.mxu0 0.0
    %3689 = vmatpush1.xpose.msra.mxu0 0.0
    %3690 = vmatprep.subr.mxu0 0.0
    %3691 = vmatpush1.xpose.msra.mxu0 0.0
    %3692 = vmatprep.subr.mxu0 0.0
    %3693 = vmatpush1.xpose.msra.mxu0 0.0
    %3694 = vmatprep.subr.mxu0 0.0
    %3695 = vmatpush1.xpose.msra.mxu0 0.0
    %3696 = vmatprep.mubr.f32.mxu0 0.0
    %3697 = vmatmul.mubr.f32.gmra.mrb[0].mxu0 %v3628
    %v3698 = vpop.f32.mrb[0].mxu0
    %v3699 = vadd.f32 0.0, %v3698
    %v3700 = vpop.f32.mrb[0].mxu0
    %3701 = vdwg.mxu0
    %v3702 = vmul.f32 %v3621, 0.35355338
    %v3703 = vmul.f32 %v3699, 0.35355338
    %v3704 = vadd.f32 %v3702, %v659
    %v3705 = vadd.f32 %v3703, %v663
    %v3706 = vsel %vm501, %v3704, -inf
    %3707 = vmax.xlane.f32.xlu0 %v3706
    %v3708 = vpop.xlane.xlu0 %3707
    %v3709 = vsel %vm501, %v3705, -inf
    %3710 = vmax.xlane.f32.xlu0 %v3709
    %v3711 = vpop.xlane.xlu0 %3710
    %v3712 = vsub.f32 %v3704, %v3708
    %v3713 = vsub.f32 %v3705, %v3711
    %v3714 = vmul.f32 %v3712, 1.442695
    %v3715 = vpow.pop %v3714
    %v3716 = vmul.f32 %v3713, 1.442695
    %v3717 = vpow.pop %v3716
    %v3718 = vsel %vm501, %v3715, 0.0
    %3719 = vadd.xlane.f32.xlu0 %v3718
    %v3720 = vpop.xlane.xlu0 %3719
    %v3721 = vsel %vm501, %v3717, 0.0
    %3722 = vadd.xlane.f32.xlu0 %v3721
    %v3723 = vpop.xlane.xlu0 %3722
    %v3724 = vrcp.pop %v3720
    %v3725 = vrcp.pop %v3723
    %v3726 = vmul.f32 %v3715, %v3724
    %v3727 = vmul.f32 %v3717, %v3725
    %3728 = vrot.lane.b32.xlu0 %v2712, 112
    %v3729 = vpop.permute.xlu0 %3728
    %v3732 = vsel %vm501, %v3726, 0
    %3734 = vmatprep.subr.mxu0 0.0
    %3735 = vmatpush1.msra.mxu0 %v3729
    %3736 = vmatprep.subr.mxu0 0.0
    %3737 = vmatpush1.msra.mxu0 0.0
    %3738 = vmatprep.subr.mxu0 0.0
    %3739 = vmatpush1.msra.mxu0 0.0
    %3740 = vmatprep.subr.mxu0 0.0
    %3741 = vmatpush1.msra.mxu0 0.0
    %3742 = vmatprep.subr.mxu0 0.0
    %3743 = vmatpush1.msra.mxu0 0.0
    %3744 = vmatprep.subr.mxu0 0.0
    %3745 = vmatpush1.msra.mxu0 0.0
    %3746 = vmatprep.subr.mxu0 0.0
    %3747 = vmatpush1.msra.mxu0 0.0
    %3748 = vmatprep.subr.mxu0 0.0
    %3749 = vmatpush1.msra.mxu0 0.0
    %3750 = vmatprep.subr.mxu0 0.0
    %3751 = vmatpush1.msra.mxu0 0.0
    %3752 = vmatprep.subr.mxu0 0.0
    %3753 = vmatpush1.msra.mxu0 0.0
    %3754 = vmatprep.subr.mxu0 0.0
    %3755 = vmatpush1.msra.mxu0 0.0
    %3756 = vmatprep.subr.mxu0 0.0
    %3757 = vmatpush1.msra.mxu0 0.0
    %3758 = vmatprep.subr.mxu0 0.0
    %3759 = vmatpush1.msra.mxu0 0.0
    %3760 = vmatprep.subr.mxu0 0.0
    %3761 = vmatpush1.msra.mxu0 0.0
    %3762 = vmatprep.subr.mxu0 0.0
    %3763 = vmatpush1.msra.mxu0 0.0
    %3764 = vmatprep.subr.mxu0 0.0
    %3765 = vmatpush1.msra.mxu0 0.0
    %3766 = vmatprep.subr.mxu0 0.0
    %3767 = vmatpush1.msra.mxu0 0.0
    %3768 = vmatprep.subr.mxu0 0.0
    %3769 = vmatpush1.msra.mxu0 0.0
    %3770 = vmatprep.subr.mxu0 0.0
    %3771 = vmatpush1.msra.mxu0 0.0
    %3772 = vmatprep.subr.mxu0 0.0
    %3773 = vmatpush1.msra.mxu0 0.0
    %3774 = vmatprep.subr.mxu0 0.0
    %3775 = vmatpush1.msra.mxu0 0.0
    %3776 = vmatprep.subr.mxu0 0.0
    %3777 = vmatpush1.msra.mxu0 0.0
    %3778 = vmatprep.subr.mxu0 0.0
    %3779 = vmatpush1.msra.mxu0 0.0
    %3780 = vmatprep.subr.mxu0 0.0
    %3781 = vmatpush1.msra.mxu0 0.0
    %3782 = vmatprep.subr.mxu0 0.0
    %3783 = vmatpush1.msra.mxu0 0.0
    %3784 = vmatprep.subr.mxu0 0.0
    %3785 = vmatpush1.msra.mxu0 0.0
    %3786 = vmatprep.subr.mxu0 0.0
    %3787 = vmatpush1.msra.mxu0 0.0
    %3788 = vmatprep.subr.mxu0 0.0
    %3789 = vmatpush1.msra.mxu0 0.0
    %3790 = vmatprep.subr.mxu0 0.0
    %3791 = vmatpush1.msra.mxu0 0.0
    %3792 = vmatprep.subr.mxu0 0.0
    %3793 = vmatpush1.msra.mxu0 0.0
    %3794 = vmatprep.subr.mxu0 0.0
    %3795 = vmatpush1.msra.mxu0 0.0
    %3796 = vmatprep.subr.mxu0 0.0
    %3797 = vmatpush1.msra.mxu0 0.0
    %3798 = vmatprep.mubr.f32.mxu0 0.0
    %3799 = vmatmul.mubr.f32.gmra.mrb[0].mxu0 %v3732
    %v3800 = vpop.f32.mrb[0].mxu0
    %v3801 = vadd.f32 0.0, %v3800
    %v3802 = vpop.f32.mrb[0].mxu0
    %3803 = vdwg.mxu0
    %3804 = vrot.lane.b32.xlu0 %v2717, 112
    %v3805 = vpop.permute.xlu0 %3804
    %v3808 = vsel %vm501, %v3727, 0
    %3810 = vmatprep.subr.mxu0 0.0
    %3811 = vmatpush1.msra.mxu0 %v3805
    %3812 = vmatprep.subr.mxu0 0.0
    %3813 = vmatpush1.msra.mxu0 0.0
    %3814 = vmatprep.subr.mxu0 0.0
    %3815 = vmatpush1.msra.mxu0 0.0
    %3816 = vmatprep.subr.mxu0 0.0
    %3817 = vmatpush1.msra.mxu0 0.0
    %3818 = vmatprep.subr.mxu0 0.0
    %3819 = vmatpush1.msra.mxu0 0.0
    %3820 = vmatprep.subr.mxu0 0.0
    %3821 = vmatpush1.msra.mxu0 0.0
    %3822 = vmatprep.subr.mxu0 0.0
    %3823 = vmatpush1.msra.mxu0 0.0
    %3824 = vmatprep.subr.mxu0 0.0
    %3825 = vmatpush1.msra.mxu0 0.0
    %3826 = vmatprep.subr.mxu0 0.0
    %3827 = vmatpush1.msra.mxu0 0.0
    %3828 = vmatprep.subr.mxu0 0.0
    %3829 = vmatpush1.msra.mxu0 0.0
    %3830 = vmatprep.subr.mxu0 0.0
    %3831 = vmatpush1.msra.mxu0 0.0
    %3832 = vmatprep.subr.mxu0 0.0
    %3833 = vmatpush1.msra.mxu0 0.0
    %3834 = vmatprep.subr.mxu0 0.0
    %3835 = vmatpush1.msra.mxu0 0.0
    %3836 = vmatprep.subr.mxu0 0.0
    %3837 = vmatpush1.msra.mxu0 0.0
    %3838 = vmatprep.subr.mxu0 0.0
    %3839 = vmatpush1.msra.mxu0 0.0
    %3840 = vmatprep.subr.mxu0 0.0
    %3841 = vmatpush1.msra.mxu0 0.0
    %3842 = vmatprep.subr.mxu0 0.0
    %3843 = vmatpush1.msra.mxu0 0.0
    %3844 = vmatprep.subr.mxu0 0.0
    %3845 = vmatpush1.msra.mxu0 0.0
    %3846 = vmatprep.subr.mxu0 0.0
    %3847 = vmatpush1.msra.mxu0 0.0
    %3848 = vmatprep.subr.mxu0 0.0
    %3849 = vmatpush1.msra.mxu0 0.0
    %3850 = vmatprep.subr.mxu0 0.0
    %3851 = vmatpush1.msra.mxu0 0.0
    %3852 = vmatprep.subr.mxu0 0.0
    %3853 = vmatpush1.msra.mxu0 0.0
    %3854 = vmatprep.subr.mxu0 0.0
    %3855 = vmatpush1.msra.mxu0 0.0
    %3856 = vmatprep.subr.mxu0 0.0
    %3857 = vmatpush1.msra.mxu0 0.0
    %3858 = vmatprep.subr.mxu0 0.0
    %3859 = vmatpush1.msra.mxu0 0.0
    %3860 = vmatprep.subr.mxu0 0.0
    %3861 = vmatpush1.msra.mxu0 0.0
    %3862 = vmatprep.subr.mxu0 0.0
    %3863 = vmatpush1.msra.mxu0 0.0
    %3864 = vmatprep.subr.mxu0 0.0
    %3865 = vmatpush1.msra.mxu0 0.0
    %3866 = vmatprep.subr.mxu0 0.0
    %3867 = vmatpush1.msra.mxu0 0.0
    %3868 = vmatprep.subr.mxu0 0.0
    %3869 = vmatpush1.msra.mxu0 0.0
    %3870 = vmatprep.subr.mxu0 0.0
    %3871 = vmatpush1.msra.mxu0 0.0
    %3872 = vmatprep.subr.mxu0 0.0
    %3873 = vmatpush1.msra.mxu0 0.0
    %3874 = vmatprep.mubr.f32.mxu0 0.0
    %3875 = vmatmul.mubr.f32.gmra.mrb[0].mxu0 %v3808
    %v3876 = vpop.f32.mrb[0].mxu0
    %v3877 = vadd.f32 0.0, %v3876
    %v3878 = vpop.f32.mrb[0].mxu0
    %3879 = vdwg.mxu0
    %v3881 = vsel %vm501, %v3801, 0
    %v3884 = vsel %vm501, %v3877, 0
    %3886 = vmatprep.subr.mxu0 0.0
    %3887 = vmatpush1.msra.mxu0 %v2722
    %3888 = vmatprep.subr.mxu0 0.0
    %3889 = vmatpush1.msra.mxu0 0.0
    %3890 = vmatprep.subr.mxu0 0.0
    %3891 = vmatpush1.msra.mxu0 0.0
    %3892 = vmatprep.subr.mxu0 0.0
    %3893 = vmatpush1.msra.mxu0 0.0
    %3894 = vmatprep.subr.mxu0 0.0
    %3895 = vmatpush1.msra.mxu0 0.0
    %3896 = vmatprep.subr.mxu0 0.0
    %3897 = vmatpush1.msra.mxu0 0.0
    %3898 = vmatprep.subr.mxu0 0.0
    %3899 = vmatpush1.msra.mxu0 0.0
    %3900 = vmatprep.subr.mxu0 0.0
    %3901 = vmatpush1.msra.mxu0 0.0
    %3902 = vmatprep.subr.mxu0 0.0
    %3903 = vmatpush1.msra.mxu0 0.0
    %3904 = vmatprep.subr.mxu0 0.0
    %3905 = vmatpush1.msra.mxu0 0.0
    %3906 = vmatprep.subr.mxu0 0.0
    %3907 = vmatpush1.msra.mxu0 0.0
    %3908 = vmatprep.subr.mxu0 0.0
    %3909 = vmatpush1.msra.mxu0 0.0
    %3910 = vmatprep.subr.mxu0 0.0
    %3911 = vmatpush1.msra.mxu0 0.0
    %3912 = vmatprep.subr.mxu0 0.0
    %3913 = vmatpush1.msra.mxu0 0.0
    %3914 = vmatprep.subr.mxu0 0.0
    %3915 = vmatpush1.msra.mxu0 0.0
    %3916 = vmatprep.subr.mxu0 0.0
    %3917 = vmatpush1.msra.mxu0 0.0
    %3918 = vmatprep.subr.mxu0 0.0
    %3919 = vmatpush1.msra.mxu0 0.0
    %3920 = vmatprep.subr.mxu0 0.0
    %3921 = vmatpush1.msra.mxu0 0.0
    %3922 = vmatprep.subr.mxu0 0.0
    %3923 = vmatpush1.msra.mxu0 0.0
    %3924 = vmatprep.subr.mxu0 0.0
    %3925 = vmatpush1.msra.mxu0 0.0
    %3926 = vmatprep.subr.mxu0 0.0
    %3927 = vmatpush1.msra.mxu0 0.0
    %3928 = vmatprep.subr.mxu0 0.0
    %3929 = vmatpush1.msra.mxu0 0.0
    %3930 = vmatprep.subr.mxu0 0.0
    %3931 = vmatpush1.msra.mxu0 0.0
    %3932 = vmatprep.subr.mxu0 0.0
    %3933 = vmatpush1.msra.mxu0 0.0
    %3934 = vmatprep.subr.mxu0 0.0
    %3935 = vmatpush1.msra.mxu0 0.0
    %3936 = vmatprep.subr.mxu0 0.0
    %3937 = vmatpush1.msra.mxu0 0.0
    %3938 = vmatprep.subr.mxu0 0.0
    %3939 = vmatpush1.msra.mxu0 0.0
    %3940 = vmatprep.subr.mxu0 0.0
    %3941 = vmatpush1.msra.mxu0 0.0
    %3942 = vmatprep.subr.mxu0 0.0
    %3943 = vmatpush1.msra.mxu0 0.0
    %3944 = vmatprep.subr.mxu0 0.0
    %3945 = vmatpush1.msra.mxu0 0.0
    %3946 = vmatprep.subr.mxu0 0.0
    %3947 = vmatpush1.msra.mxu0 0.0
    %3948 = vmatprep.subr.mxu0 0.0
    %3949 = vmatpush1.msra.mxu0 0.0
    %3950 = vmatprep.mubr.f32.mxu0 0.0
    %3951 = vmatmul.mubr.f32.gmra.mrb[0].mxu0 %v3881
    %v3952 = vpop.f32.mrb[0].mxu0
    %v3953 = vadd.f32 0.0, %v3952
    %v3954 = vpop.f32.mrb[0].mxu0
    %3955 = vmatprep.mubr.f32.mxu0 0.0
    %3956 = vmatmul.mubr.f32.gmra.mrb[0].mxu0 %v3884
    %v3957 = vpop.f32.mrb[0].mxu0
    %v3958 = vadd.f32 0.0, %v3957
    %v3959 = vpop.f32.mrb[0].mxu0
    %3960 = vdwg.mxu0
    %v3961 = vadd.f32 %v3538, %v3953
    %v3962 = vadd.f32 %v3543, %v3958
    %3963 = vrot.lane.b32.xlu0 %v2544, 104
    %v3964 = vpop.permute.xlu0 %3963
    %3965 = vrot.lane.b32.xlu0 %v2628, 104
    %v3966 = vpop.permute.xlu0 %3965
    %v3967 = vsel %vm501, %v3964, 0
    %v3969 = vsel %vm501, %v3966, 0
    %3971 = vmatprep.subr.mxu0 0.0
    %3972 = vmatpush1.xpose.msra.mxu0 %v3969
    %3973 = vmatprep.subr.mxu0 0.0
    %3974 = vmatpush1.xpose.msra.mxu0 0.0
    %3975 = vmatprep.subr.mxu0 0.0
    %3976 = vmatpush1.xpose.msra.mxu0 0.0
    %3977 = vmatprep.subr.mxu0 0.0
    %3978 = vmatpush1.xpose.msra.mxu0 0.0
    %3979 = vmatprep.subr.mxu0 0.0
    %3980 = vmatpush1.xpose.msra.mxu0 0.0
    %3981 = vmatprep.subr.mxu0 0.0
    %3982 = vmatpush1.xpose.msra.mxu0 0.0
    %3983 = vmatprep.subr.mxu0 0.0
    %3984 = vmatpush1.xpose.msra.mxu0 0.0
    %3985 = vmatprep.subr.mxu0 0.0
    %3986 = vmatpush1.xpose.msra.mxu0 0.0
    %3987 = vmatprep.subr.mxu0 0.0
    %3988 = vmatpush1.xpose.msra.mxu0 0.0
    %3989 = vmatprep.subr.mxu0 0.0
    %3990 = vmatpush1.xpose.msra.mxu0 0.0
    %3991 = vmatprep.subr.mxu0 0.0
    %3992 = vmatpush1.xpose.msra.mxu0 0.0
    %3993 = vmatprep.subr.mxu0 0.0
    %3994 = vmatpush1.xpose.msra.mxu0 0.0
    %3995 = vmatprep.subr.mxu0 0.0
    %3996 = vmatpush1.xpose.msra.mxu0 0.0
    %3997 = vmatprep.subr.mxu0 0.0
    %3998 = vmatpush1.xpose.msra.mxu0 0.0
    %3999 = vmatprep.subr.mxu0 0.0
    %4000 = vmatpush1.xpose.msra.mxu0 0.0
    %4001 = vmatprep.subr.mxu0 0.0
    %4002 = vmatpush1.xpose.msra.mxu0 0.0
    %4003 = vmatprep.subr.mxu0 0.0
    %4004 = vmatpush1.xpose.msra.mxu0 0.0
    %4005 = vmatprep.subr.mxu0 0.0
    %4006 = vmatpush1.xpose.msra.mxu0 0.0
    %4007 = vmatprep.subr.mxu0 0.0
    %4008 = vmatpush1.xpose.msra.mxu0 0.0
    %4009 = vmatprep.subr.mxu0 0.0
    %4010 = vmatpush1.xpose.msra.mxu0 0.0
    %4011 = vmatprep.subr.mxu0 0.0
    %4012 = vmatpush1.xpose.msra.mxu0 0.0
    %4013 = vmatprep.subr.mxu0 0.0
    %4014 = vmatpush1.xpose.msra.mxu0 0.0
    %4015 = vmatprep.subr.mxu0 0.0
    %4016 = vmatpush1.xpose.msra.mxu0 0.0
    %4017 = vmatprep.subr.mxu0 0.0
    %4018 = vmatpush1.xpose.msra.mxu0 0.0
    %4019 = vmatprep.subr.mxu0 0.0
    %4020 = vmatpush1.xpose.msra.mxu0 0.0
    %4021 = vmatprep.subr.mxu0 0.0
    %4022 = vmatpush1.xpose.msra.mxu0 0.0
    %4023 = vmatprep.subr.mxu0 0.0
    %4024 = vmatpush1.xpose.msra.mxu0 0.0
    %4025 = vmatprep.subr.mxu0 0.0
    %4026 = vmatpush1.xpose.msra.mxu0 0.0
    %4027 = vmatprep.subr.mxu0 0.0
    %4028 = vmatpush1.xpose.msra.mxu0 0.0
    %4029 = vmatprep.subr.mxu0 0.0
    %4030 = vmatpush1.xpose.msra.mxu0 0.0
    %4031 = vmatprep.subr.mxu0 0.0
    %4032 = vmatpush1.xpose.msra.mxu0 0.0
    %4033 = vmatprep.subr.mxu0 0.0
    %4034 = vmatpush1.xpose.msra.mxu0 0.0
    %4035 = vmatprep.mubr.f32.mxu0 0.0
    %4036 = vmatmul.mubr.f32.gmra.mrb[0].mxu0 %v3967
    %v4037 = vpop.f32.mrb[0].mxu0
    %v4038 = vadd.f32 0.0, %v4037
    %v4039 = vpop.f32.mrb[0].mxu0
    %4040 = vdwg.mxu0
    %4041 = vrot.lane.b32.xlu0 %v2549, 104
    %v4042 = vpop.permute.xlu0 %4041
    %4043 = vrot.lane.b32.xlu0 %v2633, 104
    %v4044 = vpop.permute.xlu0 %4043
    %v4045 = vsel %vm501, %v4042, 0
    %v4047 = vsel %vm501, %v4044, 0
    %4049 = vmatprep.subr.mxu0 0.0
    %4050 = vmatpush1.xpose.msra.mxu0 %v4047
    %4051 = vmatprep.subr.mxu0 0.0
    %4052 = vmatpush1.xpose.msra.mxu0 0.0
    %4053 = vmatprep.subr.mxu0 0.0
    %4054 = vmatpush1.xpose.msra.mxu0 0.0
    %4055 = vmatprep.subr.mxu0 0.0
    %4056 = vmatpush1.xpose.msra.mxu0 0.0
    %4057 = vmatprep.subr.mxu0 0.0
    %4058 = vmatpush1.xpose.msra.mxu0 0.0
    %4059 = vmatprep.subr.mxu0 0.0
    %4060 = vmatpush1.xpose.msra.mxu0 0.0
    %4061 = vmatprep.subr.mxu0 0.0
    %4062 = vmatpush1.xpose.msra.mxu0 0.0
    %4063 = vmatprep.subr.mxu0 0.0
    %4064 = vmatpush1.xpose.msra.mxu0 0.0
    %4065 = vmatprep.subr.mxu0 0.0
    %4066 = vmatpush1.xpose.msra.mxu0 0.0
    %4067 = vmatprep.subr.mxu0 0.0
    %4068 = vmatpush1.xpose.msra.mxu0 0.0
    %4069 = vmatprep.subr.mxu0 0.0
    %4070 = vmatpush1.xpose.msra.mxu0 0.0
    %4071 = vmatprep.subr.mxu0 0.0
    %4072 = vmatpush1.xpose.msra.mxu0 0.0
    %4073 = vmatprep.subr.mxu0 0.0
    %4074 = vmatpush1.xpose.msra.mxu0 0.0
    %4075 = vmatprep.subr.mxu0 0.0
    %4076 = vmatpush1.xpose.msra.mxu0 0.0
    %4077 = vmatprep.subr.mxu0 0.0
    %4078 = vmatpush1.xpose.msra.mxu0 0.0
    %4079 = vmatprep.subr.mxu0 0.0
    %4080 = vmatpush1.xpose.msra.mxu0 0.0
    %4081 = vmatprep.subr.mxu0 0.0
    %4082 = vmatpush1.xpose.msra.mxu0 0.0
    %4083 = vmatprep.subr.mxu0 0.0
    %4084 = vmatpush1.xpose.msra.mxu0 0.0
    %4085 = vmatprep.subr.mxu0 0.0
    %4086 = vmatpush1.xpose.msra.mxu0 0.0
    %4087 = vmatprep.subr.mxu0 0.0
    %4088 = vmatpush1.xpose.msra.mxu0 0.0
    %4089 = vmatprep.subr.mxu0 0.0
    %4090 = vmatpush1.xpose.msra.mxu0 0.0
    %4091 = vmatprep.subr.mxu0 0.0
    %4092 = vmatpush1.xpose.msra.mxu0 0.0
    %4093 = vmatprep.subr.mxu0 0.0
    %4094 = vmatpush1.xpose.msra.mxu0 0.0
    %4095 = vmatprep.subr.mxu0 0.0
    %4096 = vmatpush1.xpose.msra.mxu0 0.0
    %4097 = vmatprep.subr.mxu0 0.0
    %4098 = vmatpush1.xpose.msra.mxu0 0.0
    %4099 = vmatprep.subr.mxu0 0.0
    %4100 = vmatpush1.xpose.msra.mxu0 0.0
    %4101 = vmatprep.subr.mxu0 0.0
    %4102 = vmatpush1.xpose.msra.mxu0 0.0
    %4103 = vmatprep.subr.mxu0 0.0
    %4104 = vmatpush1.xpose.msra.mxu0 0.0
    %4105 = vmatprep.subr.mxu0 0.0
    %4106 = vmatpush1.xpose.msra.mxu0 0.0
    %4107 = vmatprep.subr.mxu0 0.0
    %4108 = vmatpush1.xpose.msra.mxu0 0.0
    %4109 = vmatprep.subr.mxu0 0.0
    %4110 = vmatpush1.xpose.msra.mxu0 0.0
    %4111 = vmatprep.subr.mxu0 0.0
    %4112 = vmatpush1.xpose.msra.mxu0 0.0
    %4113 = vmatprep.mubr.f32.mxu0 0.0
    %4114 = vmatmul.mubr.f32.gmra.mrb[0].mxu0 %v4045
    %v4115 = vpop.f32.mrb[0].mxu0
    %v4116 = vadd.f32 0.0, %v4115
    %v4117 = vpop.f32.mrb[0].mxu0
    %4118 = vdwg.mxu0
    %v4119 = vmul.f32 %v4038, 0.35355338
    %v4120 = vmul.f32 %v4116, 0.35355338
    %v4121 = vadd.f32 %v4119, %v659
    %v4122 = vadd.f32 %v4120, %v663
    %v4123 = vsel %vm501, %v4121, -inf
    %4124 = vmax.xlane.f32.xlu0 %v4123
    %v4125 = vpop.xlane.xlu0 %4124
    %v4126 = vsel %vm501, %v4122, -inf
    %4127 = vmax.xlane.f32.xlu0 %v4126
    %v4128 = vpop.xlane.xlu0 %4127
    %v4129 = vsub.f32 %v4121, %v4125
    %v4130 = vsub.f32 %v4122, %v4128
    %v4131 = vmul.f32 %v4129, 1.442695
    %v4132 = vpow.pop %v4131
    %v4133 = vmul.f32 %v4130, 1.442695
    %v4134 = vpow.pop %v4133
    %v4135 = vsel %vm501, %v4132, 0.0
    %4136 = vadd.xlane.f32.xlu0 %v4135
    %v4137 = vpop.xlane.xlu0 %4136
    %v4138 = vsel %vm501, %v4134, 0.0
    %4139 = vadd.xlane.f32.xlu0 %v4138
    %v4140 = vpop.xlane.xlu0 %4139
    %v4141 = vrcp.pop %v4137
    %v4142 = vrcp.pop %v4140
    %v4143 = vmul.f32 %v4132, %v4141
    %v4144 = vmul.f32 %v4134, %v4142
    %4145 = vrot.lane.b32.xlu0 %v2712, 104
    %v4146 = vpop.permute.xlu0 %4145
    %v4149 = vsel %vm501, %v4143, 0
    %4151 = vmatprep.subr.mxu0 0.0
    %4152 = vmatpush1.msra.mxu0 %v4146
    %4153 = vmatprep.subr.mxu0 0.0
    %4154 = vmatpush1.msra.mxu0 0.0
    %4155 = vmatprep.subr.mxu0 0.0
    %4156 = vmatpush1.msra.mxu0 0.0
    %4157 = vmatprep.subr.mxu0 0.0
    %4158 = vmatpush1.msra.mxu0 0.0
    %4159 = vmatprep.subr.mxu0 0.0
    %4160 = vmatpush1.msra.mxu0 0.0
    %4161 = vmatprep.subr.mxu0 0.0
    %4162 = vmatpush1.msra.mxu0 0.0
    %4163 = vmatprep.subr.mxu0 0.0
    %4164 = vmatpush1.msra.mxu0 0.0
    %4165 = vmatprep.subr.mxu0 0.0
    %4166 = vmatpush1.msra.mxu0 0.0
    %4167 = vmatprep.subr.mxu0 0.0
    %4168 = vmatpush1.msra.mxu0 0.0
    %4169 = vmatprep.subr.mxu0 0.0
    %4170 = vmatpush1.msra.mxu0 0.0
    %4171 = vmatprep.subr.mxu0 0.0
    %4172 = vmatpush1.msra.mxu0 0.0
    %4173 = vmatprep.subr.mxu0 0.0
    %4174 = vmatpush1.msra.mxu0 0.0
    %4175 = vmatprep.subr.mxu0 0.0
    %4176 = vmatpush1.msra.mxu0 0.0
    %4177 = vmatprep.subr.mxu0 0.0
    %4178 = vmatpush1.msra.mxu0 0.0
    %4179 = vmatprep.subr.mxu0 0.0
    %4180 = vmatpush1.msra.mxu0 0.0
    %4181 = vmatprep.subr.mxu0 0.0
    %4182 = vmatpush1.msra.mxu0 0.0
    %4183 = vmatprep.subr.mxu0 0.0
    %4184 = vmatpush1.msra.mxu0 0.0
    %4185 = vmatprep.subr.mxu0 0.0
    %4186 = vmatpush1.msra.mxu0 0.0
    %4187 = vmatprep.subr.mxu0 0.0
    %4188 = vmatpush1.msra.mxu0 0.0
    %4189 = vmatprep.subr.mxu0 0.0
    %4190 = vmatpush1.msra.mxu0 0.0
    %4191 = vmatprep.subr.mxu0 0.0
    %4192 = vmatpush1.msra.mxu0 0.0
    %4193 = vmatprep.subr.mxu0 0.0
    %4194 = vmatpush1.msra.mxu0 0.0
    %4195 = vmatprep.subr.mxu0 0.0
    %4196 = vmatpush1.msra.mxu0 0.0
    %4197 = vmatprep.subr.mxu0 0.0
    %4198 = vmatpush1.msra.mxu0 0.0
    %4199 = vmatprep.subr.mxu0 0.0
    %4200 = vmatpush1.msra.mxu0 0.0
    %4201 = vmatprep.subr.mxu0 0.0
    %4202 = vmatpush1.msra.mxu0 0.0
    %4203 = vmatprep.subr.mxu0 0.0
    %4204 = vmatpush1.msra.mxu0 0.0
    %4205 = vmatprep.subr.mxu0 0.0
    %4206 = vmatpush1.msra.mxu0 0.0
    %4207 = vmatprep.subr.mxu0 0.0
    %4208 = vmatpush1.msra.mxu0 0.0
    %4209 = vmatprep.subr.mxu0 0.0
    %4210 = vmatpush1.msra.mxu0 0.0
    %4211 = vmatprep.subr.mxu0 0.0
    %4212 = vmatpush1.msra.mxu0 0.0
    %4213 = vmatprep.subr.mxu0 0.0
    %4214 = vmatpush1.msra.mxu0 0.0
    %4215 = vmatprep.mubr.f32.mxu0 0.0
    %4216 = vmatmul.mubr.f32.gmra.mrb[0].mxu0 %v4149
    %v4217 = vpop.f32.mrb[0].mxu0
    %v4218 = vadd.f32 0.0, %v4217
    %v4219 = vpop.f32.mrb[0].mxu0
    %4220 = vdwg.mxu0
    %4221 = vrot.lane.b32.xlu0 %v2717, 104
    %v4222 = vpop.permute.xlu0 %4221
    %v4225 = vsel %vm501, %v4144, 0
    %4227 = vmatprep.subr.mxu0 0.0
    %4228 = vmatpush1.msra.mxu0 %v4222
    %4229 = vmatprep.subr.mxu0 0.0
    %4230 = vmatpush1.msra.mxu0 0.0
    %4231 = vmatprep.subr.mxu0 0.0
    %4232 = vmatpush1.msra.mxu0 0.0
    %4233 = vmatprep.subr.mxu0 0.0
    %4234 = vmatpush1.msra.mxu0 0.0
    %4235 = vmatprep.subr.mxu0 0.0
    %4236 = vmatpush1.msra.mxu0 0.0
    %4237 = vmatprep.subr.mxu0 0.0
    %4238 = vmatpush1.msra.mxu0 0.0
    %4239 = vmatprep.subr.mxu0 0.0
    %4240 = vmatpush1.msra.mxu0 0.0
    %4241 = vmatprep.subr.mxu0 0.0
    %4242 = vmatpush1.msra.mxu0 0.0
    %4243 = vmatprep.subr.mxu0 0.0
    %4244 = vmatpush1.msra.mxu0 0.0
    %4245 = vmatprep.subr.mxu0 0.0
    %4246 = vmatpush1.msra.mxu0 0.0
    %4247 = vmatprep.subr.mxu0 0.0
    %4248 = vmatpush1.msra.mxu0 0.0
    %4249 = vmatprep.subr.mxu0 0.0
    %4250 = vmatpush1.msra.mxu0 0.0
    %4251 = vmatprep.subr.mxu0 0.0
    %4252 = vmatpush1.msra.mxu0 0.0
    %4253 = vmatprep.subr.mxu0 0.0
    %4254 = vmatpush1.msra.mxu0 0.0
    %4255 = vmatprep.subr.mxu0 0.0
    %4256 = vmatpush1.msra.mxu0 0.0
    %4257 = vmatprep.subr.mxu0 0.0
    %4258 = vmatpush1.msra.mxu0 0.0
    %4259 = vmatprep.subr.mxu0 0.0
    %4260 = vmatpush1.msra.mxu0 0.0
    %4261 = vmatprep.subr.mxu0 0.0
    %4262 = vmatpush1.msra.mxu0 0.0
    %4263 = vmatprep.subr.mxu0 0.0
    %4264 = vmatpush1.msra.mxu0 0.0
    %4265 = vmatprep.subr.mxu0 0.0
    %4266 = vmatpush1.msra.mxu0 0.0
    %4267 = vmatprep.subr.mxu0 0.0
    %4268 = vmatpush1.msra.mxu0 0.0
    %4269 = vmatprep.subr.mxu0 0.0
    %4270 = vmatpush1.msra.mxu0 0.0
    %4271 = vmatprep.subr.mxu0 0.0
    %4272 = vmatpush1.msra.mxu0 0.0
    %4273 = vmatprep.subr.mxu0 0.0
    %4274 = vmatpush1.msra.mxu0 0.0
    %4275 = vmatprep.subr.mxu0 0.0
    %4276 = vmatpush1.msra.mxu0 0.0
    %4277 = vmatprep.subr.mxu0 0.0
    %4278 = vmatpush1.msra.mxu0 0.0
    %4279 = vmatprep.subr.mxu0 0.0
    %4280 = vmatpush1.msra.mxu0 0.0
    %4281 = vmatprep.subr.mxu0 0.0
    %4282 = vmatpush1.msra.mxu0 0.0
    %4283 = vmatprep.subr.mxu0 0.0
    %4284 = vmatpush1.msra.mxu0 0.0
    %4285 = vmatprep.subr.mxu0 0.0
    %4286 = vmatpush1.msra.mxu0 0.0
    %4287 = vmatprep.subr.mxu0 0.0
    %4288 = vmatpush1.msra.mxu0 0.0
    %4289 = vmatprep.subr.mxu0 0.0
    %4290 = vmatpush1.msra.mxu0 0.0
    %4291 = vmatprep.mubr.f32.mxu0 0.0
    %4292 = vmatmul.mubr.f32.gmra.mrb[0].mxu0 %v4225
    %v4293 = vpop.f32.mrb[0].mxu0
    %v4294 = vadd.f32 0.0, %v4293
    %v4295 = vpop.f32.mrb[0].mxu0
    %4296 = vdwg.mxu0
    %v4298 = vsel %vm501, %v4218, 0
    %v4301 = vsel %vm501, %v4294, 0
    %4303 = vmatprep.subr.mxu0 0.0
    %4304 = vmatpush1.msra.mxu0 %v2723
    %4305 = vmatprep.subr.mxu0 0.0
    %4306 = vmatpush1.msra.mxu0 0.0
    %4307 = vmatprep.subr.mxu0 0.0
    %4308 = vmatpush1.msra.mxu0 0.0
    %4309 = vmatprep.subr.mxu0 0.0
    %4310 = vmatpush1.msra.mxu0 0.0
    %4311 = vmatprep.subr.mxu0 0.0
    %4312 = vmatpush1.msra.mxu0 0.0
    %4313 = vmatprep.subr.mxu0 0.0
    %4314 = vmatpush1.msra.mxu0 0.0
    %4315 = vmatprep.subr.mxu0 0.0
    %4316 = vmatpush1.msra.mxu0 0.0
    %4317 = vmatprep.subr.mxu0 0.0
    %4318 = vmatpush1.msra.mxu0 0.0
    %4319 = vmatprep.subr.mxu0 0.0
    %4320 = vmatpush1.msra.mxu0 0.0
    %4321 = vmatprep.subr.mxu0 0.0
    %4322 = vmatpush1.msra.mxu0 0.0
    %4323 = vmatprep.subr.mxu0 0.0
    %4324 = vmatpush1.msra.mxu0 0.0
    %4325 = vmatprep.subr.mxu0 0.0
    %4326 = vmatpush1.msra.mxu0 0.0
    %4327 = vmatprep.subr.mxu0 0.0
    %4328 = vmatpush1.msra.mxu0 0.0
    %4329 = vmatprep.subr.mxu0 0.0
    %4330 = vmatpush1.msra.mxu0 0.0
    %4331 = vmatprep.subr.mxu0 0.0
    %4332 = vmatpush1.msra.mxu0 0.0
    %4333 = vmatprep.subr.mxu0 0.0
    %4334 = vmatpush1.msra.mxu0 0.0
    %4335 = vmatprep.subr.mxu0 0.0
    %4336 = vmatpush1.msra.mxu0 0.0
    %4337 = vmatprep.subr.mxu0 0.0
    %4338 = vmatpush1.msra.mxu0 0.0
    %4339 = vmatprep.subr.mxu0 0.0
    %4340 = vmatpush1.msra.mxu0 0.0
    %4341 = vmatprep.subr.mxu0 0.0
    %4342 = vmatpush1.msra.mxu0 0.0
    %4343 = vmatprep.subr.mxu0 0.0
    %4344 = vmatpush1.msra.mxu0 0.0
    %4345 = vmatprep.subr.mxu0 0.0
    %4346 = vmatpush1.msra.mxu0 0.0
    %4347 = vmatprep.subr.mxu0 0.0
    %4348 = vmatpush1.msra.mxu0 0.0
    %4349 = vmatprep.subr.mxu0 0.0
    %4350 = vmatpush1.msra.mxu0 0.0
    %4351 = vmatprep.subr.mxu0 0.0
    %4352 = vmatpush1.msra.mxu0 0.0
    %4353 = vmatprep.subr.mxu0 0.0
    %4354 = vmatpush1.msra.mxu0 0.0
    %4355 = vmatprep.subr.mxu0 0.0
    %4356 = vmatpush1.msra.mxu0 0.0
    %4357 = vmatprep.subr.mxu0 0.0
    %4358 = vmatpush1.msra.mxu0 0.0
    %4359 = vmatprep.subr.mxu0 0.0
    %4360 = vmatpush1.msra.mxu0 0.0
    %4361 = vmatprep.subr.mxu0 0.0
    %4362 = vmatpush1.msra.mxu0 0.0
    %4363 = vmatprep.subr.mxu0 0.0
    %4364 = vmatpush1.msra.mxu0 0.0
    %4365 = vmatprep.subr.mxu0 0.0
    %4366 = vmatpush1.msra.mxu0 0.0
    %4367 = vmatprep.mubr.f32.mxu0 0.0
    %4368 = vmatmul.mubr.f32.gmra.mrb[0].mxu0 %v4298
    %v4369 = vpop.f32.mrb[0].mxu0
    %v4370 = vadd.f32 0.0, %v4369
    %v4371 = vpop.f32.mrb[0].mxu0
    %4372 = vmatprep.mubr.f32.mxu0 0.0
    %4373 = vmatmul.mubr.f32.gmra.mrb[0].mxu0 %v4301
    %v4374 = vpop.f32.mrb[0].mxu0
    %v4375 = vadd.f32 0.0, %v4374
    %v4376 = vpop.f32.mrb[0].mxu0
    %4377 = vdwg.mxu0
    %v4378 = vadd.f32 %v3961, %v4370
    %v4379 = vadd.f32 %v3962, %v4375
    %v4380 = vld [vmem:[%s3 + $0xf] sm:$0x1]
    %v4381 = vlaneseq
    %v4382 = vshrl.u32 %v4381, 7
    %v4383 = vsub.s32 0, %v4382
    %v4384 = vrot.slane %v4380, %v4383
    %v4385 = vadd.f32 %v4378, %v4384
    %v4386 = vadd.f32 %v4379, %v4384
    %v4387 = vadd.f32 %v4385, %v2460
    %v4388 = vadd.f32 %v4386, %v2461
    %v4389 = vld [vmem:[%s3 + $0x10] sm:$0x1]
    %v4390 = vld [vmem:[%s3 + $0x11] sm:$0x1]
    %v4391 = vsel %vm173, %v4387, 0.0
    %4392 = vadd.xlane.f32.xlu0 %v4391
    %v4393 = vpop.xlane.xlu0 %4392
    %v4394 = vsel %vm173, %v4388, 0.0
    %4395 = vadd.xlane.f32.xlu0 %v4394
    %v4396 = vpop.xlane.xlu0 %4395
    %v4397 = vmul.f32 %v4393, %v180
    %v4398 = vmul.f32 %v4396, %v180
    %v4399 = vsub.f32 %v4387, %v4397
    %v4400 = vsub.f32 %v4388, %v4398
    %v4401 = vmul.f32 %v4399, %v4399
    %v4402 = vmul.f32 %v4400, %v4400
    %v4403 = vsel %vm173, %v4401, 0.0
    %4404 = vadd.xlane.f32.xlu0 %v4403
    %v4405 = vpop.xlane.xlu0 %4404
    %v4406 = vsel %vm173, %v4402, 0.0
    %4407 = vadd.xlane.f32.xlu0 %v4406
    %v4408 = vpop.xlane.xlu0 %4407
    %v4409 = vmul.f32 %v4405, %v180
    %v4410 = vmul.f32 %v4408, %v180
    %v4411 = vadd.f32 %v4409, 1e-12
    %v4412 = vadd.f32 %v4410, 1e-12
    %v4413 = vrsqrt.pop %v4411
    %v4414 = vrsqrt.pop %v4412
    %v4415 = vmul.f32 %v4399, %v4413
    %v4416 = vmul.f32 %v4400, %v4414
    %v4417 = vlaneseq
    %v4418 = vshrl.u32 %v4417, 7
    %v4419 = vsub.s32 0, %v4418
    %v4420 = vrot.slane %v4389, %v4419
    %v4421 = vmul.f32 %v4415, %v4420
    %v4422 = vmul.f32 %v4416, %v4420
    %v4423 = vlaneseq
    %v4424 = vshrl.u32 %v4423, 7
    %v4425 = vsub.s32 0, %v4424
    %v4426 = vrot.slane %v4390, %v4425
    %v4427 = vadd.f32 %v4421, %v4426
    %v4428 = vadd.f32 %v4422, %v4426
    %v4429 = vld [vmem:[#allocation2 + $0x1f8] sm:$0xff]
    %v4430 = vld [vmem:[#allocation2 + $0x200] sm:$0xff]
    %v4431 = vld [vmem:[#allocation2 + $0x208] sm:$0xff]
    %v4432 = vld [vmem:[#allocation2 + $0x210] sm:$0xff]
    %v4433 = vld [vmem:[%s3 + $0x12] sm:$0x1]
    %v4434 = vlaneseq
    %v4435 = vshrl.u32 %v4434, 7
    %v4436 = vsub.s32 0, %v4435
    %v4437 = vrot.slane %v4433, %v4436
    %v4439 = vsel %vm173, %v4427, 0
    %v4442 = vsel %vm173, %v4428, 0
    %4444 = vmatprep.subr.mxu0 0.0
    %4445 = vmatpush1.msra.mxu0 %v4429
    %4446 = vmatprep.subr.mxu0 0.0
    %4447 = vmatpush1.msra.mxu0 %v4430
    %4448 = vmatprep.subr.mxu0 0.0
    %4449 = vmatpush1.msra.mxu0 %v4431
    %4450 = vmatprep.subr.mxu0 0.0
    %4451 = vmatpush1.msra.mxu0 %v4432
    %4452 = vmatprep.subr.mxu0 0.0
    %4453 = vmatpush1.msra.mxu0 0.0
    %4454 = vmatprep.subr.mxu0 0.0
    %4455 = vmatpush1.msra.mxu0 0.0
    %4456 = vmatprep.subr.mxu0 0.0
    %4457 = vmatpush1.msra.mxu0 0.0
    %4458 = vmatprep.subr.mxu0 0.0
    %4459 = vmatpush1.msra.mxu0 0.0
    %4460 = vmatprep.subr.mxu0 0.0
    %4461 = vmatpush1.msra.mxu0 0.0
    %4462 = vmatprep.subr.mxu0 0.0
    %4463 = vmatpush1.msra.mxu0 0.0
    %4464 = vmatprep.subr.mxu0 0.0
    %4465 = vmatpush1.msra.mxu0 0.0
    %4466 = vmatprep.subr.mxu0 0.0
    %4467 = vmatpush1.msra.mxu0 0.0
    %4468 = vmatprep.subr.mxu0 0.0
    %4469 = vmatpush1.msra.mxu0 0.0
    %4470 = vmatprep.subr.mxu0 0.0
    %4471 = vmatpush1.msra.mxu0 0.0
    %4472 = vmatprep.subr.mxu0 0.0
    %4473 = vmatpush1.msra.mxu0 0.0
    %4474 = vmatprep.subr.mxu0 0.0
    %4475 = vmatpush1.msra.mxu0 0.0
    %4476 = vmatprep.subr.mxu0 0.0
    %4477 = vmatpush1.msra.mxu0 0.0
    %4478 = vmatprep.subr.mxu0 0.0
    %4479 = vmatpush1.msra.mxu0 0.0
    %4480 = vmatprep.subr.mxu0 0.0
    %4481 = vmatpush1.msra.mxu0 0.0
    %4482 = vmatprep.subr.mxu0 0.0
    %4483 = vmatpush1.msra.mxu0 0.0
    %4484 = vmatprep.subr.mxu0 0.0
    %4485 = vmatpush1.msra.mxu0 0.0
    %4486 = vmatprep.subr.mxu0 0.0
    %4487 = vmatpush1.msra.mxu0 0.0
    %4488 = vmatprep.subr.mxu0 0.0
    %4489 = vmatpush1.msra.mxu0 0.0
    %4490 = vmatprep.subr.mxu0 0.0
    %4491 = vmatpush1.msra.mxu0 0.0
    %4492 = vmatprep.subr.mxu0 0.0
    %4493 = vmatpush1.msra.mxu0 0.0
    %4494 = vmatprep.subr.mxu0 0.0
    %4495 = vmatpush1.msra.mxu0 0.0
    %4496 = vmatprep.subr.mxu0 0.0
    %4497 = vmatpush1.msra.mxu0 0.0
    %4498 = vmatprep.subr.mxu0 0.0
    %4499 = vmatpush1.msra.mxu0 0.0
    %4500 = vmatprep.subr.mxu0 0.0
    %4501 = vmatpush1.msra.mxu0 0.0
    %4502 = vmatprep.subr.mxu0 0.0
    %4503 = vmatpush1.msra.mxu0 0.0
    %4504 = vmatprep.subr.mxu0 0.0
    %4505 = vmatpush1.msra.mxu0 0.0
    %4506 = vmatprep.subr.mxu0 0.0
    %4507 = vmatpush1.msra.mxu0 0.0
    %4508 = vmatprep.mubr.f32.mxu0 0.0
    %4509 = vmatmul.mubr.f32.gmra.mrb[0].mxu0 %v4439
    %v4510 = vpop.f32.mrb[0].mxu0
    %v4511 = vadd.f32 %v4437, %v4510
    %v4512 = vpop.f32.mrb[0].mxu0
    %4513 = vmatprep.mubr.f32.mxu0 0.0
    %4514 = vmatmul.mubr.f32.gmra.mrb[0].mxu0 %v4442
    %v4515 = vpop.f32.mrb[0].mxu0
    %v4516 = vadd.f32 %v4437, %v4515
    %v4517 = vpop.f32.mrb[0].mxu0
    %4518 = vdwg.mxu0
    %v4519 = vmul.f32 %v4511, 0.5
    %v4520 = vmul.f32 %v4516, 0.5
    %v4521 = vmul.f32 %v4511, 0.044715
    %v4522 = vmul.f32 %v4516, 0.044715
    %v4523 = vmul.f32 %v4521, %v4511
    %v4524 = vmul.f32 %v4522, %v4516
    %v4525 = vmul.f32 %v4523, %v4511
    %v4526 = vmul.f32 %v4524, %v4516
    %v4527 = vadd.f32 %v4511, %v4525
    %v4528 = vadd.f32 %v4516, %v4526
    %v4529 = vmul.f32 %v4527, 0.7978846
    %v4530 = vmul.f32 %v4528, 0.7978846
    %v4531 = vtanh.pop %v4529
    %v4532 = vtanh.pop %v4530
    %v4533 = vadd.f32 %v4531, 1.0
    %v4534 = vadd.f32 %v4532, 1.0
    %v4535 = vmul.f32 %v4519, %v4533
    %v4536 = vmul.f32 %v4520, %v4534
    %v4537 = vld [vmem:[#allocation2 + $0x218] sm:$0xff]
    %v4538 = vld [vmem:[#allocation2 + $0x220] sm:$0xff]
    %v4539 = vld [vmem:[#allocation2 + $0x228] sm:$0xff]
    %v4540 = vld [vmem:[#allocation2 + $0x230] sm:$0xff]
    %v4541 = vld [vmem:[#allocation2 + $0x238] sm:$0xff]
    %v4542 = vld [vmem:[#allocation2 + $0x240] sm:$0xff]
    %v4543 = vld [vmem:[#allocation2 + $0x248] sm:$0xff]
    %v4544 = vld [vmem:[#allocation2 + $0x250] sm:$0xff]
    %v4545 = vld [vmem:[%s3 + $0x13] sm:$0x1]
    %v4546 = vlaneseq
    %v4547 = vshrl.u32 %v4546, 7
    %v4548 = vsub.s32 0, %v4547
    %v4549 = vrot.slane %v4545, %v4548
    %v4551 = vsel %vm2338, %v4535, 0
    %v4554 = vsel %vm2338, %v4536, 0
    %4556 = vmatprep.subr.mxu0 0.0
    %4557 = vmatpush1.msra.mxu0 %v4537
    %4558 = vmatprep.subr.mxu0 0.0
    %4559 = vmatpush1.msra.mxu0 %v4538
    %4560 = vmatprep.subr.mxu0 0.0
    %4561 = vmatpush1.msra.mxu0 %v4539
    %4562 = vmatprep.subr.mxu0 0.0
    %4563 = vmatpush1.msra.mxu0 %v4540
    %4564 = vmatprep.subr.mxu0 0.0
    %4565 = vmatpush1.msra.mxu0 %v4541
    %4566 = vmatprep.subr.mxu0 0.0
    %4567 = vmatpush1.msra.mxu0 %v4542
    %4568 = vmatprep.subr.mxu0 0.0
    %4569 = vmatpush1.msra.mxu0 %v4543
    %4570 = vmatprep.subr.mxu0 0.0
    %4571 = vmatpush1.msra.mxu0 %v4544
    %4572 = vmatprep.subr.mxu0 0.0
    %4573 = vmatpush1.msra.mxu0 0.0
    %4574 = vmatprep.subr.mxu0 0.0
    %4575 = vmatpush1.msra.mxu0 0.0
    %4576 = vmatprep.subr.mxu0 0.0
    %4577 = vmatpush1.msra.mxu0 0.0
    %4578 = vmatprep.subr.mxu0 0.0
    %4579 = vmatpush1.msra.mxu0 0.0
    %4580 = vmatprep.subr.mxu0 0.0
    %4581 = vmatpush1.msra.mxu0 0.0
    %4582 = vmatprep.subr.mxu0 0.0
    %4583 = vmatpush1.msra.mxu0 0.0
    %4584 = vmatprep.subr.mxu0 0.0
    %4585 = vmatpush1.msra.mxu0 0.0
    %4586 = vmatprep.subr.mxu0 0.0
    %4587 = vmatpush1.msra.mxu0 0.0
    %4588 = vmatprep.subr.mxu0 0.0
    %4589 = vmatpush1.msra.mxu0 0.0
    %4590 = vmatprep.subr.mxu0 0.0
    %4591 = vmatpush1.msra.mxu0 0.0
    %4592 = vmatprep.subr.mxu0 0.0
    %4593 = vmatpush1.msra.mxu0 0.0
    %4594 = vmatprep.subr.mxu0 0.0
    %4595 = vmatpush1.msra.mxu0 0.0
    %4596 = vmatprep.subr.mxu0 0.0
    %4597 = vmatpush1.msra.mxu0 0.0
    %4598 = vmatprep.subr.mxu0 0.0
    %4599 = vmatpush1.msra.mxu0 0.0
    %4600 = vmatprep.subr.mxu0 0.0
    %4601 = vmatpush1.msra.mxu0 0.0
    %4602 = vmatprep.subr.mxu0 0.0
    %4603 = vmatpush1.msra.mxu0 0.0
    %4604 = vmatprep.subr.mxu0 0.0
    %4605 = vmatpush1.msra.mxu0 0.0
    %4606 = vmatprep.subr.mxu0 0.0
    %4607 = vmatpush1.msra.mxu0 0.0
    %4608 = vmatprep.subr.mxu0 0.0
    %4609 = vmatpush1.msra.mxu0 0.0
    %4610 = vmatprep.subr.mxu0 0.0
    %4611 = vmatpush1.msra.mxu0 0.0
    %4612 = vmatprep.subr.mxu0 0.0
    %4613 = vmatpush1.msra.mxu0 0.0
    %4614 = vmatprep.subr.mxu0 0.0
    %4615 = vmatpush1.msra.mxu0 0.0
    %4616 = vmatprep.subr.mxu0 0.0
    %4617 = vmatpush1.msra.mxu0 0.0
    %4618 = vmatprep.subr.mxu0 0.0
    %4619 = vmatpush1.msra.mxu0 0.0
    %4620 = vmatprep.mubr.f32.mxu0 0.0
    %4621 = vmatmul.mubr.f32.gmra.mrb[0].mxu0 %v4551
    %v4622 = vpop.f32.mrb[0].mxu0
    %v4623 = vadd.f32 %v4549, %v4622
    %v4624 = vpop.f32.mrb[0].mxu0
    %4625 = vmatprep.mubr.f32.mxu0 0.0
    %4626 = vmatmul.mubr.f32.gmra.mrb[0].mxu0 %v4554
    %v4627 = vpop.f32.mrb[0].mxu0
    %v4628 = vadd.f32 %v4549, %v4627
    %v4629 = vpop.f32.mrb[0].mxu0
    %4630 = vdwg.mxu0
    %v4631 = vadd.f32 %v4623, %v4427
    %v4632 = vadd.f32 %v4628, %v4428
    %v4633 = vld [vmem:[%s3 + $0x14] sm:$0x1]
    %v4634 = vld [vmem:[%s3 + $0x15] sm:$0x1]
    %v4635 = vsel %vm173, %v4631, 0.0
    %4636 = vadd.xlane.f32.xlu0 %v4635
    %v4637 = vpop.xlane.xlu0 %4636
    %v4638 = vsel %vm173, %v4632, 0.0
    %4639 = vadd.xlane.f32.xlu0 %v4638
    %v4640 = vpop.xlane.xlu0 %4639
    %v4641 = vmul.f32 %v4637, %v180
    %v4642 = vmul.f32 %v4640, %v180
    %v4643 = vsub.f32 %v4631, %v4641
    %v4644 = vsub.f32 %v4632, %v4642
    %v4645 = vmul.f32 %v4643, %v4643
    %v4646 = vmul.f32 %v4644, %v4644
    %v4647 = vsel %vm173, %v4645, 0.0
    %4648 = vadd.xlane.f32.xlu0 %v4647
    %v4649 = vpop.xlane.xlu0 %4648
    %v4650 = vsel %vm173, %v4646, 0.0
    %4651 = vadd.xlane.f32.xlu0 %v4650
    %v4652 = vpop.xlane.xlu0 %4651
    %v4653 = vmul.f32 %v4649, %v180
    %v4654 = vmul.f32 %v4652, %v180
    %v4655 = vadd.f32 %v4653, 1e-12
    %v4656 = vadd.f32 %v4654, 1e-12
    %v4657 = vrsqrt.pop %v4655
    %v4658 = vrsqrt.pop %v4656
    %v4659 = vmul.f32 %v4643, %v4657
    %v4660 = vmul.f32 %v4644, %v4658
    %v4661 = vlaneseq
    %v4662 = vshrl.u32 %v4661, 7
    %v4663 = vsub.s32 0, %v4662
    %v4664 = vrot.slane %v4633, %v4663
    %v4665 = vmul.f32 %v4659, %v4664
    %v4666 = vmul.f32 %v4660, %v4664
    %v4667 = vlaneseq
    %v4668 = vshrl.u32 %v4667, 7
    %v4669 = vsub.s32 0, %v4668
    %v4670 = vrot.slane %v4634, %v4669
    %v4671 = vadd.f32 %v4665, %v4670
    %v4672 = vadd.f32 %v4666, %v4670
    %4673 = vst.msk [vmem:[#allocation5] sm:$0xff] %vm173, %v4671
    %4674 = vst.msk [vmem:[#allocation5 + $0x8] sm:$0xff] %vm173, %v4672
    %v4675 = vld [vmem:[#allocation5] ss:$8 sm:$0x3]
    %v4676 = vld [vmem:[#allocation2 + $0x258] sm:$0xff]
    %v4677 = vld [vmem:[#allocation2 + $0x260] sm:$0xff]
    %v4678 = vld [vmem:[#allocation2 + $0x268] sm:$0xff]
    %v4679 = vld [vmem:[#allocation2 + $0x270] sm:$0xff]
    %v4680 = vld [vmem:[%s3 + $0x16] sm:$0x1]
    %v4681 = vlaneseq
    %v4682 = vshrl.u32 %v4681, 7
    %v4683 = vsub.s32 0, %v4682
    %v4684 = vrot.slane %v4680, %v4683
    %v4686 = vsel %vm173, %v4675, 0
    %4688 = vmatprep.subr.mxu0 0.0
    %4689 = vmatpush1.msra.mxu0 %v4676
    %4690 = vmatprep.subr.mxu0 0.0
    %4691 = vmatpush1.msra.mxu0 %v4677
    %4692 = vmatprep.subr.mxu0 0.0
    %4693 = vmatpush1.msra.mxu0 %v4678
    %4694 = vmatprep.subr.mxu0 0.0
    %4695 = vmatpush1.msra.mxu0 %v4679
    %4696 = vmatprep.subr.mxu0 0.0
    %4697 = vmatpush1.msra.mxu0 0.0
    %4698 = vmatprep.subr.mxu0 0.0
    %4699 = vmatpush1.msra.mxu0 0.0
    %4700 = vmatprep.subr.mxu0 0.0
    %4701 = vmatpush1.msra.mxu0 0.0
    %4702 = vmatprep.subr.mxu0 0.0
    %4703 = vmatpush1.msra.mxu0 0.0
    %4704 = vmatprep.subr.mxu0 0.0
    %4705 = vmatpush1.msra.mxu0 0.0
    %4706 = vmatprep.subr.mxu0 0.0
    %4707 = vmatpush1.msra.mxu0 0.0
    %4708 = vmatprep.subr.mxu0 0.0
    %4709 = vmatpush1.msra.mxu0 0.0
    %4710 = vmatprep.subr.mxu0 0.0
    %4711 = vmatpush1.msra.mxu0 0.0
    %4712 = vmatprep.subr.mxu0 0.0
    %4713 = vmatpush1.msra.mxu0 0.0
    %4714 = vmatprep.subr.mxu0 0.0
    %4715 = vmatpush1.msra.mxu0 0.0
    %4716 = vmatprep.subr.mxu0 0.0
    %4717 = vmatpush1.msra.mxu0 0.0
    %4718 = vmatprep.subr.mxu0 0.0
    %4719 = vmatpush1.msra.mxu0 0.0
    %4720 = vmatprep.subr.mxu0 0.0
    %4721 = vmatpush1.msra.mxu0 0.0
    %4722 = vmatprep.subr.mxu0 0.0
    %4723 = vmatpush1.msra.mxu0 0.0
    %4724 = vmatprep.subr.mxu0 0.0
    %4725 = vmatpush1.msra.mxu0 0.0
    %4726 = vmatprep.subr.mxu0 0.0
    %4727 = vmatpush1.msra.mxu0 0.0
    %4728 = vmatprep.subr.mxu0 0.0
    %4729 = vmatpush1.msra.mxu0 0.0
    %4730 = vmatprep.subr.mxu0 0.0
    %4731 = vmatpush1.msra.mxu0 0.0
    %4732 = vmatprep.subr.mxu0 0.0
    %4733 = vmatpush1.msra.mxu0 0.0
    %4734 = vmatprep.subr.mxu0 0.0
    %4735 = vmatpush1.msra.mxu0 0.0
    %4736 = vmatprep.subr.mxu0 0.0
    %4737 = vmatpush1.msra.mxu0 0.0
    %4738 = vmatprep.subr.mxu0 0.0
    %4739 = vmatpush1.msra.mxu0 0.0
    %4740 = vmatprep.subr.mxu0 0.0
    %4741 = vmatpush1.msra.mxu0 0.0
    %4742 = vmatprep.subr.mxu0 0.0
    %4743 = vmatpush1.msra.mxu0 0.0
    %4744 = vmatprep.subr.mxu0 0.0
    %4745 = vmatpush1.msra.mxu0 0.0
    %4746 = vmatprep.subr.mxu0 0.0
    %4747 = vmatpush1.msra.mxu0 0.0
    %4748 = vmatprep.subr.mxu0 0.0
    %4749 = vmatpush1.msra.mxu0 0.0
    %4750 = vmatprep.subr.mxu0 0.0
    %4751 = vmatpush1.msra.mxu0 0.0
    %4752 = vmatprep.mubr.f32.mxu0 0.0
    %4753 = vmatmul.mubr.f32.gmra.mrb[0].mxu0 %v4686
    %v4754 = vpop.f32.mrb[0].mxu0
    %v4755 = vadd.f32 %v4684, %v4754
    %v4756 = vpop.f32.mrb[0].mxu0
    %4757 = vdwg.mxu0
    %v4758 = vtanh.pop %v4755
    %v4759 = vld [vmem:[%s3 + $0x17] sm:$0x1]
    %v4760 = vld [vmem:[%s3 + $0x18] sm:$0x1]
    %vm4761 = vcmask 254976
    %v4762 = vsel %vm4761, %v4758, 0.0
    %4763 = vadd.xlane.f32.xlu0 %v4762
    %v4764 = vpop.xlane.xlu0 %4763
    %v4765 = vmul.f32 %v4764, %v180
    %v4766 = vsub.f32 %v4758, %v4765
    %v4767 = vmul.f32 %v4766, %v4766
    %v4768 = vsel %vm4761, %v4767, 0.0
    %4769 = vadd.xlane.f32.xlu0 %v4768
    %v4770 = vpop.xlane.xlu0 %4769
    %v4771 = vmul.f32 %v4770, %v180
    %v4772 = vadd.f32 %v4771, 1e-05
    %v4773 = vrsqrt.pop %v4772
    %v4774 = vmul.f32 %v4766, %v4773
    %v4775 = vlaneseq
    %v4776 = vshrl.u32 %v4775, 7
    %v4777 = vsub.s32 0, %v4776
    %v4778 = vrot.slane %v4759, %v4777
    %v4779 = vmul.f32 %v4774, %v4778
    %v4780 = vlaneseq
    %v4781 = vshrl.u32 %v4780, 7
    %v4782 = vsub.s32 0, %v4781
    %v4783 = vrot.slane %v4760, %v4782
    %v4784 = vadd.f32 %v4779, %v4783
    %4785 = vst.msk [vmem:[#allocation6] sm:$0x3] %vm4761, %v4784
    %v4786 = vld [vmem:[#allocation2 + $0x278] sm:$0xff]
    %v4787 = vld [vmem:[#allocation2 + $0x280] sm:$0xff]
    %v4788 = vld [vmem:[#allocation2 + $0x288] sm:$0xff]
    %v4789 = vld [vmem:[#allocation2 + $0x290] sm:$0xff]
    %v4790 = vld [vmem:[%s3 + $0x19] sm:$0x1]
    %v4791 = vlaneseq
    %v4792 = vshrl.u32 %v4791, 7
    %v4793 = vsub.s32 0, %v4792
    %v4794 = vrot.slane %v4790, %v4793
    %v4796 = vsel %vm173, %v4784, 0
    %4798 = vmatprep.subr.mxu0 0.0
    %4799 = vmatpush1.msra.mxu0 %v4786
    %4800 = vmatprep.subr.mxu0 0.0
    %4801 = vmatpush1.msra.mxu0 %v4787
    %4802 = vmatprep.subr.mxu0 0.0
    %4803 = vmatpush1.msra.mxu0 %v4788
    %4804 = vmatprep.subr.mxu0 0.0
    %4805 = vmatpush1.msra.mxu0 %v4789
    %4806 = vmatprep.subr.mxu0 0.0
    %4807 = vmatpush1.msra.mxu0 0.0
    %4808 = vmatprep.subr.mxu0 0.0
    %4809 = vmatpush1.msra.mxu0 0.0
    %4810 = vmatprep.subr.mxu0 0.0
    %4811 = vmatpush1.msra.mxu0 0.0
    %4812 = vmatprep.subr.mxu0 0.0
    %4813 = vmatpush1.msra.mxu0 0.0
    %4814 = vmatprep.subr.mxu0 0.0
    %4815 = vmatpush1.msra.mxu0 0.0
    %4816 = vmatprep.subr.mxu0 0.0
    %4817 = vmatpush1.msra.mxu0 0.0
    %4818 = vmatprep.subr.mxu0 0.0
    %4819 = vmatpush1.msra.mxu0 0.0
    %4820 = vmatprep.subr.mxu0 0.0
    %4821 = vmatpush1.msra.mxu0 0.0
    %4822 = vmatprep.subr.mxu0 0.0
    %4823 = vmatpush1.msra.mxu0 0.0
    %4824 = vmatprep.subr.mxu0 0.0
    %4825 = vmatpush1.msra.mxu0 0.0
    %4826 = vmatprep.subr.mxu0 0.0
    %4827 = vmatpush1.msra.mxu0 0.0
    %4828 = vmatprep.subr.mxu0 0.0
    %4829 = vmatpush1.msra.mxu0 0.0
    %4830 = vmatprep.subr.mxu0 0.0
    %4831 = vmatpush1.msra.mxu0 0.0
    %4832 = vmatprep.subr.mxu0 0.0
    %4833 = vmatpush1.msra.mxu0 0.0
    %4834 = vmatprep.subr.mxu0 0.0
    %4835 = vmatpush1.msra.mxu0 0.0
    %4836 = vmatprep.subr.mxu0 0.0
    %4837 = vmatpush1.msra.mxu0 0.0
    %4838 = vmatprep.subr.mxu0 0.0
    %4839 = vmatpush1.msra.mxu0 0.0
    %4840 = vmatprep.subr.mxu0 0.0
    %4841 = vmatpush1.msra.mxu0 0.0
    %4842 = vmatprep.subr.mxu0 0.0
    %4843 = vmatpush1.msra.mxu0 0.0
    %4844 = vmatprep.subr.mxu0 0.0
    %4845 = vmatpush1.msra.mxu0 0.0
    %4846 = vmatprep.subr.mxu0 0.0
    %4847 = vmatpush1.msra.mxu0 0.0
    %4848 = vmatprep.subr.mxu0 0.0
    %4849 = vmatpush1.msra.mxu0 0.0
    %4850 = vmatprep.subr.mxu0 0.0
    %4851 = vmatpush1.msra.mxu0 0.0
    %4852 = vmatprep.subr.mxu0 0.0
    %4853 = vmatpush1.msra.mxu0 0.0
    %4854 = vmatprep.subr.mxu0 0.0
    %4855 = vmatpush1.msra.mxu0 0.0
    %4856 = vmatprep.subr.mxu0 0.0
    %4857 = vmatpush1.msra.mxu0 0.0
    %4858 = vmatprep.subr.mxu0 0.0
    %4859 = vmatpush1.msra.mxu0 0.0
    %4860 = vmatprep.subr.mxu0 0.0
    %4861 = vmatpush1.msra.mxu0 0.0
    %4862 = vmatprep.mubr.f32.mxu0 0.0
    %4863 = vmatmul.mubr.f32.gmra.mrb[0].mxu0 %v4796
    %v4864 = vpop.f32.mrb[0].mxu0
    %v4865 = vadd.f32 %v4794, %v4864
    %v4866 = vpop.f32.mrb[0].mxu0
    %4867 = vdwg.mxu0
    %v4868 = vmax.f32 %v4865, 0.0
    %v4869 = vld [vmem:[#allocation2 + $0x298] sm:$0xff]
    %v4870 = vld [vmem:[#allocation2 + $0x2a0] sm:$0xff]
    %v4871 = vld [vmem:[%s3 + $0x1a] sm:$0x1]
    %v4872 = vlaneseq
    %v4873 = vshrl.u32 %v4872, 7
    %v4874 = vsub.s32 0, %v4873
    %v4875 = vrot.slane %v4871, %v4874
    %vm4876 = vcmask 130048
    %v4878 = vsel %vm4876, %v4868, 0
    %4880 = vmatprep.subr.mxu0 0.0
    %4881 = vmatpush1.msra.mxu0 %v4869
    %4882 = vmatprep.subr.mxu0 0.0
    %4883 = vmatpush1.msra.mxu0 %v4870
    %4884 = vmatprep.subr.mxu0 0.0
    %4885 = vmatpush1.msra.mxu0 0.0
    %4886 = vmatprep.subr.mxu0 0.0
    %4887 = vmatpush1.msra.mxu0 0.0
    %4888 = vmatprep.subr.mxu0 0.0
    %4889 = vmatpush1.msra.mxu0 0.0
    %4890 = vmatprep.subr.mxu0 0.0
    %4891 = vmatpush1.msra.mxu0 0.0
    %4892 = vmatprep.subr.mxu0 0.0
    %4893 = vmatpush1.msra.mxu0 0.0
    %4894 = vmatprep.subr.mxu0 0.0
    %4895 = vmatpush1.msra.mxu0 0.0
    %4896 = vmatprep.subr.mxu0 0.0
    %4897 = vmatpush1.msra.mxu0 0.0
    %4898 = vmatprep.subr.mxu0 0.0
    %4899 = vmatpush1.msra.mxu0 0.0
    %4900 = vmatprep.subr.mxu0 0.0
    %4901 = vmatpush1.msra.mxu0 0.0
    %4902 = vmatprep.subr.mxu0 0.0
    %4903 = vmatpush1.msra.mxu0 0.0
    %4904 = vmatprep.subr.mxu0 0.0
    %4905 = vmatpush1.msra.mxu0 0.0
    %4906 = vmatprep.subr.mxu0 0.0
    %4907 = vmatpush1.msra.mxu0 0.0
    %4908 = vmatprep.subr.mxu0 0.0
    %4909 = vmatpush1.msra.mxu0 0.0
    %4910 = vmatprep.subr.mxu0 0.0
    %4911 = vmatpush1.msra.mxu0 0.0
    %4912 = vmatprep.subr.mxu0 0.0
    %4913 = vmatpush1.msra.mxu0 0.0
    %4914 = vmatprep.subr.mxu0 0.0
    %4915 = vmatpush1.msra.mxu0 0.0
    %4916 = vmatprep.subr.mxu0 0.0
    %4917 = vmatpush1.msra.mxu0 0.0
    %4918 = vmatprep.subr.mxu0 0.0
    %4919 = vmatpush1.msra.mxu0 0.0
    %4920 = vmatprep.subr.mxu0 0.0
    %4921 = vmatpush1.msra.mxu0 0.0
    %4922 = vmatprep.subr.mxu0 0.0
    %4923 = vmatpush1.msra.mxu0 0.0
    %4924 = vmatprep.subr.mxu0 0.0
    %4925 = vmatpush1.msra.mxu0 0.0
    %4926 = vmatprep.subr.mxu0 0.0
    %4927 = vmatpush1.msra.mxu0 0.0
    %4928 = vmatprep.subr.mxu0 0.0
    %4929 = vmatpush1.msra.mxu0 0.0
    %4930 = vmatprep.subr.mxu0 0.0
    %4931 = vmatpush1.msra.mxu0 0.0
    %4932 = vmatprep.subr.mxu0 0.0
    %4933 = vmatpush1.msra.mxu0 0.0
    %4934 = vmatprep.subr.mxu0 0.0
    %4935 = vmatpush1.msra.mxu0 0.0
    %4936 = vmatprep.subr.mxu0 0.0
    %4937 = vmatpush1.msra.mxu0 0.0
    %4938 = vmatprep.subr.mxu0 0.0
    %4939 = vmatpush1.msra.mxu0 0.0
    %4940 = vmatprep.subr.mxu0 0.0
    %4941 = vmatpush1.msra.mxu0 0.0
    %4942 = vmatprep.subr.mxu0 0.0
    %4943 = vmatpush1.msra.mxu0 0.0
    %4944 = vmatprep.mubr.f32.mxu0 0.0
    %4945 = vmatmul.mubr.f32.gmra.mrb[0].mxu0 %v4878
    %v4946 = vpop.f32.mrb[0].mxu0
    %v4947 = vadd.f32 %v4875, %v4946
    %v4948 = vpop.f32.mrb[0].mxu0
    %4949 = vdwg.mxu0
    %vm4950 = vcmask 9216
    %4951 = vst.msk [vmem:[#allocation8] sm:$0x3] %vm4950, %v4947
    // Predicated region
    $region22: #{model_forward.1} parent=1 // pred_check
      _
    $region23: #{model_forward.1} parent=1 // pred_check_branch
      %4953 = sbr.rel (0) target = $region25
    $region24: #{model_forward.1} parent=1 // pred_region
      %s4955 = ssub.s32 256, 256
      %4956 = vsyncadd [#allocation4], %s4955
      %s4957 = sshll.u32 [#allocation5], 4
      %s4958 = int_to_ptr.vmem [resolvable:$true] %s4957
      %4963 = dma.vmem_to_hbm [thread:$0]  %s4958, 256, %s4, [#allocation4], 128, 128, 8
    $region25: #{model_forward.1} parent=1 // pred_fallthru
      _
    // Predicated region
    $region26: #{model_forward.1} parent=1 // pred_check
      _
    $region27: #{model_forward.1} parent=1 // pred_check_branch
      %4965 = sbr.rel (0) target = $region29
    $region28: #{model_forward.1} parent=1 // pred_region
      %s4967 = ssub.s32 32, 32
      %4968 = vsyncadd [#allocation7], %s4967
      %s4970 = sshll.u32 [#allocation6], 4
      %s4971 = int_to_ptr.vmem [resolvable:$true] %s4970
      %4973 = dma.vmem_to_hbm [thread:$0]  %s4971, 32, %s5, [#allocation7]
    $region29: #{model_forward.1} parent=1 // pred_fallthru
      _
    // Predicated region
    $region30: #{model_forward.1} parent=1 // pred_check
      _
    $region31: #{model_forward.1} parent=1 // pred_check_branch
      %4975 = sbr.rel (0) target = $region33
    $region32: #{model_forward.1} parent=1 // pred_region
      %s4977 = ssub.s32 32, 32
      %4978 = vsyncadd [#allocation7], %s4977
      %s4980 = sshll.u32 [#allocation8], 4
      %s4981 = int_to_ptr.vmem [resolvable:$true] %s4980
      %4983 = dma.vmem_to_hbm [thread:$0]  %s4981, 32, %s6, [#allocation7]
    $region33: #{model_forward.1} parent=1 // pred_fallthru
      _
    // Predicated region
    $region34: #{model_forward.1} parent=1 // pred_check
      _
    $region35: #{model_forward.1} parent=1 // pred_check_branch
      %4985 = sbr.rel (0) target = $region37
    $region36: #{model_forward.1} parent=1 // pred_region
      %4986 = dma.done [#allocation4], 256
    $region37: #{model_forward.1} parent=1 // pred_fallthru
      _
    // Predicated region
    $region38: #{model_forward.1} parent=1 // pred_check
      _
    $region39: #{model_forward.1} parent=1 // pred_check_branch
      %4988 = sbr.rel (0) target = $region41
    $region40: #{model_forward.1} parent=1 // pred_region
      %4989 = dma.done [#allocation7], 32
    $region41: #{model_forward.1} parent=1 // pred_fallthru
      _
    // Predicated region
    $region42: #{model_forward.1} parent=1 // pred_check
      _
    $region43: #{model_forward.1} parent=1 // pred_check_branch
      %4991 = sbr.rel (0) target = $region45
    $region44: #{model_forward.1} parent=1 // pred_region
      %4992 = dma.done [#allocation7], 32
    $region45: #{model_forward.1} parent=1 // pred_fallthru
      _
    %4993 = vsyncpa [#allocation3], 1
    %4994 = vsyncpa [#allocation4], 1
    %4995 = vsyncpa [#allocation7], 1

</llo_original>
